<compile_context>
chip_gen: v6e
topology: v6e:2x2x1
jax: 0.10.0
libtpu: 0.0.40
codegen_flags: <defaults>
</compile_context>

<pallas_src>
import functools
import math

import jax
import jax.numpy as jnp
from jax.experimental import pallas as pl
from jax.experimental.pallas import tpu as pltpu

# f32 keeps exact torch-reference semantics; flip to jnp.bfloat16 on v6e/v7x
# for ~2x MXU throughput (accumulation stays f32 either way).
_MM_DTYPE = jnp.float32
_LN_EPS = 1e-6                 # nn.LayerNorm(hidden, eps=1e-06)
_MASK_NEG = -1000000000.0      # simple_sdpa masked_fill value


# ----------------------------------------------------------------------------
# In-kernel helpers
# ----------------------------------------------------------------------------

def _mm(a, b):
    return jnp.dot(a.astype(_MM_DTYPE), b.astype(_MM_DTYPE),
                   preferred_element_type=jnp.float32)


def _ln(x, g, b):
    mean = jnp.mean(x, axis=-1, keepdims=True)
    xc = x - mean
    var = jnp.mean(xc * xc, axis=-1, keepdims=True)
    return xc * jax.lax.rsqrt(var + _LN_EPS) * g + b


def _mha_heads(q2, k2, v2, mask_add, head_size):
    """Multi-head attention for one batch element.

    q2: (Sq, H), k2/v2: (Sk, H), mask_add: (Sq, Sk) additive (0 / -1e9).
    Heads are handled as an unrolled loop of small 2-D matmuls over static
    lane slices; the merged context comes back packed on the lane axis, so the
    output projection is a single dense (Sq, H) @ (H, H) matmul.
    The 1/sqrt(d) scale is already folded into Wq (so into q2).
    """
    H = q2.shape[-1]
    d = H // head_size
    ctx_parts = []
    for h in range(head_size):
        lo, hi = h * d, (h + 1) * d
        qh = q2[:, lo:hi]
        kh = k2[:, lo:hi]
        vh = v2[:, lo:hi]
        s = jnp.einsum('qd,kd->qk', qh.astype(_MM_DTYPE), kh.astype(_MM_DTYPE),
                       preferred_element_type=jnp.float32)
        s = s + mask_add                                   # additive mask
        s = s - jnp.max(s, axis=-1, keepdims=True)
        p = jnp.exp(s)
        p = p * pl.reciprocal(jnp.sum(p, axis=-1, keepdims=True), approx=True)
        ctx_parts.append(_mm(p, vh))                       # (Sq, d)
    return jnp.concatenate(ctx_parts, axis=-1)             # (Sq, H)


# ----------------------------------------------------------------------------
# Fused decoder-layer kernel (one grid step == one batch element)
# ----------------------------------------------------------------------------

def _decoder_layer_kernel(
        x_ref, enc_ref, self_mask_ref, i_mask_ref,
        ln1_g_ref, ln1_b_ref, wqkv_s_ref, wo_s_ref,
        ln2_g_ref, ln2_b_ref, wq_e_ref, wkv_e_ref, wo_e_ref,
        ln3_g_ref, ln3_b_ref, w1_ref, b1_ref, w2_ref, b2_ref,
        o_ref, *, head_size):
    x = x_ref[0].astype(jnp.float32)          # (S, H)
    enc = enc_ref[0].astype(jnp.float32)      # (S_enc, H)
    H = x.shape[-1]

    # ---- self-attention block ----
    y = _ln(x, ln1_g_ref[...], ln1_b_ref[...])
    qkv = _mm(y, wqkv_s_ref[...])                                  # (S, 3H)
    ctx = _mha_heads(qkv[:, :H], qkv[:, H:2 * H], qkv[:, 2 * H:],
                     self_mask_ref[0], head_size)
    x = x + _mm(ctx, wo_s_ref[...])

    # ---- encoder-decoder attention block ----
    y = _ln(x, ln2_g_ref[...], ln2_b_ref[...])
    qe = _mm(y, wq_e_ref[...])                                     # (S, H)
    kve = _mm(enc, wkv_e_ref[...])                                 # (S_enc, 2H)
    ctx = _mha_heads(qe, kve[:, :H], kve[:, H:], i_mask_ref[0], head_size)
    x = x + _mm(ctx, wo_e_ref[...])

    # ---- feed-forward block ----
    y = _ln(x, ln3_g_ref[...], ln3_b_ref[...])
    h1 = jnp.maximum(_mm(y, w1_ref[...]) + b1_ref[...], 0.0)
    x = x + _mm(h1, w2_ref[...]) + b2_ref[...]

    o_ref[0] = x.astype(o_ref.dtype)


def _layernorm_kernel(x_ref, g_ref, b_ref, o_ref):
    o_ref[0] = _ln(x_ref[0].astype(jnp.float32),
                   g_ref[...], b_ref[...]).astype(o_ref.dtype)


# ----------------------------------------------------------------------------
# pallas_call wrappers
# ----------------------------------------------------------------------------

def _batch_spec(shape):
    nrest = len(shape) - 1
    return pl.BlockSpec((1,) + tuple(shape[1:]),
                        lambda b, _n=nrest: (b,) + (0,) * _n)


def _full_spec(shape):
    n = len(shape)
    return pl.BlockSpec(tuple(shape), lambda b, _n=n: (0,) * _n)


def decoder_layer(x, enc_output, self_mask_add, i_mask_add, lp, head_size):
    """One fused DecoderLayer forward (inference)."""
    B = x.shape[0]
    args = (x, enc_output, self_mask_add, i_mask_add,
            lp['ln1_g'], lp['ln1_b'], lp['self_wqkv'], lp['self_wo'],
            lp['ln2_g'], lp['ln2_b'], lp['encdec_wq'], lp['encdec_wkv'],
            lp['encdec_wo'],
            lp['ln3_g'], lp['ln3_b'], lp['ffn_w1'], lp['ffn_b1'],
            lp['ffn_w2'], lp['ffn_b2'])

    in_specs = [_batch_spec(x.shape), _batch_spec(enc_output.shape),
                _batch_spec(self_mask_add.shape), _batch_spec(i_mask_add.shape)]
    in_specs += [_full_spec(a.shape) for a in args[4:]]

    kernel = functools.partial(_decoder_layer_kernel, head_size=head_size)
    return pl.pallas_call(
        kernel,
        grid=(B,),
        in_specs=in_specs,
        out_specs=_batch_spec(x.shape),
        out_shape=jax.ShapeDtypeStruct(x.shape, jnp.float32),
        compiler_params=pltpu.CompilerParams(
            dimension_semantics=("parallel",)),
    )(*args)


def layer_norm(x, gamma, beta):
    B = x.shape[0]
    return pl.pallas_call(
        _layernorm_kernel,
        grid=(B,),
        in_specs=[_batch_spec(x.shape), _full_spec(gamma.shape),
                  _full_spec(beta.shape)],
        out_specs=_batch_spec(x.shape),
        out_shape=jax.ShapeDtypeStruct(x.shape, jnp.float32),
        compiler_params=pltpu.CompilerParams(
            dimension_semantics=("parallel",)),
    )(x, gamma, beta)


def decoder(x, enc_output, i_mask_add, self_mask_add,
            layer_params, last_g, last_b, head_size):
    """Decoder.forward: stack of fused DecoderLayers + final LayerNorm."""
    for lp in layer_params:
        x = decoder_layer(x, enc_output, self_mask_add, i_mask_add, lp,
                          head_size)
    return layer_norm(x, last_g, last_b)


# ----------------------------------------------------------------------------
# Deterministic parameter construction (kernel-ready: QKV fused, scale folded)
# ----------------------------------------------------------------------------

def _xavier(key, shape):
    fan_in, fan_out = shape
    lim = math.sqrt(6.0 / (fan_in + fan_out))
    return jax.random.uniform(key, shape, jnp.float32, -lim, lim)


def make_layer_params(key, hidden, filt, head_size):
    ks = jax.random.split(key, 10)
    d = hidden // head_size
    scale = d ** (-0.5)
    # raw (in, out) weights matching the torch nn.Linear layers (bias=False)
    wq_s, wk_s, wv_s, wo_s = (_xavier(ks[i], (hidden, hidden)) for i in range(4))
    wq_e, wk_e, wv_e, wo_e = (_xavier(ks[i], (hidden, hidden)) for i in range(4, 8))
    return {
        'ln1_g': jnp.ones((1, hidden), jnp.float32),
        'ln1_b': jnp.zeros((1, hidden), jnp.float32),
        'ln2_g': jnp.ones((1, hidden), jnp.float32),
        'ln2_b': jnp.zeros((1, hidden), jnp.float32),
        'ln3_g': jnp.ones((1, hidden), jnp.float32),
        'ln3_b': jnp.zeros((1, hidden), jnp.float32),
        # 1/sqrt(d) folded into Wq; Q/K/V fused into one (H, 3H) weight.
        'self_wqkv': jnp.concatenate([wq_s * scale, wk_s, wv_s], axis=1),
        'self_wo': wo_s,
        'encdec_wq': wq_e * scale,
        'encdec_wkv': jnp.concatenate([wk_e, wv_e], axis=1),
        'encdec_wo': wo_e,
        'ffn_w1': _xavier(ks[8], (hidden, filt)),
        'ffn_b1': jnp.zeros((1, filt), jnp.float32),
        'ffn_w2': _xavier(ks[9], (filt, hidden)),
        'ffn_b2': jnp.zeros((1, hidden), jnp.float32),
    }


# ----------------------------------------------------------------------------
# Main
# ----------------------------------------------------------------------------

if __name__ == "__main__":
    B, S_DEC, S_ENC = 2, 8, 8
    HIDDEN, FILTER, HEADS, N_LAYERS = 32, 64, 8, 2

    key = jax.random.PRNGKey(0)
    k_x, k_enc, k_p = jax.random.split(key, 3)

    x = jax.random.normal(k_x, (B, S_DEC, HIDDEN), jnp.float32)
    enc_output = jax.random.normal(k_enc, (B, S_ENC, HIDDEN), jnp.float32)

    # Additive masks: 0.0 = visible, -1e9 = masked (matches masked_fill(-1e9)).
    causal = (jnp.arange(S_DEC)[None, :] > jnp.arange(S_DEC)[:, None]
              ).astype(jnp.float32)
    self_mask_add = jnp.broadcast_to(causal * _MASK_NEG, (B, S_DEC, S_DEC))

    i_mask_bool = jnp.zeros((B, S_DEC, S_ENC), jnp.float32)
    i_mask_bool = i_mask_bool.at[1, :, S_ENC - 1].set(1.0)   # pad last enc pos of batch 1
    i_mask_add = i_mask_bool * _MASK_NEG

    layer_keys = jax.random.split(k_p, N_LAYERS)
    layer_params = [make_layer_params(k, HIDDEN, FILTER, HEADS)
                    for k in layer_keys]
    last_g = jnp.ones((1, HIDDEN), jnp.float32)
    last_b = jnp.zeros((1, HIDDEN), jnp.float32)

    # TODO(synk): Transformer.encode/decode glue (embedding lookup, sinusoidal
    # position encoding, target shift/pad, final vocab-projection matmul) is
    # left to standard XLA ops; the Pallas kernels cover the Decoder stack.
    out = decoder(x, enc_output, i_mask_add, self_mask_add,
                  layer_params, last_g, last_b, HEADS)
    jax.block_until_ready(out)

    assert out.shape == (B, S_DEC, HIDDEN)
    assert bool(jnp.all(jnp.isfinite(out)))
    print("KERNEL_OK")
</pallas_src>

<mosaic_0001>
module attributes {stable_mosaic.version = 11 : i64} {
  func.func @_decoder_layer_kernel(%arg0: i32, %arg1: memref<1x8x32xf32, #tpu.memory_space<vmem>>, %arg2: memref<1x8x32xf32, #tpu.memory_space<vmem>>, %arg3: memref<1x8x8xf32, #tpu.memory_space<vmem>>, %arg4: memref<1x8x8xf32, #tpu.memory_space<vmem>>, %arg5: memref<1x32xf32, #tpu.memory_space<vmem>>, %arg6: memref<1x32xf32, #tpu.memory_space<vmem>>, %arg7: memref<32x96xf32, #tpu.memory_space<vmem>>, %arg8: memref<32x32xf32, #tpu.memory_space<vmem>>, %arg9: memref<1x32xf32, #tpu.memory_space<vmem>>, %arg10: memref<1x32xf32, #tpu.memory_space<vmem>>, %arg11: memref<32x32xf32, #tpu.memory_space<vmem>>, %arg12: memref<32x64xf32, #tpu.memory_space<vmem>>, %arg13: memref<32x32xf32, #tpu.memory_space<vmem>>, %arg14: memref<1x32xf32, #tpu.memory_space<vmem>>, %arg15: memref<1x32xf32, #tpu.memory_space<vmem>>, %arg16: memref<32x64xf32, #tpu.memory_space<vmem>>, %arg17: memref<1x64xf32, #tpu.memory_space<vmem>>, %arg18: memref<64x32xf32, #tpu.memory_space<vmem>>, %arg19: memref<1x32xf32, #tpu.memory_space<vmem>>, %arg20: memref<1x8x32xf32, #tpu.memory_space<vmem>>) attributes {dimension_semantics = [#tpu.dimension_semantics<parallel>], iteration_bounds = array<i64: 2>, scalar_prefetch = 0 : i64, scratch_operands = 0 : i64, tpu.core_type = #tpu.core_type<tc>, window_params = [{transform_indices = @transform_0, window_bounds = array<i64: 1, 8, 32>}, {transform_indices = @transform_1, window_bounds = array<i64: 1, 8, 32>}, {transform_indices = @transform_2, window_bounds = array<i64: 1, 8, 8>}, {transform_indices = @transform_3, window_bounds = array<i64: 1, 8, 8>}, {pipeline_mode = #tpu.pipeline_mode<synchronous>, transform_indices = @transform_4, window_bounds = array<i64: 1, 32>}, {pipeline_mode = #tpu.pipeline_mode<synchronous>, transform_indices = @transform_5, window_bounds = array<i64: 1, 32>}, {pipeline_mode = #tpu.pipeline_mode<synchronous>, transform_indices = @transform_6, window_bounds = array<i64: 32, 96>}, {pipeline_mode = #tpu.pipeline_mode<synchronous>, transform_indices = @transform_7, window_bounds = array<i64: 32, 32>}, {pipeline_mode = #tpu.pipeline_mode<synchronous>, transform_indices = @transform_8, window_bounds = array<i64: 1, 32>}, {pipeline_mode = #tpu.pipeline_mode<synchronous>, transform_indices = @transform_9, window_bounds = array<i64: 1, 32>}, {pipeline_mode = #tpu.pipeline_mode<synchronous>, transform_indices = @transform_10, window_bounds = array<i64: 32, 32>}, {pipeline_mode = #tpu.pipeline_mode<synchronous>, transform_indices = @transform_11, window_bounds = array<i64: 32, 64>}, {pipeline_mode = #tpu.pipeline_mode<synchronous>, transform_indices = @transform_12, window_bounds = array<i64: 32, 32>}, {pipeline_mode = #tpu.pipeline_mode<synchronous>, transform_indices = @transform_13, window_bounds = array<i64: 1, 32>}, {pipeline_mode = #tpu.pipeline_mode<synchronous>, transform_indices = @transform_14, window_bounds = array<i64: 1, 32>}, {pipeline_mode = #tpu.pipeline_mode<synchronous>, transform_indices = @transform_15, window_bounds = array<i64: 32, 64>}, {pipeline_mode = #tpu.pipeline_mode<synchronous>, transform_indices = @transform_16, window_bounds = array<i64: 1, 64>}, {pipeline_mode = #tpu.pipeline_mode<synchronous>, transform_indices = @transform_17, window_bounds = array<i64: 64, 32>}, {pipeline_mode = #tpu.pipeline_mode<synchronous>, transform_indices = @transform_18, window_bounds = array<i64: 1, 32>}, {transform_indices = @transform_19, window_bounds = array<i64: 1, 8, 32>}]} {
    %c0 = arith.constant 0 : index
    %c0_0 = arith.constant 0 : index
    %c0_1 = arith.constant 0 : index
    %0 = vector.load %arg1[%c0, %c0_0, %c0_1] : memref<1x8x32xf32, #tpu.memory_space<vmem>>, vector<1x8x32xf32>
    %1 = vector.shape_cast %0 : vector<1x8x32xf32> to vector<8x32xf32>
    %c0_2 = arith.constant 0 : index
    %c0_3 = arith.constant 0 : index
    %c0_4 = arith.constant 0 : index
    %2 = vector.load %arg2[%c0_2, %c0_3, %c0_4] : memref<1x8x32xf32, #tpu.memory_space<vmem>>, vector<1x8x32xf32>
    %3 = vector.shape_cast %2 : vector<1x8x32xf32> to vector<8x32xf32>
    %c0_5 = arith.constant 0 : index
    %c0_6 = arith.constant 0 : index
    %4 = vector.load %arg5[%c0_5, %c0_6] : memref<1x32xf32, #tpu.memory_space<vmem>>, vector<1x32xf32>
    %c0_7 = arith.constant 0 : index
    %c0_8 = arith.constant 0 : index
    %5 = vector.load %arg6[%c0_7, %c0_8] : memref<1x32xf32, #tpu.memory_space<vmem>>, vector<1x32xf32>
    %cst = arith.constant dense<0.000000e+00> : vector<8xf32>
    %6 = vector.multi_reduction <add>, %1, %cst [1] : vector<8x32xf32> to vector<8xf32>
    %7 = vector.shape_cast %6 : vector<8xf32> to vector<8x1xf32>
    %cst_9 = arith.constant 3.200000e+01 : f32
    %8 = vector.broadcast %cst_9 : f32 to vector<8x1xf32>
    %9 = arith.divf %7, %8 : vector<8x1xf32>
    %10 = vector.broadcast %9 : vector<8x1xf32> to vector<8x32xf32>
    %11 = arith.subf %1, %10 : vector<8x32xf32>
    %12 = arith.mulf %11, %11 : vector<8x32xf32>
    %cst_10 = arith.constant dense<0.000000e+00> : vector<8xf32>
    %13 = vector.multi_reduction <add>, %12, %cst_10 [1] : vector<8x32xf32> to vector<8xf32>
    %14 = vector.shape_cast %13 : vector<8xf32> to vector<8x1xf32>
    %cst_11 = arith.constant 3.200000e+01 : f32
    %15 = vector.broadcast %cst_11 : f32 to vector<8x1xf32>
    %16 = arith.divf %14, %15 : vector<8x1xf32>
    %cst_12 = arith.constant 9.99999997E-7 : f32
    %17 = vector.broadcast %cst_12 : f32 to vector<8x1xf32>
    %18 = arith.addf %16, %17 : vector<8x1xf32>
    %19 = math.rsqrt %18 : vector<8x1xf32>
    %20 = vector.broadcast %19 : vector<8x1xf32> to vector<8x32xf32>
    %21 = arith.mulf %11, %20 : vector<8x32xf32>
    %22 = vector.broadcast %4 : vector<1x32xf32> to vector<8x32xf32>
    %23 = arith.mulf %21, %22 : vector<8x32xf32>
    %24 = vector.broadcast %5 : vector<1x32xf32> to vector<8x32xf32>
    %25 = arith.addf %23, %24 : vector<8x32xf32>
    %c0_13 = arith.constant 0 : index
    %c0_14 = arith.constant 0 : index
    %26 = vector.load %arg7[%c0_13, %c0_14] : memref<32x96xf32, #tpu.memory_space<vmem>>, vector<32x96xf32>
    %cst_15 = arith.constant dense<0.000000e+00> : vector<8x96xf32>
    %27 = tpu.matmul %25, %26, %cst_15 {dimension_numbers = #tpu.dot_dimension_numbers<[1], [0], [0], [1], [0, 0, 1, 1], [], []>} : vector<8x32xf32>, vector<32x96xf32>, vector<8x96xf32> -> vector<8x96xf32>
    %28 = vector.extract_strided_slice %27 {offsets = [0, 0], sizes = [8, 32], strides = [1, 1]} : vector<8x96xf32> to vector<8x32xf32>
    %29 = vector.extract_strided_slice %27 {offsets = [0, 32], sizes = [8, 32], strides = [1, 1]} : vector<8x96xf32> to vector<8x32xf32>
    %30 = vector.extract_strided_slice %27 {offsets = [0, 64], sizes = [8, 32], strides = [1, 1]} : vector<8x96xf32> to vector<8x32xf32>
    %c0_16 = arith.constant 0 : index
    %c0_17 = arith.constant 0 : index
    %c0_18 = arith.constant 0 : index
    %31 = vector.load %arg3[%c0_16, %c0_17, %c0_18] : memref<1x8x8xf32, #tpu.memory_space<vmem>>, vector<1x8x8xf32>
    %32 = vector.shape_cast %31 : vector<1x8x8xf32> to vector<8x8xf32>
    %33 = vector.extract_strided_slice %28 {offsets = [0, 0], sizes = [8, 4], strides = [1, 1]} : vector<8x32xf32> to vector<8x4xf32>
    %34 = vector.extract_strided_slice %29 {offsets = [0, 0], sizes = [8, 4], strides = [1, 1]} : vector<8x32xf32> to vector<8x4xf32>
    %35 = vector.extract_strided_slice %30 {offsets = [0, 0], sizes = [8, 4], strides = [1, 1]} : vector<8x32xf32> to vector<8x4xf32>
    "tpu.trace_start"() <{level = 10 : i32, message = "qd,kd->qk"}> : () -> ()
    %cst_19 = arith.constant dense<0.000000e+00> : vector<8x8xf32>
    %36 = tpu.matmul %33, %34, %cst_19 {dimension_numbers = #tpu.dot_dimension_numbers<[1], [1], [0], [0], [0, 0, 1, 0], [], []>} : vector<8x4xf32>, vector<8x4xf32>, vector<8x8xf32> -> vector<8x8xf32>
    "tpu.trace_stop"() : () -> ()
    %37 = arith.addf %36, %32 : vector<8x8xf32>
    %cst_20 = arith.constant dense<0xFF800000> : vector<8xf32>
    %38 = vector.multi_reduction <maximumf>, %37, %cst_20 [1] : vector<8x8xf32> to vector<8xf32>
    %39 = vector.shape_cast %38 : vector<8xf32> to vector<8x1xf32>
    %40 = vector.broadcast %39 : vector<8x1xf32> to vector<8x8xf32>
    %41 = arith.subf %37, %40 : vector<8x8xf32>
    %42 = math.exp %41 : vector<8x8xf32>
    %cst_21 = arith.constant dense<0.000000e+00> : vector<8xf32>
    %43 = vector.multi_reduction <add>, %42, %cst_21 [1] : vector<8x8xf32> to vector<8xf32>
    %44 = vector.shape_cast %43 : vector<8xf32> to vector<8x1xf32>
    %45 = tpu.reciprocal %44 {approx = true} : vector<8x1xf32> -> vector<8x1xf32>
    %46 = vector.broadcast %45 : vector<8x1xf32> to vector<8x8xf32>
    %47 = arith.mulf %42, %46 : vector<8x8xf32>
    %cst_22 = arith.constant dense<0.000000e+00> : vector<8x4xf32>
    %48 = tpu.matmul %47, %35, %cst_22 {dimension_numbers = #tpu.dot_dimension_numbers<[1], [0], [0], [1], [0, 0, 1, 1], [], []>} : vector<8x8xf32>, vector<8x4xf32>, vector<8x4xf32> -> vector<8x4xf32>
    %49 = vector.extract_strided_slice %28 {offsets = [0, 4], sizes = [8, 4], strides = [1, 1]} : vector<8x32xf32> to vector<8x4xf32>
    %50 = vector.extract_strided_slice %29 {offsets = [0, 4], sizes = [8, 4], strides = [1, 1]} : vector<8x32xf32> to vector<8x4xf32>
    %51 = vector.extract_strided_slice %30 {offsets = [0, 4], sizes = [8, 4], strides = [1, 1]} : vector<8x32xf32> to vector<8x4xf32>
    "tpu.trace_start"() <{level = 10 : i32, message = "qd,kd->qk"}> : () -> ()
    %cst_23 = arith.constant dense<0.000000e+00> : vector<8x8xf32>
    %52 = tpu.matmul %49, %50, %cst_23 {dimension_numbers = #tpu.dot_dimension_numbers<[1], [1], [0], [0], [0, 0, 1, 0], [], []>} : vector<8x4xf32>, vector<8x4xf32>, vector<8x8xf32> -> vector<8x8xf32>
    "tpu.trace_stop"() : () -> ()
    %53 = arith.addf %52, %32 : vector<8x8xf32>
    %cst_24 = arith.constant dense<0xFF800000> : vector<8xf32>
    %54 = vector.multi_reduction <maximumf>, %53, %cst_24 [1] : vector<8x8xf32> to vector<8xf32>
    %55 = vector.shape_cast %54 : vector<8xf32> to vector<8x1xf32>
    %56 = vector.broadcast %55 : vector<8x1xf32> to vector<8x8xf32>
    %57 = arith.subf %53, %56 : vector<8x8xf32>
    %58 = math.exp %57 : vector<8x8xf32>
    %cst_25 = arith.constant dense<0.000000e+00> : vector<8xf32>
    %59 = vector.multi_reduction <add>, %58, %cst_25 [1] : vector<8x8xf32> to vector<8xf32>
    %60 = vector.shape_cast %59 : vector<8xf32> to vector<8x1xf32>
    %61 = tpu.reciprocal %60 {approx = true} : vector<8x1xf32> -> vector<8x1xf32>
    %62 = vector.broadcast %61 : vector<8x1xf32> to vector<8x8xf32>
    %63 = arith.mulf %58, %62 : vector<8x8xf32>
    %cst_26 = arith.constant dense<0.000000e+00> : vector<8x4xf32>
    %64 = tpu.matmul %63, %51, %cst_26 {dimension_numbers = #tpu.dot_dimension_numbers<[1], [0], [0], [1], [0, 0, 1, 1], [], []>} : vector<8x8xf32>, vector<8x4xf32>, vector<8x4xf32> -> vector<8x4xf32>
    %65 = vector.extract_strided_slice %28 {offsets = [0, 8], sizes = [8, 4], strides = [1, 1]} : vector<8x32xf32> to vector<8x4xf32>
    %66 = vector.extract_strided_slice %29 {offsets = [0, 8], sizes = [8, 4], strides = [1, 1]} : vector<8x32xf32> to vector<8x4xf32>
    %67 = vector.extract_strided_slice %30 {offsets = [0, 8], sizes = [8, 4], strides = [1, 1]} : vector<8x32xf32> to vector<8x4xf32>
    "tpu.trace_start"() <{level = 10 : i32, message = "qd,kd->qk"}> : () -> ()
    %cst_27 = arith.constant dense<0.000000e+00> : vector<8x8xf32>
    %68 = tpu.matmul %65, %66, %cst_27 {dimension_numbers = #tpu.dot_dimension_numbers<[1], [1], [0], [0], [0, 0, 1, 0], [], []>} : vector<8x4xf32>, vector<8x4xf32>, vector<8x8xf32> -> vector<8x8xf32>
    "tpu.trace_stop"() : () -> ()
    %69 = arith.addf %68, %32 : vector<8x8xf32>
    %cst_28 = arith.constant dense<0xFF800000> : vector<8xf32>
    %70 = vector.multi_reduction <maximumf>, %69, %cst_28 [1] : vector<8x8xf32> to vector<8xf32>
    %71 = vector.shape_cast %70 : vector<8xf32> to vector<8x1xf32>
    %72 = vector.broadcast %71 : vector<8x1xf32> to vector<8x8xf32>
    %73 = arith.subf %69, %72 : vector<8x8xf32>
    %74 = math.exp %73 : vector<8x8xf32>
    %cst_29 = arith.constant dense<0.000000e+00> : vector<8xf32>
    %75 = vector.multi_reduction <add>, %74, %cst_29 [1] : vector<8x8xf32> to vector<8xf32>
    %76 = vector.shape_cast %75 : vector<8xf32> to vector<8x1xf32>
    %77 = tpu.reciprocal %76 {approx = true} : vector<8x1xf32> -> vector<8x1xf32>
    %78 = vector.broadcast %77 : vector<8x1xf32> to vector<8x8xf32>
    %79 = arith.mulf %74, %78 : vector<8x8xf32>
    %cst_30 = arith.constant dense<0.000000e+00> : vector<8x4xf32>
    %80 = tpu.matmul %79, %67, %cst_30 {dimension_numbers = #tpu.dot_dimension_numbers<[1], [0], [0], [1], [0, 0, 1, 1], [], []>} : vector<8x8xf32>, vector<8x4xf32>, vector<8x4xf32> -> vector<8x4xf32>
    %81 = vector.extract_strided_slice %28 {offsets = [0, 12], sizes = [8, 4], strides = [1, 1]} : vector<8x32xf32> to vector<8x4xf32>
    %82 = vector.extract_strided_slice %29 {offsets = [0, 12], sizes = [8, 4], strides = [1, 1]} : vector<8x32xf32> to vector<8x4xf32>
    %83 = vector.extract_strided_slice %30 {offsets = [0, 12], sizes = [8, 4], strides = [1, 1]} : vector<8x32xf32> to vector<8x4xf32>
    "tpu.trace_start"() <{level = 10 : i32, message = "qd,kd->qk"}> : () -> ()
    %cst_31 = arith.constant dense<0.000000e+00> : vector<8x8xf32>
    %84 = tpu.matmul %81, %82, %cst_31 {dimension_numbers = #tpu.dot_dimension_numbers<[1], [1], [0], [0], [0, 0, 1, 0], [], []>} : vector<8x4xf32>, vector<8x4xf32>, vector<8x8xf32> -> vector<8x8xf32>
    "tpu.trace_stop"() : () -> ()
    %85 = arith.addf %84, %32 : vector<8x8xf32>
    %cst_32 = arith.constant dense<0xFF800000> : vector<8xf32>
    %86 = vector.multi_reduction <maximumf>, %85, %cst_32 [1] : vector<8x8xf32> to vector<8xf32>
    %87 = vector.shape_cast %86 : vector<8xf32> to vector<8x1xf32>
    %88 = vector.broadcast %87 : vector<8x1xf32> to vector<8x8xf32>
    %89 = arith.subf %85, %88 : vector<8x8xf32>
    %90 = math.exp %89 : vector<8x8xf32>
    %cst_33 = arith.constant dense<0.000000e+00> : vector<8xf32>
    %91 = vector.multi_reduction <add>, %90, %cst_33 [1] : vector<8x8xf32> to vector<8xf32>
    %92 = vector.shape_cast %91 : vector<8xf32> to vector<8x1xf32>
    %93 = tpu.reciprocal %92 {approx = true} : vector<8x1xf32> -> vector<8x1xf32>
    %94 = vector.broadcast %93 : vector<8x1xf32> to vector<8x8xf32>
    %95 = arith.mulf %90, %94 : vector<8x8xf32>
    %cst_34 = arith.constant dense<0.000000e+00> : vector<8x4xf32>
    %96 = tpu.matmul %95, %83, %cst_34 {dimension_numbers = #tpu.dot_dimension_numbers<[1], [0], [0], [1], [0, 0, 1, 1], [], []>} : vector<8x8xf32>, vector<8x4xf32>, vector<8x4xf32> -> vector<8x4xf32>
    %97 = vector.extract_strided_slice %28 {offsets = [0, 16], sizes = [8, 4], strides = [1, 1]} : vector<8x32xf32> to vector<8x4xf32>
    %98 = vector.extract_strided_slice %29 {offsets = [0, 16], sizes = [8, 4], strides = [1, 1]} : vector<8x32xf32> to vector<8x4xf32>
    %99 = vector.extract_strided_slice %30 {offsets = [0, 16], sizes = [8, 4], strides = [1, 1]} : vector<8x32xf32> to vector<8x4xf32>
    "tpu.trace_start"() <{level = 10 : i32, message = "qd,kd->qk"}> : () -> ()
    %cst_35 = arith.constant dense<0.000000e+00> : vector<8x8xf32>
    %100 = tpu.matmul %97, %98, %cst_35 {dimension_numbers = #tpu.dot_dimension_numbers<[1], [1], [0], [0], [0, 0, 1, 0], [], []>} : vector<8x4xf32>, vector<8x4xf32>, vector<8x8xf32> -> vector<8x8xf32>
    "tpu.trace_stop"() : () -> ()
    %101 = arith.addf %100, %32 : vector<8x8xf32>
    %cst_36 = arith.constant dense<0xFF800000> : vector<8xf32>
    %102 = vector.multi_reduction <maximumf>, %101, %cst_36 [1] : vector<8x8xf32> to vector<8xf32>
    %103 = vector.shape_cast %102 : vector<8xf32> to vector<8x1xf32>
    %104 = vector.broadcast %103 : vector<8x1xf32> to vector<8x8xf32>
    %105 = arith.subf %101, %104 : vector<8x8xf32>
    %106 = math.exp %105 : vector<8x8xf32>
    %cst_37 = arith.constant dense<0.000000e+00> : vector<8xf32>
    %107 = vector.multi_reduction <add>, %106, %cst_37 [1] : vector<8x8xf32> to vector<8xf32>
    %108 = vector.shape_cast %107 : vector<8xf32> to vector<8x1xf32>
    %109 = tpu.reciprocal %108 {approx = true} : vector<8x1xf32> -> vector<8x1xf32>
    %110 = vector.broadcast %109 : vector<8x1xf32> to vector<8x8xf32>
    %111 = arith.mulf %106, %110 : vector<8x8xf32>
    %cst_38 = arith.constant dense<0.000000e+00> : vector<8x4xf32>
    %112 = tpu.matmul %111, %99, %cst_38 {dimension_numbers = #tpu.dot_dimension_numbers<[1], [0], [0], [1], [0, 0, 1, 1], [], []>} : vector<8x8xf32>, vector<8x4xf32>, vector<8x4xf32> -> vector<8x4xf32>
    %113 = vector.extract_strided_slice %28 {offsets = [0, 20], sizes = [8, 4], strides = [1, 1]} : vector<8x32xf32> to vector<8x4xf32>
    %114 = vector.extract_strided_slice %29 {offsets = [0, 20], sizes = [8, 4], strides = [1, 1]} : vector<8x32xf32> to vector<8x4xf32>
    %115 = vector.extract_strided_slice %30 {offsets = [0, 20], sizes = [8, 4], strides = [1, 1]} : vector<8x32xf32> to vector<8x4xf32>
    "tpu.trace_start"() <{level = 10 : i32, message = "qd,kd->qk"}> : () -> ()
    %cst_39 = arith.constant dense<0.000000e+00> : vector<8x8xf32>
    %116 = tpu.matmul %113, %114, %cst_39 {dimension_numbers = #tpu.dot_dimension_numbers<[1], [1], [0], [0], [0, 0, 1, 0], [], []>} : vector<8x4xf32>, vector<8x4xf32>, vector<8x8xf32> -> vector<8x8xf32>
    "tpu.trace_stop"() : () -> ()
    %117 = arith.addf %116, %32 : vector<8x8xf32>
    %cst_40 = arith.constant dense<0xFF800000> : vector<8xf32>
    %118 = vector.multi_reduction <maximumf>, %117, %cst_40 [1] : vector<8x8xf32> to vector<8xf32>
    %119 = vector.shape_cast %118 : vector<8xf32> to vector<8x1xf32>
    %120 = vector.broadcast %119 : vector<8x1xf32> to vector<8x8xf32>
    %121 = arith.subf %117, %120 : vector<8x8xf32>
    %122 = math.exp %121 : vector<8x8xf32>
    %cst_41 = arith.constant dense<0.000000e+00> : vector<8xf32>
    %123 = vector.multi_reduction <add>, %122, %cst_41 [1] : vector<8x8xf32> to vector<8xf32>
    %124 = vector.shape_cast %123 : vector<8xf32> to vector<8x1xf32>
    %125 = tpu.reciprocal %124 {approx = true} : vector<8x1xf32> -> vector<8x1xf32>
    %126 = vector.broadcast %125 : vector<8x1xf32> to vector<8x8xf32>
    %127 = arith.mulf %122, %126 : vector<8x8xf32>
    %cst_42 = arith.constant dense<0.000000e+00> : vector<8x4xf32>
    %128 = tpu.matmul %127, %115, %cst_42 {dimension_numbers = #tpu.dot_dimension_numbers<[1], [0], [0], [1], [0, 0, 1, 1], [], []>} : vector<8x8xf32>, vector<8x4xf32>, vector<8x4xf32> -> vector<8x4xf32>
    %129 = vector.extract_strided_slice %28 {offsets = [0, 24], sizes = [8, 4], strides = [1, 1]} : vector<8x32xf32> to vector<8x4xf32>
    %130 = vector.extract_strided_slice %29 {offsets = [0, 24], sizes = [8, 4], strides = [1, 1]} : vector<8x32xf32> to vector<8x4xf32>
    %131 = vector.extract_strided_slice %30 {offsets = [0, 24], sizes = [8, 4], strides = [1, 1]} : vector<8x32xf32> to vector<8x4xf32>
    "tpu.trace_start"() <{level = 10 : i32, message = "qd,kd->qk"}> : () -> ()
    %cst_43 = arith.constant dense<0.000000e+00> : vector<8x8xf32>
    %132 = tpu.matmul %129, %130, %cst_43 {dimension_numbers = #tpu.dot_dimension_numbers<[1], [1], [0], [0], [0, 0, 1, 0], [], []>} : vector<8x4xf32>, vector<8x4xf32>, vector<8x8xf32> -> vector<8x8xf32>
    "tpu.trace_stop"() : () -> ()
    %133 = arith.addf %132, %32 : vector<8x8xf32>
    %cst_44 = arith.constant dense<0xFF800000> : vector<8xf32>
    %134 = vector.multi_reduction <maximumf>, %133, %cst_44 [1] : vector<8x8xf32> to vector<8xf32>
    %135 = vector.shape_cast %134 : vector<8xf32> to vector<8x1xf32>
    %136 = vector.broadcast %135 : vector<8x1xf32> to vector<8x8xf32>
    %137 = arith.subf %133, %136 : vector<8x8xf32>
    %138 = math.exp %137 : vector<8x8xf32>
    %cst_45 = arith.constant dense<0.000000e+00> : vector<8xf32>
    %139 = vector.multi_reduction <add>, %138, %cst_45 [1] : vector<8x8xf32> to vector<8xf32>
    %140 = vector.shape_cast %139 : vector<8xf32> to vector<8x1xf32>
    %141 = tpu.reciprocal %140 {approx = true} : vector<8x1xf32> -> vector<8x1xf32>
    %142 = vector.broadcast %141 : vector<8x1xf32> to vector<8x8xf32>
    %143 = arith.mulf %138, %142 : vector<8x8xf32>
    %cst_46 = arith.constant dense<0.000000e+00> : vector<8x4xf32>
    %144 = tpu.matmul %143, %131, %cst_46 {dimension_numbers = #tpu.dot_dimension_numbers<[1], [0], [0], [1], [0, 0, 1, 1], [], []>} : vector<8x8xf32>, vector<8x4xf32>, vector<8x4xf32> -> vector<8x4xf32>
    %145 = vector.extract_strided_slice %28 {offsets = [0, 28], sizes = [8, 4], strides = [1, 1]} : vector<8x32xf32> to vector<8x4xf32>
    %146 = vector.extract_strided_slice %29 {offsets = [0, 28], sizes = [8, 4], strides = [1, 1]} : vector<8x32xf32> to vector<8x4xf32>
    %147 = vector.extract_strided_slice %30 {offsets = [0, 28], sizes = [8, 4], strides = [1, 1]} : vector<8x32xf32> to vector<8x4xf32>
    "tpu.trace_start"() <{level = 10 : i32, message = "qd,kd->qk"}> : () -> ()
    %cst_47 = arith.constant dense<0.000000e+00> : vector<8x8xf32>
    %148 = tpu.matmul %145, %146, %cst_47 {dimension_numbers = #tpu.dot_dimension_numbers<[1], [1], [0], [0], [0, 0, 1, 0], [], []>} : vector<8x4xf32>, vector<8x4xf32>, vector<8x8xf32> -> vector<8x8xf32>
    "tpu.trace_stop"() : () -> ()
    %149 = arith.addf %148, %32 : vector<8x8xf32>
    %cst_48 = arith.constant dense<0xFF800000> : vector<8xf32>
    %150 = vector.multi_reduction <maximumf>, %149, %cst_48 [1] : vector<8x8xf32> to vector<8xf32>
    %151 = vector.shape_cast %150 : vector<8xf32> to vector<8x1xf32>
    %152 = vector.broadcast %151 : vector<8x1xf32> to vector<8x8xf32>
    %153 = arith.subf %149, %152 : vector<8x8xf32>
    %154 = math.exp %153 : vector<8x8xf32>
    %cst_49 = arith.constant dense<0.000000e+00> : vector<8xf32>
    %155 = vector.multi_reduction <add>, %154, %cst_49 [1] : vector<8x8xf32> to vector<8xf32>
    %156 = vector.shape_cast %155 : vector<8xf32> to vector<8x1xf32>
    %157 = tpu.reciprocal %156 {approx = true} : vector<8x1xf32> -> vector<8x1xf32>
    %158 = vector.broadcast %157 : vector<8x1xf32> to vector<8x8xf32>
    %159 = arith.mulf %154, %158 : vector<8x8xf32>
    %cst_50 = arith.constant dense<0.000000e+00> : vector<8x4xf32>
    %160 = tpu.matmul %159, %147, %cst_50 {dimension_numbers = #tpu.dot_dimension_numbers<[1], [0], [0], [1], [0, 0, 1, 1], [], []>} : vector<8x8xf32>, vector<8x4xf32>, vector<8x4xf32> -> vector<8x4xf32>
    %161 = tpu.concatenate %48, %64, %80, %96, %112, %128, %144, %160 in 1 : vector<8x4xf32>, vector<8x4xf32>, vector<8x4xf32>, vector<8x4xf32>, vector<8x4xf32>, vector<8x4xf32>, vector<8x4xf32>, vector<8x4xf32> -> vector<8x32xf32>
    %c0_51 = arith.constant 0 : index
    %c0_52 = arith.constant 0 : index
    %162 = vector.load %arg8[%c0_51, %c0_52] : memref<32x32xf32, #tpu.memory_space<vmem>>, vector<32x32xf32>
    %cst_53 = arith.constant dense<0.000000e+00> : vector<8x32xf32>
    %163 = tpu.matmul %161, %162, %cst_53 {dimension_numbers = #tpu.dot_dimension_numbers<[1], [0], [0], [1], [0, 0, 1, 1], [], []>} : vector<8x32xf32>, vector<32x32xf32>, vector<8x32xf32> -> vector<8x32xf32>
    %164 = arith.addf %1, %163 : vector<8x32xf32>
    %c0_54 = arith.constant 0 : index
    %c0_55 = arith.constant 0 : index
    %165 = vector.load %arg9[%c0_54, %c0_55] : memref<1x32xf32, #tpu.memory_space<vmem>>, vector<1x32xf32>
    %c0_56 = arith.constant 0 : index
    %c0_57 = arith.constant 0 : index
    %166 = vector.load %arg10[%c0_56, %c0_57] : memref<1x32xf32, #tpu.memory_space<vmem>>, vector<1x32xf32>
    %cst_58 = arith.constant dense<0.000000e+00> : vector<8xf32>
    %167 = vector.multi_reduction <add>, %164, %cst_58 [1] : vector<8x32xf32> to vector<8xf32>
    %168 = vector.shape_cast %167 : vector<8xf32> to vector<8x1xf32>
    %cst_59 = arith.constant 3.200000e+01 : f32
    %169 = vector.broadcast %cst_59 : f32 to vector<8x1xf32>
    %170 = arith.divf %168, %169 : vector<8x1xf32>
    %171 = vector.broadcast %170 : vector<8x1xf32> to vector<8x32xf32>
    %172 = arith.subf %164, %171 : vector<8x32xf32>
    %173 = arith.mulf %172, %172 : vector<8x32xf32>
    %cst_60 = arith.constant dense<0.000000e+00> : vector<8xf32>
    %174 = vector.multi_reduction <add>, %173, %cst_60 [1] : vector<8x32xf32> to vector<8xf32>
    %175 = vector.shape_cast %174 : vector<8xf32> to vector<8x1xf32>
    %cst_61 = arith.constant 3.200000e+01 : f32
    %176 = vector.broadcast %cst_61 : f32 to vector<8x1xf32>
    %177 = arith.divf %175, %176 : vector<8x1xf32>
    %cst_62 = arith.constant 9.99999997E-7 : f32
    %178 = vector.broadcast %cst_62 : f32 to vector<8x1xf32>
    %179 = arith.addf %177, %178 : vector<8x1xf32>
    %180 = math.rsqrt %179 : vector<8x1xf32>
    %181 = vector.broadcast %180 : vector<8x1xf32> to vector<8x32xf32>
    %182 = arith.mulf %172, %181 : vector<8x32xf32>
    %183 = vector.broadcast %165 : vector<1x32xf32> to vector<8x32xf32>
    %184 = arith.mulf %182, %183 : vector<8x32xf32>
    %185 = vector.broadcast %166 : vector<1x32xf32> to vector<8x32xf32>
    %186 = arith.addf %184, %185 : vector<8x32xf32>
    %c0_63 = arith.constant 0 : index
    %c0_64 = arith.constant 0 : index
    %187 = vector.load %arg11[%c0_63, %c0_64] : memref<32x32xf32, #tpu.memory_space<vmem>>, vector<32x32xf32>
    %cst_65 = arith.constant dense<0.000000e+00> : vector<8x32xf32>
    %188 = tpu.matmul %186, %187, %cst_65 {dimension_numbers = #tpu.dot_dimension_numbers<[1], [0], [0], [1], [0, 0, 1, 1], [], []>} : vector<8x32xf32>, vector<32x32xf32>, vector<8x32xf32> -> vector<8x32xf32>
    %c0_66 = arith.constant 0 : index
    %c0_67 = arith.constant 0 : index
    %189 = vector.load %arg12[%c0_66, %c0_67] : memref<32x64xf32, #tpu.memory_space<vmem>>, vector<32x64xf32>
    %cst_68 = arith.constant dense<0.000000e+00> : vector<8x64xf32>
    %190 = tpu.matmul %3, %189, %cst_68 {dimension_numbers = #tpu.dot_dimension_numbers<[1], [0], [0], [1], [0, 0, 1, 1], [], []>} : vector<8x32xf32>, vector<32x64xf32>, vector<8x64xf32> -> vector<8x64xf32>
    %191 = vector.extract_strided_slice %190 {offsets = [0, 0], sizes = [8, 32], strides = [1, 1]} : vector<8x64xf32> to vector<8x32xf32>
    %192 = vector.extract_strided_slice %190 {offsets = [0, 32], sizes = [8, 32], strides = [1, 1]} : vector<8x64xf32> to vector<8x32xf32>
    %c0_69 = arith.constant 0 : index
    %c0_70 = arith.constant 0 : index
    %c0_71 = arith.constant 0 : index
    %193 = vector.load %arg4[%c0_69, %c0_70, %c0_71] : memref<1x8x8xf32, #tpu.memory_space<vmem>>, vector<1x8x8xf32>
    %194 = vector.shape_cast %193 : vector<1x8x8xf32> to vector<8x8xf32>
    %195 = vector.extract_strided_slice %188 {offsets = [0, 0], sizes = [8, 4], strides = [1, 1]} : vector<8x32xf32> to vector<8x4xf32>
    %196 = vector.extract_strided_slice %191 {offsets = [0, 0], sizes = [8, 4], strides = [1, 1]} : vector<8x32xf32> to vector<8x4xf32>
    %197 = vector.extract_strided_slice %192 {offsets = [0, 0], sizes = [8, 4], strides = [1, 1]} : vector<8x32xf32> to vector<8x4xf32>
    "tpu.trace_start"() <{level = 10 : i32, message = "qd,kd->qk"}> : () -> ()
    %cst_72 = arith.constant dense<0.000000e+00> : vector<8x8xf32>
    %198 = tpu.matmul %195, %196, %cst_72 {dimension_numbers = #tpu.dot_dimension_numbers<[1], [1], [0], [0], [0, 0, 1, 0], [], []>} : vector<8x4xf32>, vector<8x4xf32>, vector<8x8xf32> -> vector<8x8xf32>
    "tpu.trace_stop"() : () -> ()
    %199 = arith.addf %198, %194 : vector<8x8xf32>
    %cst_73 = arith.constant dense<0xFF800000> : vector<8xf32>
    %200 = vector.multi_reduction <maximumf>, %199, %cst_73 [1] : vector<8x8xf32> to vector<8xf32>
    %201 = vector.shape_cast %200 : vector<8xf32> to vector<8x1xf32>
    %202 = vector.broadcast %201 : vector<8x1xf32> to vector<8x8xf32>
    %203 = arith.subf %199, %202 : vector<8x8xf32>
    %204 = math.exp %203 : vector<8x8xf32>
    %cst_74 = arith.constant dense<0.000000e+00> : vector<8xf32>
    %205 = vector.multi_reduction <add>, %204, %cst_74 [1] : vector<8x8xf32> to vector<8xf32>
    %206 = vector.shape_cast %205 : vector<8xf32> to vector<8x1xf32>
    %207 = tpu.reciprocal %206 {approx = true} : vector<8x1xf32> -> vector<8x1xf32>
    %208 = vector.broadcast %207 : vector<8x1xf32> to vector<8x8xf32>
    %209 = arith.mulf %204, %208 : vector<8x8xf32>
    %cst_75 = arith.constant dense<0.000000e+00> : vector<8x4xf32>
    %210 = tpu.matmul %209, %197, %cst_75 {dimension_numbers = #tpu.dot_dimension_numbers<[1], [0], [0], [1], [0, 0, 1, 1], [], []>} : vector<8x8xf32>, vector<8x4xf32>, vector<8x4xf32> -> vector<8x4xf32>
    %211 = vector.extract_strided_slice %188 {offsets = [0, 4], sizes = [8, 4], strides = [1, 1]} : vector<8x32xf32> to vector<8x4xf32>
    %212 = vector.extract_strided_slice %191 {offsets = [0, 4], sizes = [8, 4], strides = [1, 1]} : vector<8x32xf32> to vector<8x4xf32>
    %213 = vector.extract_strided_slice %192 {offsets = [0, 4], sizes = [8, 4], strides = [1, 1]} : vector<8x32xf32> to vector<8x4xf32>
    "tpu.trace_start"() <{level = 10 : i32, message = "qd,kd->qk"}> : () -> ()
    %cst_76 = arith.constant dense<0.000000e+00> : vector<8x8xf32>
    %214 = tpu.matmul %211, %212, %cst_76 {dimension_numbers = #tpu.dot_dimension_numbers<[1], [1], [0], [0], [0, 0, 1, 0], [], []>} : vector<8x4xf32>, vector<8x4xf32>, vector<8x8xf32> -> vector<8x8xf32>
    "tpu.trace_stop"() : () -> ()
    %215 = arith.addf %214, %194 : vector<8x8xf32>
    %cst_77 = arith.constant dense<0xFF800000> : vector<8xf32>
    %216 = vector.multi_reduction <maximumf>, %215, %cst_77 [1] : vector<8x8xf32> to vector<8xf32>
    %217 = vector.shape_cast %216 : vector<8xf32> to vector<8x1xf32>
    %218 = vector.broadcast %217 : vector<8x1xf32> to vector<8x8xf32>
    %219 = arith.subf %215, %218 : vector<8x8xf32>
    %220 = math.exp %219 : vector<8x8xf32>
    %cst_78 = arith.constant dense<0.000000e+00> : vector<8xf32>
    %221 = vector.multi_reduction <add>, %220, %cst_78 [1] : vector<8x8xf32> to vector<8xf32>
    %222 = vector.shape_cast %221 : vector<8xf32> to vector<8x1xf32>
    %223 = tpu.reciprocal %222 {approx = true} : vector<8x1xf32> -> vector<8x1xf32>
    %224 = vector.broadcast %223 : vector<8x1xf32> to vector<8x8xf32>
    %225 = arith.mulf %220, %224 : vector<8x8xf32>
    %cst_79 = arith.constant dense<0.000000e+00> : vector<8x4xf32>
    %226 = tpu.matmul %225, %213, %cst_79 {dimension_numbers = #tpu.dot_dimension_numbers<[1], [0], [0], [1], [0, 0, 1, 1], [], []>} : vector<8x8xf32>, vector<8x4xf32>, vector<8x4xf32> -> vector<8x4xf32>
    %227 = vector.extract_strided_slice %188 {offsets = [0, 8], sizes = [8, 4], strides = [1, 1]} : vector<8x32xf32> to vector<8x4xf32>
    %228 = vector.extract_strided_slice %191 {offsets = [0, 8], sizes = [8, 4], strides = [1, 1]} : vector<8x32xf32> to vector<8x4xf32>
    %229 = vector.extract_strided_slice %192 {offsets = [0, 8], sizes = [8, 4], strides = [1, 1]} : vector<8x32xf32> to vector<8x4xf32>
    "tpu.trace_start"() <{level = 10 : i32, message = "qd,kd->qk"}> : () -> ()
    %cst_80 = arith.constant dense<0.000000e+00> : vector<8x8xf32>
    %230 = tpu.matmul %227, %228, %cst_80 {dimension_numbers = #tpu.dot_dimension_numbers<[1], [1], [0], [0], [0, 0, 1, 0], [], []>} : vector<8x4xf32>, vector<8x4xf32>, vector<8x8xf32> -> vector<8x8xf32>
    "tpu.trace_stop"() : () -> ()
    %231 = arith.addf %230, %194 : vector<8x8xf32>
    %cst_81 = arith.constant dense<0xFF800000> : vector<8xf32>
    %232 = vector.multi_reduction <maximumf>, %231, %cst_81 [1] : vector<8x8xf32> to vector<8xf32>
    %233 = vector.shape_cast %232 : vector<8xf32> to vector<8x1xf32>
    %234 = vector.broadcast %233 : vector<8x1xf32> to vector<8x8xf32>
    %235 = arith.subf %231, %234 : vector<8x8xf32>
    %236 = math.exp %235 : vector<8x8xf32>
    %cst_82 = arith.constant dense<0.000000e+00> : vector<8xf32>
    %237 = vector.multi_reduction <add>, %236, %cst_82 [1] : vector<8x8xf32> to vector<8xf32>
    %238 = vector.shape_cast %237 : vector<8xf32> to vector<8x1xf32>
    %239 = tpu.reciprocal %238 {approx = true} : vector<8x1xf32> -> vector<8x1xf32>
    %240 = vector.broadcast %239 : vector<8x1xf32> to vector<8x8xf32>
    %241 = arith.mulf %236, %240 : vector<8x8xf32>
    %cst_83 = arith.constant dense<0.000000e+00> : vector<8x4xf32>
    %242 = tpu.matmul %241, %229, %cst_83 {dimension_numbers = #tpu.dot_dimension_numbers<[1], [0], [0], [1], [0, 0, 1, 1], [], []>} : vector<8x8xf32>, vector<8x4xf32>, vector<8x4xf32> -> vector<8x4xf32>
    %243 = vector.extract_strided_slice %188 {offsets = [0, 12], sizes = [8, 4], strides = [1, 1]} : vector<8x32xf32> to vector<8x4xf32>
    %244 = vector.extract_strided_slice %191 {offsets = [0, 12], sizes = [8, 4], strides = [1, 1]} : vector<8x32xf32> to vector<8x4xf32>
    %245 = vector.extract_strided_slice %192 {offsets = [0, 12], sizes = [8, 4], strides = [1, 1]} : vector<8x32xf32> to vector<8x4xf32>
    "tpu.trace_start"() <{level = 10 : i32, message = "qd,kd->qk"}> : () -> ()
    %cst_84 = arith.constant dense<0.000000e+00> : vector<8x8xf32>
    %246 = tpu.matmul %243, %244, %cst_84 {dimension_numbers = #tpu.dot_dimension_numbers<[1], [1], [0], [0], [0, 0, 1, 0], [], []>} : vector<8x4xf32>, vector<8x4xf32>, vector<8x8xf32> -> vector<8x8xf32>
    "tpu.trace_stop"() : () -> ()
    %247 = arith.addf %246, %194 : vector<8x8xf32>
    %cst_85 = arith.constant dense<0xFF800000> : vector<8xf32>
    %248 = vector.multi_reduction <maximumf>, %247, %cst_85 [1] : vector<8x8xf32> to vector<8xf32>
    %249 = vector.shape_cast %248 : vector<8xf32> to vector<8x1xf32>
    %250 = vector.broadcast %249 : vector<8x1xf32> to vector<8x8xf32>
    %251 = arith.subf %247, %250 : vector<8x8xf32>
    %252 = math.exp %251 : vector<8x8xf32>
    %cst_86 = arith.constant dense<0.000000e+00> : vector<8xf32>
    %253 = vector.multi_reduction <add>, %252, %cst_86 [1] : vector<8x8xf32> to vector<8xf32>
    %254 = vector.shape_cast %253 : vector<8xf32> to vector<8x1xf32>
    %255 = tpu.reciprocal %254 {approx = true} : vector<8x1xf32> -> vector<8x1xf32>
    %256 = vector.broadcast %255 : vector<8x1xf32> to vector<8x8xf32>
    %257 = arith.mulf %252, %256 : vector<8x8xf32>
    %cst_87 = arith.constant dense<0.000000e+00> : vector<8x4xf32>
    %258 = tpu.matmul %257, %245, %cst_87 {dimension_numbers = #tpu.dot_dimension_numbers<[1], [0], [0], [1], [0, 0, 1, 1], [], []>} : vector<8x8xf32>, vector<8x4xf32>, vector<8x4xf32> -> vector<8x4xf32>
    %259 = vector.extract_strided_slice %188 {offsets = [0, 16], sizes = [8, 4], strides = [1, 1]} : vector<8x32xf32> to vector<8x4xf32>
    %260 = vector.extract_strided_slice %191 {offsets = [0, 16], sizes = [8, 4], strides = [1, 1]} : vector<8x32xf32> to vector<8x4xf32>
    %261 = vector.extract_strided_slice %192 {offsets = [0, 16], sizes = [8, 4], strides = [1, 1]} : vector<8x32xf32> to vector<8x4xf32>
    "tpu.trace_start"() <{level = 10 : i32, message = "qd,kd->qk"}> : () -> ()
    %cst_88 = arith.constant dense<0.000000e+00> : vector<8x8xf32>
    %262 = tpu.matmul %259, %260, %cst_88 {dimension_numbers = #tpu.dot_dimension_numbers<[1], [1], [0], [0], [0, 0, 1, 0], [], []>} : vector<8x4xf32>, vector<8x4xf32>, vector<8x8xf32> -> vector<8x8xf32>
    "tpu.trace_stop"() : () -> ()
    %263 = arith.addf %262, %194 : vector<8x8xf32>
    %cst_89 = arith.constant dense<0xFF800000> : vector<8xf32>
    %264 = vector.multi_reduction <maximumf>, %263, %cst_89 [1] : vector<8x8xf32> to vector<8xf32>
    %265 = vector.shape_cast %264 : vector<8xf32> to vector<8x1xf32>
    %266 = vector.broadcast %265 : vector<8x1xf32> to vector<8x8xf32>
    %267 = arith.subf %263, %266 : vector<8x8xf32>
    %268 = math.exp %267 : vector<8x8xf32>
    %cst_90 = arith.constant dense<0.000000e+00> : vector<8xf32>
    %269 = vector.multi_reduction <add>, %268, %cst_90 [1] : vector<8x8xf32> to vector<8xf32>
    %270 = vector.shape_cast %269 : vector<8xf32> to vector<8x1xf32>
    %271 = tpu.reciprocal %270 {approx = true} : vector<8x1xf32> -> vector<8x1xf32>
    %272 = vector.broadcast %271 : vector<8x1xf32> to vector<8x8xf32>
    %273 = arith.mulf %268, %272 : vector<8x8xf32>
    %cst_91 = arith.constant dense<0.000000e+00> : vector<8x4xf32>
    %274 = tpu.matmul %273, %261, %cst_91 {dimension_numbers = #tpu.dot_dimension_numbers<[1], [0], [0], [1], [0, 0, 1, 1], [], []>} : vector<8x8xf32>, vector<8x4xf32>, vector<8x4xf32> -> vector<8x4xf32>
    %275 = vector.extract_strided_slice %188 {offsets = [0, 20], sizes = [8, 4], strides = [1, 1]} : vector<8x32xf32> to vector<8x4xf32>
    %276 = vector.extract_strided_slice %191 {offsets = [0, 20], sizes = [8, 4], strides = [1, 1]} : vector<8x32xf32> to vector<8x4xf32>
    %277 = vector.extract_strided_slice %192 {offsets = [0, 20], sizes = [8, 4], strides = [1, 1]} : vector<8x32xf32> to vector<8x4xf32>
    "tpu.trace_start"() <{level = 10 : i32, message = "qd,kd->qk"}> : () -> ()
    %cst_92 = arith.constant dense<0.000000e+00> : vector<8x8xf32>
    %278 = tpu.matmul %275, %276, %cst_92 {dimension_numbers = #tpu.dot_dimension_numbers<[1], [1], [0], [0], [0, 0, 1, 0], [], []>} : vector<8x4xf32>, vector<8x4xf32>, vector<8x8xf32> -> vector<8x8xf32>
    "tpu.trace_stop"() : () -> ()
    %279 = arith.addf %278, %194 : vector<8x8xf32>
    %cst_93 = arith.constant dense<0xFF800000> : vector<8xf32>
    %280 = vector.multi_reduction <maximumf>, %279, %cst_93 [1] : vector<8x8xf32> to vector<8xf32>
    %281 = vector.shape_cast %280 : vector<8xf32> to vector<8x1xf32>
    %282 = vector.broadcast %281 : vector<8x1xf32> to vector<8x8xf32>
    %283 = arith.subf %279, %282 : vector<8x8xf32>
    %284 = math.exp %283 : vector<8x8xf32>
    %cst_94 = arith.constant dense<0.000000e+00> : vector<8xf32>
    %285 = vector.multi_reduction <add>, %284, %cst_94 [1] : vector<8x8xf32> to vector<8xf32>
    %286 = vector.shape_cast %285 : vector<8xf32> to vector<8x1xf32>
    %287 = tpu.reciprocal %286 {approx = true} : vector<8x1xf32> -> vector<8x1xf32>
    %288 = vector.broadcast %287 : vector<8x1xf32> to vector<8x8xf32>
    %289 = arith.mulf %284, %288 : vector<8x8xf32>
    %cst_95 = arith.constant dense<0.000000e+00> : vector<8x4xf32>
    %290 = tpu.matmul %289, %277, %cst_95 {dimension_numbers = #tpu.dot_dimension_numbers<[1], [0], [0], [1], [0, 0, 1, 1], [], []>} : vector<8x8xf32>, vector<8x4xf32>, vector<8x4xf32> -> vector<8x4xf32>
    %291 = vector.extract_strided_slice %188 {offsets = [0, 24], sizes = [8, 4], strides = [1, 1]} : vector<8x32xf32> to vector<8x4xf32>
    %292 = vector.extract_strided_slice %191 {offsets = [0, 24], sizes = [8, 4], strides = [1, 1]} : vector<8x32xf32> to vector<8x4xf32>
    %293 = vector.extract_strided_slice %192 {offsets = [0, 24], sizes = [8, 4], strides = [1, 1]} : vector<8x32xf32> to vector<8x4xf32>
    "tpu.trace_start"() <{level = 10 : i32, message = "qd,kd->qk"}> : () -> ()
    %cst_96 = arith.constant dense<0.000000e+00> : vector<8x8xf32>
    %294 = tpu.matmul %291, %292, %cst_96 {dimension_numbers = #tpu.dot_dimension_numbers<[1], [1], [0], [0], [0, 0, 1, 0], [], []>} : vector<8x4xf32>, vector<8x4xf32>, vector<8x8xf32> -> vector<8x8xf32>
    "tpu.trace_stop"() : () -> ()
    %295 = arith.addf %294, %194 : vector<8x8xf32>
    %cst_97 = arith.constant dense<0xFF800000> : vector<8xf32>
    %296 = vector.multi_reduction <maximumf>, %295, %cst_97 [1] : vector<8x8xf32> to vector<8xf32>
    %297 = vector.shape_cast %296 : vector<8xf32> to vector<8x1xf32>
    %298 = vector.broadcast %297 : vector<8x1xf32> to vector<8x8xf32>
    %299 = arith.subf %295, %298 : vector<8x8xf32>
    %300 = math.exp %299 : vector<8x8xf32>
    %cst_98 = arith.constant dense<0.000000e+00> : vector<8xf32>
    %301 = vector.multi_reduction <add>, %300, %cst_98 [1] : vector<8x8xf32> to vector<8xf32>
    %302 = vector.shape_cast %301 : vector<8xf32> to vector<8x1xf32>
    %303 = tpu.reciprocal %302 {approx = true} : vector<8x1xf32> -> vector<8x1xf32>
    %304 = vector.broadcast %303 : vector<8x1xf32> to vector<8x8xf32>
    %305 = arith.mulf %300, %304 : vector<8x8xf32>
    %cst_99 = arith.constant dense<0.000000e+00> : vector<8x4xf32>
    %306 = tpu.matmul %305, %293, %cst_99 {dimension_numbers = #tpu.dot_dimension_numbers<[1], [0], [0], [1], [0, 0, 1, 1], [], []>} : vector<8x8xf32>, vector<8x4xf32>, vector<8x4xf32> -> vector<8x4xf32>
    %307 = vector.extract_strided_slice %188 {offsets = [0, 28], sizes = [8, 4], strides = [1, 1]} : vector<8x32xf32> to vector<8x4xf32>
    %308 = vector.extract_strided_slice %191 {offsets = [0, 28], sizes = [8, 4], strides = [1, 1]} : vector<8x32xf32> to vector<8x4xf32>
    %309 = vector.extract_strided_slice %192 {offsets = [0, 28], sizes = [8, 4], strides = [1, 1]} : vector<8x32xf32> to vector<8x4xf32>
    "tpu.trace_start"() <{level = 10 : i32, message = "qd,kd->qk"}> : () -> ()
    %cst_100 = arith.constant dense<0.000000e+00> : vector<8x8xf32>
    %310 = tpu.matmul %307, %308, %cst_100 {dimension_numbers = #tpu.dot_dimension_numbers<[1], [1], [0], [0], [0, 0, 1, 0], [], []>} : vector<8x4xf32>, vector<8x4xf32>, vector<8x8xf32> -> vector<8x8xf32>
    "tpu.trace_stop"() : () -> ()
    %311 = arith.addf %310, %194 : vector<8x8xf32>
    %cst_101 = arith.constant dense<0xFF800000> : vector<8xf32>
    %312 = vector.multi_reduction <maximumf>, %311, %cst_101 [1] : vector<8x8xf32> to vector<8xf32>
    %313 = vector.shape_cast %312 : vector<8xf32> to vector<8x1xf32>
    %314 = vector.broadcast %313 : vector<8x1xf32> to vector<8x8xf32>
    %315 = arith.subf %311, %314 : vector<8x8xf32>
    %316 = math.exp %315 : vector<8x8xf32>
    %cst_102 = arith.constant dense<0.000000e+00> : vector<8xf32>
    %317 = vector.multi_reduction <add>, %316, %cst_102 [1] : vector<8x8xf32> to vector<8xf32>
    %318 = vector.shape_cast %317 : vector<8xf32> to vector<8x1xf32>
    %319 = tpu.reciprocal %318 {approx = true} : vector<8x1xf32> -> vector<8x1xf32>
    %320 = vector.broadcast %319 : vector<8x1xf32> to vector<8x8xf32>
    %321 = arith.mulf %316, %320 : vector<8x8xf32>
    %cst_103 = arith.constant dense<0.000000e+00> : vector<8x4xf32>
    %322 = tpu.matmul %321, %309, %cst_103 {dimension_numbers = #tpu.dot_dimension_numbers<[1], [0], [0], [1], [0, 0, 1, 1], [], []>} : vector<8x8xf32>, vector<8x4xf32>, vector<8x4xf32> -> vector<8x4xf32>
    %323 = tpu.concatenate %210, %226, %242, %258, %274, %290, %306, %322 in 1 : vector<8x4xf32>, vector<8x4xf32>, vector<8x4xf32>, vector<8x4xf32>, vector<8x4xf32>, vector<8x4xf32>, vector<8x4xf32>, vector<8x4xf32> -> vector<8x32xf32>
    %c0_104 = arith.constant 0 : index
    %c0_105 = arith.constant 0 : index
    %324 = vector.load %arg13[%c0_104, %c0_105] : memref<32x32xf32, #tpu.memory_space<vmem>>, vector<32x32xf32>
    %cst_106 = arith.constant dense<0.000000e+00> : vector<8x32xf32>
    %325 = tpu.matmul %323, %324, %cst_106 {dimension_numbers = #tpu.dot_dimension_numbers<[1], [0], [0], [1], [0, 0, 1, 1], [], []>} : vector<8x32xf32>, vector<32x32xf32>, vector<8x32xf32> -> vector<8x32xf32>
    %326 = arith.addf %164, %325 : vector<8x32xf32>
    %c0_107 = arith.constant 0 : index
    %c0_108 = arith.constant 0 : index
    %327 = vector.load %arg14[%c0_107, %c0_108] : memref<1x32xf32, #tpu.memory_space<vmem>>, vector<1x32xf32>
    %c0_109 = arith.constant 0 : index
    %c0_110 = arith.constant 0 : index
    %328 = vector.load %arg15[%c0_109, %c0_110] : memref<1x32xf32, #tpu.memory_space<vmem>>, vector<1x32xf32>
    %cst_111 = arith.constant dense<0.000000e+00> : vector<8xf32>
    %329 = vector.multi_reduction <add>, %326, %cst_111 [1] : vector<8x32xf32> to vector<8xf32>
    %330 = vector.shape_cast %329 : vector<8xf32> to vector<8x1xf32>
    %cst_112 = arith.constant 3.200000e+01 : f32
    %331 = vector.broadcast %cst_112 : f32 to vector<8x1xf32>
    %332 = arith.divf %330, %331 : vector<8x1xf32>
    %333 = vector.broadcast %332 : vector<8x1xf32> to vector<8x32xf32>
    %334 = arith.subf %326, %333 : vector<8x32xf32>
    %335 = arith.mulf %334, %334 : vector<8x32xf32>
    %cst_113 = arith.constant dense<0.000000e+00> : vector<8xf32>
    %336 = vector.multi_reduction <add>, %335, %cst_113 [1] : vector<8x32xf32> to vector<8xf32>
    %337 = vector.shape_cast %336 : vector<8xf32> to vector<8x1xf32>
    %cst_114 = arith.constant 3.200000e+01 : f32
    %338 = vector.broadcast %cst_114 : f32 to vector<8x1xf32>
    %339 = arith.divf %337, %338 : vector<8x1xf32>
    %cst_115 = arith.constant 9.99999997E-7 : f32
    %340 = vector.broadcast %cst_115 : f32 to vector<8x1xf32>
    %341 = arith.addf %339, %340 : vector<8x1xf32>
    %342 = math.rsqrt %341 : vector<8x1xf32>
    %343 = vector.broadcast %342 : vector<8x1xf32> to vector<8x32xf32>
    %344 = arith.mulf %334, %343 : vector<8x32xf32>
    %345 = vector.broadcast %327 : vector<1x32xf32> to vector<8x32xf32>
    %346 = arith.mulf %344, %345 : vector<8x32xf32>
    %347 = vector.broadcast %328 : vector<1x32xf32> to vector<8x32xf32>
    %348 = arith.addf %346, %347 : vector<8x32xf32>
    %c0_116 = arith.constant 0 : index
    %c0_117 = arith.constant 0 : index
    %349 = vector.load %arg16[%c0_116, %c0_117] : memref<32x64xf32, #tpu.memory_space<vmem>>, vector<32x64xf32>
    %cst_118 = arith.constant dense<0.000000e+00> : vector<8x64xf32>
    %350 = tpu.matmul %348, %349, %cst_118 {dimension_numbers = #tpu.dot_dimension_numbers<[1], [0], [0], [1], [0, 0, 1, 1], [], []>} : vector<8x32xf32>, vector<32x64xf32>, vector<8x64xf32> -> vector<8x64xf32>
    %c0_119 = arith.constant 0 : index
    %c0_120 = arith.constant 0 : index
    %351 = vector.load %arg17[%c0_119, %c0_120] : memref<1x64xf32, #tpu.memory_space<vmem>>, vector<1x64xf32>
    %352 = vector.broadcast %351 : vector<1x64xf32> to vector<8x64xf32>
    %353 = arith.addf %350, %352 : vector<8x64xf32>
    %cst_121 = arith.constant 0.000000e+00 : f32
    %354 = vector.broadcast %cst_121 : f32 to vector<8x64xf32>
    %355 = arith.maximumf %353, %354 : vector<8x64xf32>
    %c0_122 = arith.constant 0 : index
    %c0_123 = arith.constant 0 : index
    %356 = vector.load %arg18[%c0_122, %c0_123] : memref<64x32xf32, #tpu.memory_space<vmem>>, vector<64x32xf32>
    %cst_124 = arith.constant dense<0.000000e+00> : vector<8x32xf32>
    %357 = tpu.matmul %355, %356, %cst_124 {dimension_numbers = #tpu.dot_dimension_numbers<[1], [0], [0], [1], [0, 0, 1, 1], [], []>} : vector<8x64xf32>, vector<64x32xf32>, vector<8x32xf32> -> vector<8x32xf32>
    %358 = arith.addf %326, %357 : vector<8x32xf32>
    %c0_125 = arith.constant 0 : index
    %c0_126 = arith.constant 0 : index
    %359 = vector.load %arg19[%c0_125, %c0_126] : memref<1x32xf32, #tpu.memory_space<vmem>>, vector<1x32xf32>
    %360 = vector.broadcast %359 : vector<1x32xf32> to vector<8x32xf32>
    %361 = arith.addf %358, %360 : vector<8x32xf32>
    %c0_127 = arith.constant 0 : index
    %c0_128 = arith.constant 0 : index
    %c0_129 = arith.constant 0 : index
    %362 = vector.load %arg20[%c0_127, %c0_128, %c0_129] : memref<1x8x32xf32, #tpu.memory_space<vmem>>, vector<1x8x32xf32>
    %363 = vector.shape_cast %362 : vector<1x8x32xf32> to vector<8x32xf32>
    %364 = vector.shape_cast %361 : vector<8x32xf32> to vector<1x8x32xf32>
    tpu.vector_store %arg20[%c0_127, %c0_128, %c0_129], %364 {strides = array<i32>} : memref<1x8x32xf32, #tpu.memory_space<vmem>>, vector<1x8x32xf32>,
    return
  }
  func.func @transform_0(%arg0: i32) -> (i32, i32, i32) {
    %c0_i32 = arith.constant 0 : i32
    %c0_i32_0 = arith.constant 0 : i32
    %c0_i32_1 = arith.constant 0 : i32
    return %arg0, %c0_i32, %c0_i32_0 : i32, i32, i32
  }
  func.func @transform_1(%arg0: i32) -> (i32, i32, i32) {
    %c0_i32 = arith.constant 0 : i32
    %c0_i32_0 = arith.constant 0 : i32
    %c0_i32_1 = arith.constant 0 : i32
    return %arg0, %c0_i32, %c0_i32_0 : i32, i32, i32
  }
  func.func @transform_2(%arg0: i32) -> (i32, i32, i32) {
    %c0_i32 = arith.constant 0 : i32
    %c0_i32_0 = arith.constant 0 : i32
    %c0_i32_1 = arith.constant 0 : i32
    return %arg0, %c0_i32, %c0_i32_0 : i32, i32, i32
  }
  func.func @transform_3(%arg0: i32) -> (i32, i32, i32) {
    %c0_i32 = arith.constant 0 : i32
    %c0_i32_0 = arith.constant 0 : i32
    %c0_i32_1 = arith.constant 0 : i32
    return %arg0, %c0_i32, %c0_i32_0 : i32, i32, i32
  }
  func.func @transform_4(%arg0: i32) -> (i32, i32) {
    %c0_i32 = arith.constant 0 : i32
    %c0_i32_0 = arith.constant 0 : i32
    %c0_i32_1 = arith.constant 0 : i32
    return %c0_i32, %c0_i32_0 : i32, i32
  }
  func.func @transform_5(%arg0: i32) -> (i32, i32) {
    %c0_i32 = arith.constant 0 : i32
    %c0_i32_0 = arith.constant 0 : i32
    %c0_i32_1 = arith.constant 0 : i32
    return %c0_i32, %c0_i32_0 : i32, i32
  }
  func.func @transform_6(%arg0: i32) -> (i32, i32) {
    %c0_i32 = arith.constant 0 : i32
    %c0_i32_0 = arith.constant 0 : i32
    %c0_i32_1 = arith.constant 0 : i32
    return %c0_i32, %c0_i32_0 : i32, i32
  }
  func.func @transform_7(%arg0: i32) -> (i32, i32) {
    %c0_i32 = arith.constant 0 : i32
    %c0_i32_0 = arith.constant 0 : i32
    %c0_i32_1 = arith.constant 0 : i32
    return %c0_i32, %c0_i32_0 : i32, i32
  }
  func.func @transform_8(%arg0: i32) -> (i32, i32) {
    %c0_i32 = arith.constant 0 : i32
    %c0_i32_0 = arith.constant 0 : i32
    %c0_i32_1 = arith.constant 0 : i32
    return %c0_i32, %c0_i32_0 : i32, i32
  }
  func.func @transform_9(%arg0: i32) -> (i32, i32) {
    %c0_i32 = arith.constant 0 : i32
    %c0_i32_0 = arith.constant 0 : i32
    %c0_i32_1 = arith.constant 0 : i32
    return %c0_i32, %c0_i32_0 : i32, i32
  }
  func.func @transform_10(%arg0: i32) -> (i32, i32) {
    %c0_i32 = arith.constant 0 : i32
    %c0_i32_0 = arith.constant 0 : i32
    %c0_i32_1 = arith.constant 0 : i32
    return %c0_i32, %c0_i32_0 : i32, i32
  }
  func.func @transform_11(%arg0: i32) -> (i32, i32) {
    %c0_i32 = arith.constant 0 : i32
    %c0_i32_0 = arith.constant 0 : i32
    %c0_i32_1 = arith.constant 0 : i32
    return %c0_i32, %c0_i32_0 : i32, i32
  }
  func.func @transform_12(%arg0: i32) -> (i32, i32) {
    %c0_i32 = arith.constant 0 : i32
    %c0_i32_0 = arith.constant 0 : i32
    %c0_i32_1 = arith.constant 0 : i32
    return %c0_i32, %c0_i32_0 : i32, i32
  }
  func.func @transform_13(%arg0: i32) -> (i32, i32) {
    %c0_i32 = arith.constant 0 : i32
    %c0_i32_0 = arith.constant 0 : i32
    %c0_i32_1 = arith.constant 0 : i32
    return %c0_i32, %c0_i32_0 : i32, i32
  }
  func.func @transform_14(%arg0: i32) -> (i32, i32) {
    %c0_i32 = arith.constant 0 : i32
    %c0_i32_0 = arith.constant 0 : i32
    %c0_i32_1 = arith.constant 0 : i32
    return %c0_i32, %c0_i32_0 : i32, i32
  }
  func.func @transform_15(%arg0: i32) -> (i32, i32) {
    %c0_i32 = arith.constant 0 : i32
    %c0_i32_0 = arith.constant 0 : i32
    %c0_i32_1 = arith.constant 0 : i32
    return %c0_i32, %c0_i32_0 : i32, i32
  }
  func.func @transform_16(%arg0: i32) -> (i32, i32) {
    %c0_i32 = arith.constant 0 : i32
    %c0_i32_0 = arith.constant 0 : i32
    %c0_i32_1 = arith.constant 0 : i32
    return %c0_i32, %c0_i32_0 : i32, i32
  }
  func.func @transform_17(%arg0: i32) -> (i32, i32) {
    %c0_i32 = arith.constant 0 : i32
    %c0_i32_0 = arith.constant 0 : i32
    %c0_i32_1 = arith.constant 0 : i32
    return %c0_i32, %c0_i32_0 : i32, i32
  }
  func.func @transform_18(%arg0: i32) -> (i32, i32) {
    %c0_i32 = arith.constant 0 : i32
    %c0_i32_0 = arith.constant 0 : i32
    %c0_i32_1 = arith.constant 0 : i32
    return %c0_i32, %c0_i32_0 : i32, i32
  }
  func.func @transform_19(%arg0: i32) -> (i32, i32, i32) {
    %c0_i32 = arith.constant 0 : i32
    %c0_i32_0 = arith.constant 0 : i32
    %c0_i32_1 = arith.constant 0 : i32
    return %arg0, %c0_i32, %c0_i32_0 : i32, i32, i32
  }
}

</mosaic_0001>

<llo_original>
// kernel: tpu_custom_call.1
$region0: #{tpu_custom_call.1}
  #allocation0 [shape = 'u32[]', space=smem, size = 0x4, offset = 0x4, fixed_abs, tag = 'smem constant byte address 0x4 - core index']
  #allocation1 [shape = 'u32[144,128]{1,0:T(1,128)}', space=vmem, size = 0x12000, scoped, tag = 'internal scratch']
  %s0 = inlined_call_operand.hbm [shape: f32[2,8,32], index: 0, kind: input, shape index: {}]
  %s1 = inlined_call_operand.hbm [shape: f32[2,8,32], index: 1, kind: input, shape index: {}]
  %s2 = inlined_call_operand.hbm [shape: f32[2,8,8], index: 2, kind: input, shape index: {}]
  %s3 = inlined_call_operand.hbm [shape: f32[2,8,8], index: 3, kind: input, shape index: {}]
  %s4 = inlined_call_operand.vmem [shape: f32[1,32], index: 4, kind: input, shape index: {}]
  %s5 = inlined_call_operand.vmem [shape: f32[1,32], index: 5, kind: input, shape index: {}]
  %s6 = inlined_call_operand.vmem [shape: f32[32,96], index: 6, kind: input, shape index: {}]
  %s7 = inlined_call_operand.vmem [shape: f32[32,32], index: 7, kind: input, shape index: {}]
  %s8 = inlined_call_operand.vmem [shape: f32[1,32], index: 8, kind: input, shape index: {}]
  %s9 = inlined_call_operand.vmem [shape: f32[1,32], index: 9, kind: input, shape index: {}]
  %s10 = inlined_call_operand.vmem [shape: f32[32,32], index: 10, kind: input, shape index: {}]
  %s11 = inlined_call_operand.hbm [shape: f32[32,64], index: 11, kind: input, shape index: {}]
  %s12 = inlined_call_operand.hbm [shape: f32[32,32], index: 12, kind: input, shape index: {}]
  %s13 = inlined_call_operand.vmem [shape: f32[1,32], index: 13, kind: input, shape index: {}]
  %s14 = inlined_call_operand.vmem [shape: f32[1,32], index: 14, kind: input, shape index: {}]
  %s15 = inlined_call_operand.hbm [shape: f32[32,64], index: 15, kind: input, shape index: {}]
  %s16 = inlined_call_operand.vmem [shape: f32[1,64], index: 16, kind: input, shape index: {}]
  %s17 = inlined_call_operand.vmem [shape: f32[64,32], index: 17, kind: input, shape index: {}]
  %s18 = inlined_call_operand.vmem [shape: f32[1,32], index: 18, kind: input, shape index: {}]
  %s19 = inlined_call_operand.hbm [shape: f32[2,8,32], index: 19, kind: output, shape index: {}]
  %s20 = sld [smem:[#allocation0]]
  $region137: #{tpu_custom_call.1} parent=0
    _
  %s22 = ssub.s32 1, %s20
  %s23 = scalar_select 0, %s22, %s20
  $region1: #{tpu_custom_call.1} parent=0
    #allocation2 [shape = 'u8[8192]{0}', space=vmem, size = 0x2000, scoped, tag = 'input window, operand 0']
    #allocation3 [shape = 's32[2]{0}', space=sflag, size = 0x8, scoped, tag = 'scoped memory for tpu_custom_call.1']
    #allocation4 [shape = 's32[2]{0}', space=sflag, size = 0x8, scoped, tag = 'scoped memory for tpu_custom_call.1']
    #allocation5 [shape = 'u8[8192]{0}', space=vmem, size = 0x2000, scoped, tag = 'input window, operand 1']
    #allocation6 [shape = 's32[2]{0}', space=sflag, size = 0x8, scoped, tag = 'scoped memory for tpu_custom_call.1']
    #allocation7 [shape = 'u8[8192]{0}', space=vmem, size = 0x2000, scoped, tag = 'input window, operand 2']
    #allocation8 [shape = 'u8[8192]{0}', space=vmem, size = 0x2000, scoped, tag = 'input window, operand 3']
    #allocation9 [shape = 's32[2]{0}', space=sflag, size = 0x8, scoped, tag = 'scoped memory for tpu_custom_call.1']
    #allocation10 [shape = 'u8[16384]{0}', space=vmem, size = 0x4000, scoped, tag = 'input window, operand 11, single buffered']
    #allocation11 [shape = 'u8[16384]{0}', space=vmem, size = 0x4000, scoped, tag = 'input window, operand 12, single buffered']
    #allocation12 [shape = 's32[1]{0}', space=sflag, size = 0x4, scoped, tag = 'scoped memory for tpu_custom_call.1']
    #allocation13 [shape = 'u8[16384]{0}', space=vmem, size = 0x4000, scoped, tag = 'input window, operand 15, single buffered']
    #allocation14 [shape = 'u8[8192]{0}', space=vmem, size = 0x2000, scoped, tag = 'output window, operand 0']
    %24 = vsyncpa [#allocation3], 0
    %s25 = scalar_lea.sflag [#allocation3], 1
    %26 = vsyncpa %s25, 0
    %27 = vsyncpa [#allocation6], 0
    %s28 = scalar_lea.sflag [#allocation6], 1
    %29 = vsyncpa %s28, 0
    %30 = vsyncpa [#allocation9], 0
    %s31 = scalar_lea.sflag [#allocation9], 1
    %32 = vsyncpa %s31, 0
    %33 = vsyncpa [#allocation12], 0
    %34 = vsyncpa [#allocation4], 0
    %s35 = scalar_lea.sflag [#allocation4], 1
    %36 = vsyncpa %s35, 0
    loop: start=0, step=1, limit=4
    $region2: #{tpu_custom_call.1} parent=1 // loop_pre_header
      _
    $region3: #{tpu_custom_call.1} parent=1 // loop_header
      %s38 = sphi 0, %s42
      %p39 = scmp.ge.s32.totalorder %s38, 4
      %s48 = sphi 0, %s50
      %s51 = sphi 0, %s48
      %s52 = sphi 0, %s51
      %s68 = sphi 0, %s52
      %s74 = sphi 0, %s76
      %s77 = sphi 0, %s74
      %s78 = sphi 0, %s77
      %s94 = sphi 0, %s78
      %s100 = sphi 0, %s102
      %s103 = sphi 0, %s100
      %s104 = sphi 0, %s103
      %s120 = sphi 0, %s104
      %s126 = sphi 0, %s128
      %s129 = sphi 0, %s126
      %s130 = sphi 0, %s129
      %s146 = sphi 0, %s130
      %s150 = sphi 0, %s150
      %s152 = sphi 0, %s150
      %s153 = sphi 0, %s152
      %s167 = sphi 0, %s153
      %s171 = sphi 0, %s171
      %s173 = sphi 0, %s171
      %s174 = sphi 0, %s173
      %s188 = sphi 0, %s174
      %s192 = sphi 0, %s192
      %s194 = sphi 0, %s192
      %s195 = sphi 0, %s194
      %s209 = sphi 0, %s195
      %s213 = sphi 0, %s213
      %s215 = sphi 0, %s213
      %s216 = sphi 0, %s215
      %s230 = sphi 0, %s216
      %s234 = sphi 0, %s234
      %s236 = sphi 0, %s234
      %s237 = sphi 0, %s236
      %s251 = sphi 0, %s237
      %s255 = sphi 0, %s255
      %s257 = sphi 0, %s255
      %s258 = sphi 0, %s257
      %s272 = sphi 0, %s258
      %s276 = sphi 0, %s276
      %s278 = sphi 0, %s276
      %s279 = sphi 0, %s278
      %s293 = sphi 0, %s279
      %s297 = sphi 0, %s297
      %s299 = sphi 0, %s297
      %s300 = sphi 0, %s299
      %s314 = sphi 0, %s300
      %s318 = sphi 0, %s318
      %s320 = sphi 0, %s318
      %s321 = sphi 0, %s320
      %s335 = sphi 0, %s321
      %s339 = sphi 0, %s339
      %s341 = sphi 0, %s339
      %s342 = sphi 0, %s341
      %s356 = sphi 0, %s342
      %s360 = sphi 0, %s360
      %s362 = sphi 0, %s360
      %s363 = sphi 0, %s362
      %s377 = sphi 0, %s363
      %s381 = sphi 0, %s381
      %s383 = sphi 0, %s381
      %s384 = sphi 0, %s383
      %s398 = sphi 0, %s384
      %s402 = sphi 0, %s402
      %s404 = sphi 0, %s402
      %s405 = sphi 0, %s404
      %s419 = sphi 0, %s405
      %s423 = sphi 0, %s423
      %s425 = sphi 0, %s423
      %s426 = sphi 0, %s425
      %s440 = sphi 0, %s426
      %s444 = sphi 0, %s444
      %s446 = sphi 0, %s444
      %s447 = sphi 0, %s446
      %s461 = sphi 0, %s447
      %s467 = sphi 0, %s469
      %s470 = sphi 0, %s467
      %s471 = sphi 0, %s470
      %s487 = sphi 0, %s471
    $region4: #{tpu_custom_call.1} parent=1 // loop_header_branch
      %41 = sbr.rel (%p39) target = $region8
    $region5: #{tpu_custom_call.1} parent=1 // loop_body
      %s43 = ssub.s32 %s38, 1
      %s44 = ssub.s32 %s38, 2
      %s45 = sadd.s32 %s38, 1
      %s46 = ssub.s32 %s38, %s45
      %p47 = scmp.eq.s32.totalorder %s46, 0
      %s49 = sadd.s32 %s48, 1
      %s50 = scalar_select %p47, %s48, %s49
      %p53 = pneg %p47
      %p54 = scmp.eq.s32.totalorder %s38, 1
      %p55 = por %p53, %p54
      %p56 = scmp.ne.s32.totalorder %s48, %s51
      %p57 = scmp.eq.s32.totalorder %s38, 0
      %p58 = por %p56, %p57
      %p59 = scmp.ne.s32.totalorder %s48, %s51
      %p60 = scmp.eq.s32.totalorder %s43, 1
      %p61 = por %p59, %p60
      %p62 = scmp.ne.s32.totalorder %s51, %s52
      %p63 = scmp.eq.s32.totalorder %s43, 0
      %p64 = por %p62, %p63
      %p65 = scmp.ne.s32.totalorder %s51, %s52
      %p66 = scmp.eq.s32.totalorder %s44, 1
      %p67 = por %p65, %p66
      %p69 = scmp.ne.s32.totalorder %s52, %s68
      %p70 = scmp.eq.s32.totalorder %s44, 0
      %p71 = por %p69, %p70
      %s72 = ssub.s32 %s38, %s45
      %p73 = scmp.eq.s32.totalorder %s72, 0
      %s75 = sadd.s32 %s74, 1
      %s76 = scalar_select %p73, %s74, %s75
      %p79 = pneg %p73
      %p80 = scmp.eq.s32.totalorder %s38, 1
      %p81 = por %p79, %p80
      %p82 = scmp.ne.s32.totalorder %s74, %s77
      %p83 = scmp.eq.s32.totalorder %s38, 0
      %p84 = por %p82, %p83
      %p85 = scmp.ne.s32.totalorder %s74, %s77
      %p86 = scmp.eq.s32.totalorder %s43, 1
      %p87 = por %p85, %p86
      %p88 = scmp.ne.s32.totalorder %s77, %s78
      %p89 = scmp.eq.s32.totalorder %s43, 0
      %p90 = por %p88, %p89
      %p91 = scmp.ne.s32.totalorder %s77, %s78
      %p92 = scmp.eq.s32.totalorder %s44, 1
      %p93 = por %p91, %p92
      %p95 = scmp.ne.s32.totalorder %s78, %s94
      %p96 = scmp.eq.s32.totalorder %s44, 0
      %p97 = por %p95, %p96
      %s98 = ssub.s32 %s38, %s45
      %p99 = scmp.eq.s32.totalorder %s98, 0
      %s101 = sadd.s32 %s100, 1
      %s102 = scalar_select %p99, %s100, %s101
      %p105 = pneg %p99
      %p106 = scmp.eq.s32.totalorder %s38, 1
      %p107 = por %p105, %p106
      %p108 = scmp.ne.s32.totalorder %s100, %s103
      %p109 = scmp.eq.s32.totalorder %s38, 0
      %p110 = por %p108, %p109
      %p111 = scmp.ne.s32.totalorder %s100, %s103
      %p112 = scmp.eq.s32.totalorder %s43, 1
      %p113 = por %p111, %p112
      %p114 = scmp.ne.s32.totalorder %s103, %s104
      %p115 = scmp.eq.s32.totalorder %s43, 0
      %p116 = por %p114, %p115
      %p117 = scmp.ne.s32.totalorder %s103, %s104
      %p118 = scmp.eq.s32.totalorder %s44, 1
      %p119 = por %p117, %p118
      %p121 = scmp.ne.s32.totalorder %s104, %s120
      %p122 = scmp.eq.s32.totalorder %s44, 0
      %p123 = por %p121, %p122
      %s124 = ssub.s32 %s38, %s45
      %p125 = scmp.eq.s32.totalorder %s124, 0
      %s127 = sadd.s32 %s126, 1
      %s128 = scalar_select %p125, %s126, %s127
      %p131 = pneg %p125
      %p132 = scmp.eq.s32.totalorder %s38, 1
      %p133 = por %p131, %p132
      %p134 = scmp.ne.s32.totalorder %s126, %s129
      %p135 = scmp.eq.s32.totalorder %s38, 0
      %p136 = por %p134, %p135
      %p137 = scmp.ne.s32.totalorder %s126, %s129
      %p138 = scmp.eq.s32.totalorder %s43, 1
      %p139 = por %p137, %p138
      %p140 = scmp.ne.s32.totalorder %s129, %s130
      %p141 = scmp.eq.s32.totalorder %s43, 0
      %p142 = por %p140, %p141
      %p143 = scmp.ne.s32.totalorder %s129, %s130
      %p144 = scmp.eq.s32.totalorder %s44, 1
      %p145 = por %p143, %p144
      %p147 = scmp.ne.s32.totalorder %s130, %s146
      %p148 = scmp.eq.s32.totalorder %s44, 0
      %p149 = por %p147, %p148
      %s151 = sadd.s32 %s150, 1
      %p154 = scmp.eq.s32.totalorder %s38, 1
      %p155 = scmp.ne.s32.totalorder %s150, %s152
      %p156 = scmp.eq.s32.totalorder %s38, 0
      %p157 = por %p155, %p156
      %p158 = scmp.ne.s32.totalorder %s150, %s152
      %p159 = scmp.eq.s32.totalorder %s43, 1
      %p160 = por %p158, %p159
      %p161 = scmp.ne.s32.totalorder %s152, %s153
      %p162 = scmp.eq.s32.totalorder %s43, 0
      %p163 = por %p161, %p162
      %p164 = scmp.ne.s32.totalorder %s152, %s153
      %p165 = scmp.eq.s32.totalorder %s44, 1
      %p166 = por %p164, %p165
      %p168 = scmp.ne.s32.totalorder %s153, %s167
      %p169 = scmp.eq.s32.totalorder %s44, 0
      %p170 = por %p168, %p169
      %s172 = sadd.s32 %s171, 1
      %p175 = scmp.eq.s32.totalorder %s38, 1
      %p176 = scmp.ne.s32.totalorder %s171, %s173
      %p177 = scmp.eq.s32.totalorder %s38, 0
      %p178 = por %p176, %p177
      %p179 = scmp.ne.s32.totalorder %s171, %s173
      %p180 = scmp.eq.s32.totalorder %s43, 1
      %p181 = por %p179, %p180
      %p182 = scmp.ne.s32.totalorder %s173, %s174
      %p183 = scmp.eq.s32.totalorder %s43, 0
      %p184 = por %p182, %p183
      %p185 = scmp.ne.s32.totalorder %s173, %s174
      %p186 = scmp.eq.s32.totalorder %s44, 1
      %p187 = por %p185, %p186
      %p189 = scmp.ne.s32.totalorder %s174, %s188
      %p190 = scmp.eq.s32.totalorder %s44, 0
      %p191 = por %p189, %p190
      %s193 = sadd.s32 %s192, 1
      %p196 = scmp.eq.s32.totalorder %s38, 1
      %p197 = scmp.ne.s32.totalorder %s192, %s194
      %p198 = scmp.eq.s32.totalorder %s38, 0
      %p199 = por %p197, %p198
      %p200 = scmp.ne.s32.totalorder %s192, %s194
      %p201 = scmp.eq.s32.totalorder %s43, 1
      %p202 = por %p200, %p201
      %p203 = scmp.ne.s32.totalorder %s194, %s195
      %p204 = scmp.eq.s32.totalorder %s43, 0
      %p205 = por %p203, %p204
      %p206 = scmp.ne.s32.totalorder %s194, %s195
      %p207 = scmp.eq.s32.totalorder %s44, 1
      %p208 = por %p206, %p207
      %p210 = scmp.ne.s32.totalorder %s195, %s209
      %p211 = scmp.eq.s32.totalorder %s44, 0
      %p212 = por %p210, %p211
      %s214 = sadd.s32 %s213, 1
      %p217 = scmp.eq.s32.totalorder %s38, 1
      %p218 = scmp.ne.s32.totalorder %s213, %s215
      %p219 = scmp.eq.s32.totalorder %s38, 0
      %p220 = por %p218, %p219
      %p221 = scmp.ne.s32.totalorder %s213, %s215
      %p222 = scmp.eq.s32.totalorder %s43, 1
      %p223 = por %p221, %p222
      %p224 = scmp.ne.s32.totalorder %s215, %s216
      %p225 = scmp.eq.s32.totalorder %s43, 0
      %p226 = por %p224, %p225
      %p227 = scmp.ne.s32.totalorder %s215, %s216
      %p228 = scmp.eq.s32.totalorder %s44, 1
      %p229 = por %p227, %p228
      %p231 = scmp.ne.s32.totalorder %s216, %s230
      %p232 = scmp.eq.s32.totalorder %s44, 0
      %p233 = por %p231, %p232
      %s235 = sadd.s32 %s234, 1
      %p238 = scmp.eq.s32.totalorder %s38, 1
      %p239 = scmp.ne.s32.totalorder %s234, %s236
      %p240 = scmp.eq.s32.totalorder %s38, 0
      %p241 = por %p239, %p240
      %p242 = scmp.ne.s32.totalorder %s234, %s236
      %p243 = scmp.eq.s32.totalorder %s43, 1
      %p244 = por %p242, %p243
      %p245 = scmp.ne.s32.totalorder %s236, %s237
      %p246 = scmp.eq.s32.totalorder %s43, 0
      %p247 = por %p245, %p246
      %p248 = scmp.ne.s32.totalorder %s236, %s237
      %p249 = scmp.eq.s32.totalorder %s44, 1
      %p250 = por %p248, %p249
      %p252 = scmp.ne.s32.totalorder %s237, %s251
      %p253 = scmp.eq.s32.totalorder %s44, 0
      %p254 = por %p252, %p253
      %s256 = sadd.s32 %s255, 1
      %p259 = scmp.eq.s32.totalorder %s38, 1
      %p260 = scmp.ne.s32.totalorder %s255, %s257
      %p261 = scmp.eq.s32.totalorder %s38, 0
      %p262 = por %p260, %p261
      %p263 = scmp.ne.s32.totalorder %s255, %s257
      %p264 = scmp.eq.s32.totalorder %s43, 1
      %p265 = por %p263, %p264
      %p266 = scmp.ne.s32.totalorder %s257, %s258
      %p267 = scmp.eq.s32.totalorder %s43, 0
      %p268 = por %p266, %p267
      %p269 = scmp.ne.s32.totalorder %s257, %s258
      %p270 = scmp.eq.s32.totalorder %s44, 1
      %p271 = por %p269, %p270
      %p273 = scmp.ne.s32.totalorder %s258, %s272
      %p274 = scmp.eq.s32.totalorder %s44, 0
      %p275 = por %p273, %p274
      %s277 = sadd.s32 %s276, 1
      %p280 = scmp.eq.s32.totalorder %s38, 1
      %p281 = scmp.ne.s32.totalorder %s276, %s278
      %p282 = scmp.eq.s32.totalorder %s38, 0
      %p283 = por %p281, %p282
      %p284 = scmp.ne.s32.totalorder %s276, %s278
      %p285 = scmp.eq.s32.totalorder %s43, 1
      %p286 = por %p284, %p285
      %p287 = scmp.ne.s32.totalorder %s278, %s279
      %p288 = scmp.eq.s32.totalorder %s43, 0
      %p289 = por %p287, %p288
      %p290 = scmp.ne.s32.totalorder %s278, %s279
      %p291 = scmp.eq.s32.totalorder %s44, 1
      %p292 = por %p290, %p291
      %p294 = scmp.ne.s32.totalorder %s279, %s293
      %p295 = scmp.eq.s32.totalorder %s44, 0
      %p296 = por %p294, %p295
      %s298 = sadd.s32 %s297, 1
      %p301 = scmp.eq.s32.totalorder %s38, 1
      %p302 = scmp.ne.s32.totalorder %s297, %s299
      %p303 = scmp.eq.s32.totalorder %s38, 0
      %p304 = por %p302, %p303
      %p305 = scmp.ne.s32.totalorder %s297, %s299
      %p306 = scmp.eq.s32.totalorder %s43, 1
      %p307 = por %p305, %p306
      %p308 = scmp.ne.s32.totalorder %s299, %s300
      %p309 = scmp.eq.s32.totalorder %s43, 0
      %p310 = por %p308, %p309
      %p311 = scmp.ne.s32.totalorder %s299, %s300
      %p312 = scmp.eq.s32.totalorder %s44, 1
      %p313 = por %p311, %p312
      %p315 = scmp.ne.s32.totalorder %s300, %s314
      %p316 = scmp.eq.s32.totalorder %s44, 0
      %p317 = por %p315, %p316
      %s319 = sadd.s32 %s318, 1
      %p322 = scmp.eq.s32.totalorder %s38, 1
      %p323 = scmp.ne.s32.totalorder %s318, %s320
      %p324 = scmp.eq.s32.totalorder %s38, 0
      %p325 = por %p323, %p324
      %p326 = scmp.ne.s32.totalorder %s318, %s320
      %p327 = scmp.eq.s32.totalorder %s43, 1
      %p328 = por %p326, %p327
      %p329 = scmp.ne.s32.totalorder %s320, %s321
      %p330 = scmp.eq.s32.totalorder %s43, 0
      %p331 = por %p329, %p330
      %p332 = scmp.ne.s32.totalorder %s320, %s321
      %p333 = scmp.eq.s32.totalorder %s44, 1
      %p334 = por %p332, %p333
      %p336 = scmp.ne.s32.totalorder %s321, %s335
      %p337 = scmp.eq.s32.totalorder %s44, 0
      %p338 = por %p336, %p337
      %s340 = sadd.s32 %s339, 1
      %p343 = scmp.eq.s32.totalorder %s38, 1
      %p344 = scmp.ne.s32.totalorder %s339, %s341
      %p345 = scmp.eq.s32.totalorder %s38, 0
      %p346 = por %p344, %p345
      %p347 = scmp.ne.s32.totalorder %s339, %s341
      %p348 = scmp.eq.s32.totalorder %s43, 1
      %p349 = por %p347, %p348
      %p350 = scmp.ne.s32.totalorder %s341, %s342
      %p351 = scmp.eq.s32.totalorder %s43, 0
      %p352 = por %p350, %p351
      %p353 = scmp.ne.s32.totalorder %s341, %s342
      %p354 = scmp.eq.s32.totalorder %s44, 1
      %p355 = por %p353, %p354
      %p357 = scmp.ne.s32.totalorder %s342, %s356
      %p358 = scmp.eq.s32.totalorder %s44, 0
      %p359 = por %p357, %p358
      %s361 = sadd.s32 %s360, 1
      %p364 = scmp.eq.s32.totalorder %s38, 1
      %p365 = scmp.ne.s32.totalorder %s360, %s362
      %p366 = scmp.eq.s32.totalorder %s38, 0
      %p367 = por %p365, %p366
      %p368 = scmp.ne.s32.totalorder %s360, %s362
      %p369 = scmp.eq.s32.totalorder %s43, 1
      %p370 = por %p368, %p369
      %p371 = scmp.ne.s32.totalorder %s362, %s363
      %p372 = scmp.eq.s32.totalorder %s43, 0
      %p373 = por %p371, %p372
      %p374 = scmp.ne.s32.totalorder %s362, %s363
      %p375 = scmp.eq.s32.totalorder %s44, 1
      %p376 = por %p374, %p375
      %p378 = scmp.ne.s32.totalorder %s363, %s377
      %p379 = scmp.eq.s32.totalorder %s44, 0
      %p380 = por %p378, %p379
      %s382 = sadd.s32 %s381, 1
      %p385 = scmp.eq.s32.totalorder %s38, 1
      %p386 = scmp.ne.s32.totalorder %s381, %s383
      %p387 = scmp.eq.s32.totalorder %s38, 0
      %p388 = por %p386, %p387
      %p389 = scmp.ne.s32.totalorder %s381, %s383
      %p390 = scmp.eq.s32.totalorder %s43, 1
      %p391 = por %p389, %p390
      %p392 = scmp.ne.s32.totalorder %s383, %s384
      %p393 = scmp.eq.s32.totalorder %s43, 0
      %p394 = por %p392, %p393
      %p395 = scmp.ne.s32.totalorder %s383, %s384
      %p396 = scmp.eq.s32.totalorder %s44, 1
      %p397 = por %p395, %p396
      %p399 = scmp.ne.s32.totalorder %s384, %s398
      %p400 = scmp.eq.s32.totalorder %s44, 0
      %p401 = por %p399, %p400
      %s403 = sadd.s32 %s402, 1
      %p406 = scmp.eq.s32.totalorder %s38, 1
      %p407 = scmp.ne.s32.totalorder %s402, %s404
      %p408 = scmp.eq.s32.totalorder %s38, 0
      %p409 = por %p407, %p408
      %p410 = scmp.ne.s32.totalorder %s402, %s404
      %p411 = scmp.eq.s32.totalorder %s43, 1
      %p412 = por %p410, %p411
      %p413 = scmp.ne.s32.totalorder %s404, %s405
      %p414 = scmp.eq.s32.totalorder %s43, 0
      %p415 = por %p413, %p414
      %p416 = scmp.ne.s32.totalorder %s404, %s405
      %p417 = scmp.eq.s32.totalorder %s44, 1
      %p418 = por %p416, %p417
      %p420 = scmp.ne.s32.totalorder %s405, %s419
      %p421 = scmp.eq.s32.totalorder %s44, 0
      %p422 = por %p420, %p421
      %s424 = sadd.s32 %s423, 1
      %p427 = scmp.eq.s32.totalorder %s38, 1
      %p428 = scmp.ne.s32.totalorder %s423, %s425
      %p429 = scmp.eq.s32.totalorder %s38, 0
      %p430 = por %p428, %p429
      %p431 = scmp.ne.s32.totalorder %s423, %s425
      %p432 = scmp.eq.s32.totalorder %s43, 1
      %p433 = por %p431, %p432
      %p434 = scmp.ne.s32.totalorder %s425, %s426
      %p435 = scmp.eq.s32.totalorder %s43, 0
      %p436 = por %p434, %p435
      %p437 = scmp.ne.s32.totalorder %s425, %s426
      %p438 = scmp.eq.s32.totalorder %s44, 1
      %p439 = por %p437, %p438
      %p441 = scmp.ne.s32.totalorder %s426, %s440
      %p442 = scmp.eq.s32.totalorder %s44, 0
      %p443 = por %p441, %p442
      %s445 = sadd.s32 %s444, 1
      %p448 = scmp.eq.s32.totalorder %s38, 1
      %p449 = scmp.ne.s32.totalorder %s444, %s446
      %p450 = scmp.eq.s32.totalorder %s38, 0
      %p451 = por %p449, %p450
      %p452 = scmp.ne.s32.totalorder %s444, %s446
      %p453 = scmp.eq.s32.totalorder %s43, 1
      %p454 = por %p452, %p453
      %p455 = scmp.ne.s32.totalorder %s446, %s447
      %p456 = scmp.eq.s32.totalorder %s43, 0
      %p457 = por %p455, %p456
      %p458 = scmp.ne.s32.totalorder %s446, %s447
      %p459 = scmp.eq.s32.totalorder %s44, 1
      %p460 = por %p458, %p459
      %p462 = scmp.ne.s32.totalorder %s447, %s461
      %p463 = scmp.eq.s32.totalorder %s44, 0
      %p464 = por %p462, %p463
      %s465 = ssub.s32 %s38, %s45
      %p466 = scmp.eq.s32.totalorder %s465, 0
      %s468 = sadd.s32 %s467, 1
      %s469 = scalar_select %p466, %s467, %s468
      %p472 = pneg %p466
      %p473 = scmp.eq.s32.totalorder %s38, 1
      %p474 = por %p472, %p473
      %p475 = scmp.ne.s32.totalorder %s467, %s470
      %p476 = scmp.eq.s32.totalorder %s38, 0
      %p477 = por %p475, %p476
      %p478 = scmp.ne.s32.totalorder %s467, %s470
      %p479 = scmp.eq.s32.totalorder %s43, 1
      %p480 = por %p478, %p479
      %p481 = scmp.ne.s32.totalorder %s470, %s471
      %p482 = scmp.eq.s32.totalorder %s43, 0
      %p483 = por %p481, %p482
      %p484 = scmp.ne.s32.totalorder %s470, %s471
      %p485 = scmp.eq.s32.totalorder %s44, 1
      %p486 = por %p484, %p485
      %p488 = scmp.ne.s32.totalorder %s471, %s487
      %p489 = scmp.eq.s32.totalorder %s44, 0
      %p490 = por %p488, %p489
      %p491 = scmp.le.s32.totalorder 1, %s38
      %p492 = scmp.lt.s32.totalorder %s38, 3
      %p493 = pnand %p491, %p492
      %p494 = pneg %p493
      // Predicated region
      $region9: #{tpu_custom_call.1} parent=5 // pred_check
        _
      $region10: #{tpu_custom_call.1} parent=5 // pred_check_branch
        %496 = sbr.rel (%p493) target = $region12
      $region11: #{tpu_custom_call.1} parent=5 // pred_region
        %s497 = ssub.s32 %s38, 1
        // Predicated region
        $region13: #{tpu_custom_call.1} parent=11 // pred_check
          %p498 = pneg %p163
        $region14: #{tpu_custom_call.1} parent=11 // pred_check_branch
          %500 = sbr.rel (%p498) target = $region16
        $region15: #{tpu_custom_call.1} parent=11 // pred_region
          _
        $region16: #{tpu_custom_call.1} parent=11 // pred_fallthru
          _
        // Predicated region
        $region17: #{tpu_custom_call.1} parent=11 // pred_check
          %p501 = pneg %p184
        $region18: #{tpu_custom_call.1} parent=11 // pred_check_branch
          %503 = sbr.rel (%p501) target = $region20
        $region19: #{tpu_custom_call.1} parent=11 // pred_region
          _
        $region20: #{tpu_custom_call.1} parent=11 // pred_fallthru
          _
        // Predicated region
        $region21: #{tpu_custom_call.1} parent=11 // pred_check
          %p504 = pneg %p205
        $region22: #{tpu_custom_call.1} parent=11 // pred_check_branch
          %506 = sbr.rel (%p504) target = $region24
        $region23: #{tpu_custom_call.1} parent=11 // pred_region
          _
        $region24: #{tpu_custom_call.1} parent=11 // pred_fallthru
          _
        // Predicated region
        $region25: #{tpu_custom_call.1} parent=11 // pred_check
          %p507 = pneg %p226
        $region26: #{tpu_custom_call.1} parent=11 // pred_check_branch
          %509 = sbr.rel (%p507) target = $region28
        $region27: #{tpu_custom_call.1} parent=11 // pred_region
          _
        $region28: #{tpu_custom_call.1} parent=11 // pred_fallthru
          _
        // Predicated region
        $region29: #{tpu_custom_call.1} parent=11 // pred_check
          %p510 = pneg %p247
        $region30: #{tpu_custom_call.1} parent=11 // pred_check_branch
          %512 = sbr.rel (%p510) target = $region32
        $region31: #{tpu_custom_call.1} parent=11 // pred_region
          _
        $region32: #{tpu_custom_call.1} parent=11 // pred_fallthru
          _
        // Predicated region
        $region33: #{tpu_custom_call.1} parent=11 // pred_check
          %p513 = pneg %p268
        $region34: #{tpu_custom_call.1} parent=11 // pred_check_branch
          %515 = sbr.rel (%p513) target = $region36
        $region35: #{tpu_custom_call.1} parent=11 // pred_region
          _
        $region36: #{tpu_custom_call.1} parent=11 // pred_fallthru
          _
        // Predicated region
        $region37: #{tpu_custom_call.1} parent=11 // pred_check
          %p516 = pneg %p289
        $region38: #{tpu_custom_call.1} parent=11 // pred_check_branch
          %518 = sbr.rel (%p516) target = $region40
        $region39: #{tpu_custom_call.1} parent=11 // pred_region
          _
        $region40: #{tpu_custom_call.1} parent=11 // pred_fallthru
          _
        // Predicated region
        $region41: #{tpu_custom_call.1} parent=11 // pred_check
          %p519 = pneg %p310
        $region42: #{tpu_custom_call.1} parent=11 // pred_check_branch
          %521 = sbr.rel (%p519) target = $region44
        $region43: #{tpu_custom_call.1} parent=11 // pred_region
          %s523 = ssub.s32 512, 512
          %524 = vsyncadd [#allocation9], %s523
          %s525 = sshll.u32 [#allocation10], 4
          %s526 = int_to_ptr.vmem [resolvable:$true] %s525
          %531 = dma.hbm_to_vmem [thread:$0]  %s11, 512, %s526, [#allocation9], 128, 128, 8
        $region44: #{tpu_custom_call.1} parent=11 // pred_fallthru
          _
        // Predicated region
        $region45: #{tpu_custom_call.1} parent=11 // pred_check
          %p532 = pneg %p331
        $region46: #{tpu_custom_call.1} parent=11 // pred_check_branch
          %534 = sbr.rel (%p532) target = $region48
        $region47: #{tpu_custom_call.1} parent=11 // pred_region
          %s536 = ssub.s32 512, 512
          %537 = vsyncadd [#allocation12], %s536
          %s538 = sshll.u32 [#allocation11], 4
          %s539 = int_to_ptr.vmem [resolvable:$true] %s538
          %544 = dma.hbm_to_vmem [thread:$0]  %s12, 512, %s539, [#allocation12], 128, 128, 8
        $region48: #{tpu_custom_call.1} parent=11 // pred_fallthru
          _
        // Predicated region
        $region49: #{tpu_custom_call.1} parent=11 // pred_check
          %p545 = pneg %p352
        $region50: #{tpu_custom_call.1} parent=11 // pred_check_branch
          %547 = sbr.rel (%p545) target = $region52
        $region51: #{tpu_custom_call.1} parent=11 // pred_region
          _
        $region52: #{tpu_custom_call.1} parent=11 // pred_fallthru
          _
        // Predicated region
        $region53: #{tpu_custom_call.1} parent=11 // pred_check
          %p548 = pneg %p373
        $region54: #{tpu_custom_call.1} parent=11 // pred_check_branch
          %550 = sbr.rel (%p548) target = $region56
        $region55: #{tpu_custom_call.1} parent=11 // pred_region
          _
        $region56: #{tpu_custom_call.1} parent=11 // pred_fallthru
          _
        // Predicated region
        $region57: #{tpu_custom_call.1} parent=11 // pred_check
          %p551 = pneg %p394
        $region58: #{tpu_custom_call.1} parent=11 // pred_check_branch
          %553 = sbr.rel (%p551) target = $region60
        $region59: #{tpu_custom_call.1} parent=11 // pred_region
          %s555 = ssub.s32 512, 512
          %556 = vsyncadd [#allocation12], %s555
          %s557 = sshll.u32 [#allocation13], 4
          %s558 = int_to_ptr.vmem [resolvable:$true] %s557
          %563 = dma.hbm_to_vmem [thread:$0]  %s15, 512, %s558, [#allocation12], 128, 128, 8
        $region60: #{tpu_custom_call.1} parent=11 // pred_fallthru
          _
        // Predicated region
        $region61: #{tpu_custom_call.1} parent=11 // pred_check
          %p564 = pneg %p415
        $region62: #{tpu_custom_call.1} parent=11 // pred_check_branch
          %566 = sbr.rel (%p564) target = $region64
        $region63: #{tpu_custom_call.1} parent=11 // pred_region
          _
        $region64: #{tpu_custom_call.1} parent=11 // pred_fallthru
          _
        // Predicated region
        $region65: #{tpu_custom_call.1} parent=11 // pred_check
          %p567 = pneg %p436
        $region66: #{tpu_custom_call.1} parent=11 // pred_check_branch
          %569 = sbr.rel (%p567) target = $region68
        $region67: #{tpu_custom_call.1} parent=11 // pred_region
          _
        $region68: #{tpu_custom_call.1} parent=11 // pred_fallthru
          _
        // Predicated region
        $region69: #{tpu_custom_call.1} parent=11 // pred_check
          %p570 = pneg %p457
        $region70: #{tpu_custom_call.1} parent=11 // pred_check_branch
          %572 = sbr.rel (%p570) target = $region72
        $region71: #{tpu_custom_call.1} parent=11 // pred_region
          _
        $region72: #{tpu_custom_call.1} parent=11 // pred_fallthru
          _
      $region12: #{tpu_custom_call.1} parent=5 // pred_fallthru
        _
      %p573 = scmp.lt.s32.totalorder %s38, 2
      // Predicated region
      $region73: #{tpu_custom_call.1} parent=5 // pred_check
        %p574 = pneg %p573
      $region74: #{tpu_custom_call.1} parent=5 // pred_check_branch
        %576 = sbr.rel (%p574) target = $region76
      $region75: #{tpu_custom_call.1} parent=5 // pred_region
        // Predicated region
        $region77: #{tpu_custom_call.1} parent=75 // pred_check
          %p577 = pneg %p58
        $region78: #{tpu_custom_call.1} parent=75 // pred_check_branch
          %579 = sbr.rel (%p577) target = $region80
        $region79: #{tpu_custom_call.1} parent=75 // pred_region
          %s580 = sand.u32 %s48, 1
          %s581 = scalar_lea.sflag [#allocation3], %s580
          %s582 = sand.u32 %s48, 1
          %s583 = smul.addr %s582, 8
          %s584 = scalar_lea.vmem [#allocation2], %s583
          %s586 = ssub.s32 128, 128
          %587 = vsyncadd %s581, %s586
          %s588 = smul.addr %s38, 128
          %s589 = scalar_lea.hbm %s0, %s588
          %s591 = sshll.u32 %s584, 4
          %s592 = int_to_ptr.vmem [resolvable:$true] %s591
          %594 = dma.hbm_to_vmem [thread:$0]  %s589, 128, %s592, %s581
        $region80: #{tpu_custom_call.1} parent=75 // pred_fallthru
          _
        // Predicated region
        $region81: #{tpu_custom_call.1} parent=75 // pred_check
          %p595 = pneg %p84
        $region82: #{tpu_custom_call.1} parent=75 // pred_check_branch
          %597 = sbr.rel (%p595) target = $region84
        $region83: #{tpu_custom_call.1} parent=75 // pred_region
          %s598 = sand.u32 %s38, 1
          %s599 = scalar_lea.sflag [#allocation6], %s598
          %s600 = sand.u32 %s74, 1
          %s601 = smul.addr %s600, 8
          %s602 = scalar_lea.vmem [#allocation5], %s601
          %s604 = ssub.s32 128, 128
          %605 = vsyncadd %s599, %s604
          %s606 = smul.addr %s38, 128
          %s607 = scalar_lea.hbm %s1, %s606
          %s609 = sshll.u32 %s602, 4
          %s610 = int_to_ptr.vmem [resolvable:$true] %s609
          %612 = dma.hbm_to_vmem [thread:$0]  %s607, 128, %s610, %s599
        $region84: #{tpu_custom_call.1} parent=75 // pred_fallthru
          _
        // Predicated region
        $region85: #{tpu_custom_call.1} parent=75 // pred_check
          %p613 = pneg %p110
        $region86: #{tpu_custom_call.1} parent=75 // pred_check_branch
          %615 = sbr.rel (%p613) target = $region88
        $region87: #{tpu_custom_call.1} parent=75 // pred_region
          %s616 = sand.u32 %s38, 1
          %s617 = scalar_lea.sflag [#allocation6], %s616
          %s618 = sand.u32 %s100, 1
          %s619 = smul.addr %s618, 8
          %s620 = scalar_lea.vmem [#allocation7], %s619
          %s622 = ssub.s32 128, 128
          %623 = vsyncadd %s617, %s622
          %s624 = smul.addr %s38, 128
          %s625 = scalar_lea.hbm %s2, %s624
          %s627 = sshll.u32 %s620, 4
          %s628 = int_to_ptr.vmem [resolvable:$true] %s627
          %630 = dma.hbm_to_vmem [thread:$0]  %s625, 128, %s628, %s617
        $region88: #{tpu_custom_call.1} parent=75 // pred_fallthru
          _
        // Predicated region
        $region89: #{tpu_custom_call.1} parent=75 // pred_check
          %p631 = pneg %p136
        $region90: #{tpu_custom_call.1} parent=75 // pred_check_branch
          %633 = sbr.rel (%p631) target = $region92
        $region91: #{tpu_custom_call.1} parent=75 // pred_region
          %s634 = sand.u32 %s38, 1
          %s635 = scalar_lea.sflag [#allocation9], %s634
          %s636 = sand.u32 %s126, 1
          %s637 = smul.addr %s636, 8
          %s638 = scalar_lea.vmem [#allocation8], %s637
          %s640 = ssub.s32 128, 128
          %641 = vsyncadd %s635, %s640
          %s642 = smul.addr %s38, 128
          %s643 = scalar_lea.hbm %s3, %s642
          %s645 = sshll.u32 %s638, 4
          %s646 = int_to_ptr.vmem [resolvable:$true] %s645
          %648 = dma.hbm_to_vmem [thread:$0]  %s643, 128, %s646, %s635
        $region92: #{tpu_custom_call.1} parent=75 // pred_fallthru
          _
      $region76: #{tpu_custom_call.1} parent=5 // pred_fallthru
        _
      %p649 = scmp.le.s32.totalorder 1, %s38
      %p650 = scmp.lt.s32.totalorder %s38, 3
      %p651 = pnand %p649, %p650
      %p652 = pneg %p651
      // Predicated region
      $region93: #{tpu_custom_call.1} parent=5 // pred_check
        _
      $region94: #{tpu_custom_call.1} parent=5 // pred_check_branch
        %654 = sbr.rel (%p651) target = $region96
      $region95: #{tpu_custom_call.1} parent=5 // pred_region
        %s655 = ssub.s32 %s38, 1
        %s656 = sand.u32 %s51, 1
        %s657 = scalar_lea.sflag [#allocation3], %s656
        %s658 = sand.u32 %s51, 1
        %s659 = smul.addr %s658, 8
        %s660 = scalar_lea.vmem [#allocation2], %s659
        // Predicated region
        $region97: #{tpu_custom_call.1} parent=95 // pred_check
          %p661 = pneg %p64
        $region98: #{tpu_custom_call.1} parent=95 // pred_check_branch
          %663 = sbr.rel (%p661) target = $region100
        $region99: #{tpu_custom_call.1} parent=95 // pred_region
          %664 = dma.done %s657, 128
        $region100: #{tpu_custom_call.1} parent=95 // pred_fallthru
          _
        %s665 = sand.u32 %s43, 1
        %s666 = scalar_lea.sflag [#allocation6], %s665
        %s667 = sand.u32 %s77, 1
        %s668 = smul.addr %s667, 8
        %s669 = scalar_lea.vmem [#allocation5], %s668
        // Predicated region
        $region101: #{tpu_custom_call.1} parent=95 // pred_check
          %p670 = pneg %p90
        $region102: #{tpu_custom_call.1} parent=95 // pred_check_branch
          %672 = sbr.rel (%p670) target = $region104
        $region103: #{tpu_custom_call.1} parent=95 // pred_region
          %673 = dma.done %s666, 128
        $region104: #{tpu_custom_call.1} parent=95 // pred_fallthru
          _
        %s674 = sand.u32 %s43, 1
        %s675 = scalar_lea.sflag [#allocation6], %s674
        %s676 = sand.u32 %s103, 1
        %s677 = smul.addr %s676, 8
        %s678 = scalar_lea.vmem [#allocation7], %s677
        // Predicated region
        $region105: #{tpu_custom_call.1} parent=95 // pred_check
          %p679 = pneg %p116
        $region106: #{tpu_custom_call.1} parent=95 // pred_check_branch
          %681 = sbr.rel (%p679) target = $region108
        $region107: #{tpu_custom_call.1} parent=95 // pred_region
          %682 = dma.done %s675, 128
        $region108: #{tpu_custom_call.1} parent=95 // pred_fallthru
          _
        %s683 = sand.u32 %s43, 1
        %s684 = scalar_lea.sflag [#allocation9], %s683
        %s685 = sand.u32 %s129, 1
        %s686 = smul.addr %s685, 8
        %s687 = scalar_lea.vmem [#allocation8], %s686
        // Predicated region
        $region109: #{tpu_custom_call.1} parent=95 // pred_check
          %p688 = pneg %p142
        $region110: #{tpu_custom_call.1} parent=95 // pred_check_branch
          %690 = sbr.rel (%p688) target = $region112
        $region111: #{tpu_custom_call.1} parent=95 // pred_region
          %691 = dma.done %s684, 128
        $region112: #{tpu_custom_call.1} parent=95 // pred_fallthru
          _
        // Predicated region
        $region113: #{tpu_custom_call.1} parent=95 // pred_check
          %p692 = pneg %p310
        $region114: #{tpu_custom_call.1} parent=95 // pred_check_branch
          %694 = sbr.rel (%p692) target = $region116
        $region115: #{tpu_custom_call.1} parent=95 // pred_region
          %695 = dma.done [#allocation9], 512
        $region116: #{tpu_custom_call.1} parent=95 // pred_fallthru
          _
        // Predicated region
        $region117: #{tpu_custom_call.1} parent=95 // pred_check
          %p696 = pneg %p331
        $region118: #{tpu_custom_call.1} parent=95 // pred_check_branch
          %698 = sbr.rel (%p696) target = $region120
        $region119: #{tpu_custom_call.1} parent=95 // pred_region
          %699 = dma.done [#allocation12], 512
        $region120: #{tpu_custom_call.1} parent=95 // pred_fallthru
          _
        // Predicated region
        $region121: #{tpu_custom_call.1} parent=95 // pred_check
          %p700 = pneg %p394
        $region122: #{tpu_custom_call.1} parent=95 // pred_check_branch
          %702 = sbr.rel (%p700) target = $region124
        $region123: #{tpu_custom_call.1} parent=95 // pred_region
          %703 = dma.done [#allocation12], 512
        $region124: #{tpu_custom_call.1} parent=95 // pred_fallthru
          _
        %s704 = sand.u32 %s51, 1
        %s705 = scalar_lea.sflag [#allocation3], %s704
        %s706 = sand.u32 %s51, 1
        %s707 = smul.addr %s706, 8
        %s708 = scalar_lea.vmem [#allocation2], %s707
        %p709 = pneg %p64
        %p710 = pneg %p61
        %s711 = sand.u32 %s43, 1
        %s712 = scalar_lea.sflag [#allocation6], %s711
        %s713 = sand.u32 %s77, 1
        %s714 = smul.addr %s713, 8
        %s715 = scalar_lea.vmem [#allocation5], %s714
        %p716 = pneg %p90
        %p717 = pneg %p87
        %s718 = sand.u32 %s43, 1
        %s719 = scalar_lea.sflag [#allocation6], %s718
        %s720 = sand.u32 %s103, 1
        %s721 = smul.addr %s720, 8
        %s722 = scalar_lea.vmem [#allocation7], %s721
        %p723 = pneg %p116
        %p724 = pneg %p113
        %s725 = sand.u32 %s43, 1
        %s726 = scalar_lea.sflag [#allocation9], %s725
        %s727 = sand.u32 %s129, 1
        %s728 = smul.addr %s727, 8
        %s729 = scalar_lea.vmem [#allocation8], %s728
        %p730 = pneg %p142
        %p731 = pneg %p139
        %p732 = pneg %p163
        %p733 = pneg %p160
        %p734 = pneg %p184
        %p735 = pneg %p181
        %p736 = pneg %p205
        %p737 = pneg %p202
        %p738 = pneg %p226
        %p739 = pneg %p223
        %p740 = pneg %p247
        %p741 = pneg %p244
        %p742 = pneg %p268
        %p743 = pneg %p265
        %p744 = pneg %p289
        %p745 = pneg %p286
        %p746 = pneg %p310
        %p747 = pneg %p307
        %p748 = pneg %p331
        %p749 = pneg %p328
        %p750 = pneg %p352
        %p751 = pneg %p349
        %p752 = pneg %p373
        %p753 = pneg %p370
        %p754 = pneg %p394
        %p755 = pneg %p391
        %p756 = pneg %p415
        %p757 = pneg %p412
        %p758 = pneg %p436
        %p759 = pneg %p433
        %p760 = pneg %p457
        %p761 = pneg %p454
        %p762 = pneg %p483
        %p763 = pneg %p480
        %s764 = sand.u32 %s470, 1
        %s765 = scalar_lea.sflag [#allocation4], %s764
        %s766 = sand.u32 %s470, 1
        %s767 = smul.addr %s766, 8
        %s768 = scalar_lea.vmem [#allocation14], %s767
        %v769 = vld [vmem:[%s660] sm:$0xff]
        %v770 = vld [vmem:[%s669] sm:$0xff]
        %v771 = vld [vmem:[%s4] sm:$0x1]
        %v772 = vld [vmem:[%s5] sm:$0x1]
        %vm773 = vcmask 261120
        %v774 = vsel %vm773, %v769, 0.0
        %775 = vadd.xlane.f32.xlu0 %v774
        %v776 = vpop.xlane.xlu0 %775
        %v777 = vrcp.pop 32.0
        %v778 = vmul.f32 %v776, %v777
        %v779 = vsub.f32 %v769, %v778
        %v780 = vmul.f32 %v779, %v779
        %v781 = vsel %vm773, %v780, 0.0
        %782 = vadd.xlane.f32.xlu0 %v781
        %v783 = vpop.xlane.xlu0 %782
        %v784 = vmul.f32 %v783, %v777
        %v785 = vadd.f32 %v784, 1e-06
        %v786 = vrsqrt.pop %v785
        %v787 = vmul.f32 %v779, %v786
        %v789 = vlaneseq
        %v790 = vshrl.u32 %v789, 7
        %v791 = vsub.s32 0, %v790
        %v792 = vrot.slane %v771, %v791
        %v794 = vmul.f32 %v787, %v792
        %v796 = vlaneseq
        %v797 = vshrl.u32 %v796, 7
        %v798 = vsub.s32 0, %v797
        %v799 = vrot.slane %v772, %v798
        %v801 = vadd.f32 %v794, %v799
        %v802 = vld [vmem:[%s6] sm:$0xff]
        %v803 = vld [vmem:[%s6 + $0x8] sm:$0xff]
        %v804 = vld [vmem:[%s6 + $0x10] sm:$0xff]
        %v805 = vld [vmem:[%s6 + $0x18] sm:$0xff]
        %v807 = vsel %vm773, %v801, 0
        %809 = vmatprep.subr.mxu0 0.0
        %810 = vmatpush1.msra.mxu0 0.0
        %811 = vmatprep.subr.mxu0 0.0
        %812 = vmatpush1.msra.mxu0 0.0
        %813 = vmatprep.subr.mxu0 0.0
        %814 = vmatpush1.msra.mxu0 0.0
        %815 = vmatprep.subr.mxu0 0.0
        %816 = vmatpush1.msra.mxu0 0.0
        %817 = vmatprep.subr.mxu0 0.0
        %818 = vmatpush1.msra.mxu0 0.0
        %819 = vmatprep.subr.mxu0 0.0
        %820 = vmatpush1.msra.mxu0 0.0
        %821 = vmatprep.subr.mxu0 0.0
        %822 = vmatpush1.msra.mxu0 0.0
        %823 = vmatprep.subr.mxu0 0.0
        %824 = vmatpush1.msra.mxu0 0.0
        %825 = vmatprep.subr.mxu0 0.0
        %826 = vmatpush1.msra.mxu0 0.0
        %827 = vmatprep.subr.mxu0 0.0
        %828 = vmatpush1.msra.mxu0 0.0
        %829 = vmatprep.subr.mxu0 0.0
        %830 = vmatpush1.msra.mxu0 0.0
        %831 = vmatprep.subr.mxu0 0.0
        %832 = vmatpush1.msra.mxu0 0.0
        %833 = vmatprep.subr.mxu0 0.0
        %834 = vmatpush1.msra.mxu0 %v805
        %835 = vmatprep.subr.mxu0 0.0
        %836 = vmatpush1.msra.mxu0 %v804
        %837 = vmatprep.subr.mxu0 0.0
        %838 = vmatpush1.msra.mxu0 %v803
        %839 = vmatprep.subr.mxu0 0.0
        %840 = vmatpush1.msra.mxu0 %v802
        %841 = vmatprep.subr.mxu0 0.0
        %842 = vmatpush2.msra.mxu0 0.0
        %843 = vmatprep.subr.mxu0 0.0
        %844 = vmatpush2.msra.mxu0 0.0
        %845 = vmatprep.subr.mxu0 0.0
        %846 = vmatpush2.msra.mxu0 0.0
        %847 = vmatprep.subr.mxu0 0.0
        %848 = vmatpush2.msra.mxu0 0.0
        %849 = vmatprep.subr.mxu0 0.0
        %850 = vmatpush2.msra.mxu0 0.0
        %851 = vmatprep.subr.mxu0 0.0
        %852 = vmatpush2.msra.mxu0 0.0
        %853 = vmatprep.subr.mxu0 0.0
        %854 = vmatpush2.msra.mxu0 0.0
        %855 = vmatprep.subr.mxu0 0.0
        %856 = vmatpush2.msra.mxu0 0.0
        %857 = vmatprep.subr.mxu0 0.0
        %858 = vmatpush2.msra.mxu0 0.0
        %859 = vmatprep.subr.mxu0 0.0
        %860 = vmatpush2.msra.mxu0 0.0
        %861 = vmatprep.subr.mxu0 0.0
        %862 = vmatpush2.msra.mxu0 0.0
        %863 = vmatprep.subr.mxu0 0.0
        %864 = vmatpush2.msra.mxu0 0.0
        %865 = vmatprep.subr.mxu0 0.0
        %866 = vmatpush2.msra.mxu0 0.0
        %867 = vmatprep.subr.mxu0 0.0
        %868 = vmatpush2.msra.mxu0 0.0
        %869 = vmatprep.subr.mxu0 0.0
        %870 = vmatpush2.msra.mxu0 0.0
        %871 = vmatprep.subr.mxu0 0.0
        %872 = vmatpush2.msra.mxu0 0.0
        %873 = vmatprep.mubr.f32.mxu0 0.0
        %874 = vmatmul.mubr.f32.gmra.mxu0 %v807
        %v875 = vpop.f32.mrf.mxu0
        %v876 = vadd.f32 0.0, %v875
        %v877 = vpop.f32.mrf.mxu0
        %878 = vdwg.mxu0
        %v879 = vld [vmem:[%s678] sm:$0xff]
        %881 = vrot.lane.b32.xlu0 %v876, 96
        %v882 = vpop.permute.xlu0 %881
        %vm883 = vcmask 31744
        %v884 = vsel %vm883, %v876, 0
        %v886 = vsel %vm883, %v882, 0
        %888 = vmatprep.subr.mxu0 0.0
        %889 = vmatpush1.xpose.msra.mxu0 0.0
        %890 = vmatprep.subr.mxu0 0.0
        %891 = vmatpush1.xpose.msra.mxu0 0.0
        %892 = vmatprep.subr.mxu0 0.0
        %893 = vmatpush1.xpose.msra.mxu0 0.0
        %894 = vmatprep.subr.mxu0 0.0
        %895 = vmatpush1.xpose.msra.mxu0 0.0
        %896 = vmatprep.subr.mxu0 0.0
        %897 = vmatpush1.xpose.msra.mxu0 0.0
        %898 = vmatprep.subr.mxu0 0.0
        %899 = vmatpush1.xpose.msra.mxu0 0.0
        %900 = vmatprep.subr.mxu0 0.0
        %901 = vmatpush1.xpose.msra.mxu0 0.0
        %902 = vmatprep.subr.mxu0 0.0
        %903 = vmatpush1.xpose.msra.mxu0 0.0
        %904 = vmatprep.subr.mxu0 0.0
        %905 = vmatpush1.xpose.msra.mxu0 0.0
        %906 = vmatprep.subr.mxu0 0.0
        %907 = vmatpush1.xpose.msra.mxu0 0.0
        %908 = vmatprep.subr.mxu0 0.0
        %909 = vmatpush1.xpose.msra.mxu0 0.0
        %910 = vmatprep.subr.mxu0 0.0
        %911 = vmatpush1.xpose.msra.mxu0 0.0
        %912 = vmatprep.subr.mxu0 0.0
        %913 = vmatpush1.xpose.msra.mxu0 0.0
        %914 = vmatprep.subr.mxu0 0.0
        %915 = vmatpush1.xpose.msra.mxu0 0.0
        %916 = vmatprep.subr.mxu0 0.0
        %917 = vmatpush1.xpose.msra.mxu0 0.0
        %918 = vmatprep.subr.mxu0 0.0
        %919 = vmatpush1.xpose.msra.mxu0 %v886
        %920 = vmatprep.subr.mxu0 0.0
        %921 = vmatpush2.xpose.msra.mxu0 0.0
        %922 = vmatprep.subr.mxu0 0.0
        %923 = vmatpush2.xpose.msra.mxu0 0.0
        %924 = vmatprep.subr.mxu0 0.0
        %925 = vmatpush2.xpose.msra.mxu0 0.0
        %926 = vmatprep.subr.mxu0 0.0
        %927 = vmatpush2.xpose.msra.mxu0 0.0
        %928 = vmatprep.subr.mxu0 0.0
        %929 = vmatpush2.xpose.msra.mxu0 0.0
        %930 = vmatprep.subr.mxu0 0.0
        %931 = vmatpush2.xpose.msra.mxu0 0.0
        %932 = vmatprep.subr.mxu0 0.0
        %933 = vmatpush2.xpose.msra.mxu0 0.0
        %934 = vmatprep.subr.mxu0 0.0
        %935 = vmatpush2.xpose.msra.mxu0 0.0
        %936 = vmatprep.subr.mxu0 0.0
        %937 = vmatpush2.xpose.msra.mxu0 0.0
        %938 = vmatprep.subr.mxu0 0.0
        %939 = vmatpush2.xpose.msra.mxu0 0.0
        %940 = vmatprep.subr.mxu0 0.0
        %941 = vmatpush2.xpose.msra.mxu0 0.0
        %942 = vmatprep.subr.mxu0 0.0
        %943 = vmatpush2.xpose.msra.mxu0 0.0
        %944 = vmatprep.subr.mxu0 0.0
        %945 = vmatpush2.xpose.msra.mxu0 0.0
        %946 = vmatprep.subr.mxu0 0.0
        %947 = vmatpush2.xpose.msra.mxu0 0.0
        %948 = vmatprep.subr.mxu0 0.0
        %949 = vmatpush2.xpose.msra.mxu0 0.0
        %950 = vmatprep.subr.mxu0 0.0
        %951 = vmatpush2.xpose.msra.mxu0 0.0
        %952 = vmatprep.mubr.f32.mxu0 0.0
        %953 = vmatmul.mubr.f32.gmra.mxu0 %v884
        %v954 = vpop.f32.mrf.mxu0
        %v955 = vadd.f32 %v879, %v954
        %v956 = vpop.f32.mrf.mxu0
        %957 = vdwg.mxu0
        %vm958 = vcmask 64512
        %v959 = vsel %vm958, %v955, -inf
        %960 = vmax.xlane.f32.xlu0 %v959
        %v961 = vpop.xlane.xlu0 %960
        %v962 = vsub.f32 %v955, %v961
        %v963 = vmul.f32 %v962, 1.442695
        %v964 = vpow.pop %v963
        %v965 = vsel %vm958, %v964, 0.0
        %966 = vadd.xlane.f32.xlu0 %v965
        %v967 = vpop.xlane.xlu0 %966
        %v968 = vrcp.pop %v967
        %v969 = vmul.f32 %v964, %v968
        %970 = vrot.lane.b32.xlu0 %v876, 64
        %v971 = vpop.permute.xlu0 %970
        %v974 = vsel %vm958, %v969, 0
        %976 = vmatprep.subr.mxu0 0.0
        %977 = vmatpush1.msra.mxu0 0.0
        %978 = vmatprep.subr.mxu0 0.0
        %979 = vmatpush1.msra.mxu0 0.0
        %980 = vmatprep.subr.mxu0 0.0
        %981 = vmatpush1.msra.mxu0 0.0
        %982 = vmatprep.subr.mxu0 0.0
        %983 = vmatpush1.msra.mxu0 0.0
        %984 = vmatprep.subr.mxu0 0.0
        %985 = vmatpush1.msra.mxu0 0.0
        %986 = vmatprep.subr.mxu0 0.0
        %987 = vmatpush1.msra.mxu0 0.0
        %988 = vmatprep.subr.mxu0 0.0
        %989 = vmatpush1.msra.mxu0 0.0
        %990 = vmatprep.subr.mxu0 0.0
        %991 = vmatpush1.msra.mxu0 0.0
        %992 = vmatprep.subr.mxu0 0.0
        %993 = vmatpush1.msra.mxu0 0.0
        %994 = vmatprep.subr.mxu0 0.0
        %995 = vmatpush1.msra.mxu0 0.0
        %996 = vmatprep.subr.mxu0 0.0
        %997 = vmatpush1.msra.mxu0 0.0
        %998 = vmatprep.subr.mxu0 0.0
        %999 = vmatpush1.msra.mxu0 0.0
        %1000 = vmatprep.subr.mxu0 0.0
        %1001 = vmatpush1.msra.mxu0 0.0
        %1002 = vmatprep.subr.mxu0 0.0
        %1003 = vmatpush1.msra.mxu0 0.0
        %1004 = vmatprep.subr.mxu0 0.0
        %1005 = vmatpush1.msra.mxu0 0.0
        %1006 = vmatprep.subr.mxu0 0.0
        %1007 = vmatpush1.msra.mxu0 %v971
        %1008 = vmatprep.subr.mxu0 0.0
        %1009 = vmatpush2.msra.mxu0 0.0
        %1010 = vmatprep.subr.mxu0 0.0
        %1011 = vmatpush2.msra.mxu0 0.0
        %1012 = vmatprep.subr.mxu0 0.0
        %1013 = vmatpush2.msra.mxu0 0.0
        %1014 = vmatprep.subr.mxu0 0.0
        %1015 = vmatpush2.msra.mxu0 0.0
        %1016 = vmatprep.subr.mxu0 0.0
        %1017 = vmatpush2.msra.mxu0 0.0
        %1018 = vmatprep.subr.mxu0 0.0
        %1019 = vmatpush2.msra.mxu0 0.0
        %1020 = vmatprep.subr.mxu0 0.0
        %1021 = vmatpush2.msra.mxu0 0.0
        %1022 = vmatprep.subr.mxu0 0.0
        %1023 = vmatpush2.msra.mxu0 0.0
        %1024 = vmatprep.subr.mxu0 0.0
        %1025 = vmatpush2.msra.mxu0 0.0
        %1026 = vmatprep.subr.mxu0 0.0
        %1027 = vmatpush2.msra.mxu0 0.0
        %1028 = vmatprep.subr.mxu0 0.0
        %1029 = vmatpush2.msra.mxu0 0.0
        %1030 = vmatprep.subr.mxu0 0.0
        %1031 = vmatpush2.msra.mxu0 0.0
        %1032 = vmatprep.subr.mxu0 0.0
        %1033 = vmatpush2.msra.mxu0 0.0
        %1034 = vmatprep.subr.mxu0 0.0
        %1035 = vmatpush2.msra.mxu0 0.0
        %1036 = vmatprep.subr.mxu0 0.0
        %1037 = vmatpush2.msra.mxu0 0.0
        %1038 = vmatprep.subr.mxu0 0.0
        %1039 = vmatpush2.msra.mxu0 0.0
        %1040 = vmatprep.mubr.f32.mxu0 0.0
        %1041 = vmatmul.mubr.f32.gmra.mxu0 %v974
        %v1042 = vpop.f32.mrf.mxu0
        %v1043 = vadd.f32 0.0, %v1042
        %v1044 = vpop.f32.mrf.mxu0
        %1045 = vdwg.mxu0
        %1046 = vrot.lane.b32.xlu0 %v876, 124
        %v1047 = vpop.permute.xlu0 %1046
        %1048 = vrot.lane.b32.xlu0 %v876, 92
        %v1049 = vpop.permute.xlu0 %1048
        %v1050 = vsel %vm883, %v1047, 0
        %v1052 = vsel %vm883, %v1049, 0
        %1054 = vmatprep.subr.mxu0 0.0
        %1055 = vmatpush1.xpose.msra.mxu0 0.0
        %1056 = vmatprep.subr.mxu0 0.0
        %1057 = vmatpush1.xpose.msra.mxu0 0.0
        %1058 = vmatprep.subr.mxu0 0.0
        %1059 = vmatpush1.xpose.msra.mxu0 0.0
        %1060 = vmatprep.subr.mxu0 0.0
        %1061 = vmatpush1.xpose.msra.mxu0 0.0
        %1062 = vmatprep.subr.mxu0 0.0
        %1063 = vmatpush1.xpose.msra.mxu0 0.0
        %1064 = vmatprep.subr.mxu0 0.0
        %1065 = vmatpush1.xpose.msra.mxu0 0.0
        %1066 = vmatprep.subr.mxu0 0.0
        %1067 = vmatpush1.xpose.msra.mxu0 0.0
        %1068 = vmatprep.subr.mxu0 0.0
        %1069 = vmatpush1.xpose.msra.mxu0 0.0
        %1070 = vmatprep.subr.mxu0 0.0
        %1071 = vmatpush1.xpose.msra.mxu0 0.0
        %1072 = vmatprep.subr.mxu0 0.0
        %1073 = vmatpush1.xpose.msra.mxu0 0.0
        %1074 = vmatprep.subr.mxu0 0.0
        %1075 = vmatpush1.xpose.msra.mxu0 0.0
        %1076 = vmatprep.subr.mxu0 0.0
        %1077 = vmatpush1.xpose.msra.mxu0 0.0
        %1078 = vmatprep.subr.mxu0 0.0
        %1079 = vmatpush1.xpose.msra.mxu0 0.0
        %1080 = vmatprep.subr.mxu0 0.0
        %1081 = vmatpush1.xpose.msra.mxu0 0.0
        %1082 = vmatprep.subr.mxu0 0.0
        %1083 = vmatpush1.xpose.msra.mxu0 0.0
        %1084 = vmatprep.subr.mxu0 0.0
        %1085 = vmatpush1.xpose.msra.mxu0 %v1052
        %1086 = vmatprep.subr.mxu0 0.0
        %1087 = vmatpush2.xpose.msra.mxu0 0.0
        %1088 = vmatprep.subr.mxu0 0.0
        %1089 = vmatpush2.xpose.msra.mxu0 0.0
        %1090 = vmatprep.subr.mxu0 0.0
        %1091 = vmatpush2.xpose.msra.mxu0 0.0
        %1092 = vmatprep.subr.mxu0 0.0
        %1093 = vmatpush2.xpose.msra.mxu0 0.0
        %1094 = vmatprep.subr.mxu0 0.0
        %1095 = vmatpush2.xpose.msra.mxu0 0.0
        %1096 = vmatprep.subr.mxu0 0.0
        %1097 = vmatpush2.xpose.msra.mxu0 0.0
        %1098 = vmatprep.subr.mxu0 0.0
        %1099 = vmatpush2.xpose.msra.mxu0 0.0
        %1100 = vmatprep.subr.mxu0 0.0
        %1101 = vmatpush2.xpose.msra.mxu0 0.0
        %1102 = vmatprep.subr.mxu0 0.0
        %1103 = vmatpush2.xpose.msra.mxu0 0.0
        %1104 = vmatprep.subr.mxu0 0.0
        %1105 = vmatpush2.xpose.msra.mxu0 0.0
        %1106 = vmatprep.subr.mxu0 0.0
        %1107 = vmatpush2.xpose.msra.mxu0 0.0
        %1108 = vmatprep.subr.mxu0 0.0
        %1109 = vmatpush2.xpose.msra.mxu0 0.0
        %1110 = vmatprep.subr.mxu0 0.0
        %1111 = vmatpush2.xpose.msra.mxu0 0.0
        %1112 = vmatprep.subr.mxu0 0.0
        %1113 = vmatpush2.xpose.msra.mxu0 0.0
        %1114 = vmatprep.subr.mxu0 0.0
        %1115 = vmatpush2.xpose.msra.mxu0 0.0
        %1116 = vmatprep.subr.mxu0 0.0
        %1117 = vmatpush2.xpose.msra.mxu0 0.0
        %1118 = vmatprep.mubr.f32.mxu0 0.0
        %1119 = vmatmul.mubr.f32.gmra.mxu0 %v1050
        %v1120 = vpop.f32.mrf.mxu0
        %v1121 = vadd.f32 %v879, %v1120
        %v1122 = vpop.f32.mrf.mxu0
        %1123 = vdwg.mxu0
        %v1124 = vsel %vm958, %v1121, -inf
        %1125 = vmax.xlane.f32.xlu0 %v1124
        %v1126 = vpop.xlane.xlu0 %1125
        %v1127 = vsub.f32 %v1121, %v1126
        %v1128 = vmul.f32 %v1127, 1.442695
        %v1129 = vpow.pop %v1128
        %v1130 = vsel %vm958, %v1129, 0.0
        %1131 = vadd.xlane.f32.xlu0 %v1130
        %v1132 = vpop.xlane.xlu0 %1131
        %v1133 = vrcp.pop %v1132
        %v1134 = vmul.f32 %v1129, %v1133
        %1135 = vrot.lane.b32.xlu0 %v876, 60
        %v1136 = vpop.permute.xlu0 %1135
        %v1139 = vsel %vm958, %v1134, 0
        %1141 = vmatprep.subr.mxu0 0.0
        %1142 = vmatpush1.msra.mxu0 0.0
        %1143 = vmatprep.subr.mxu0 0.0
        %1144 = vmatpush1.msra.mxu0 0.0
        %1145 = vmatprep.subr.mxu0 0.0
        %1146 = vmatpush1.msra.mxu0 0.0
        %1147 = vmatprep.subr.mxu0 0.0
        %1148 = vmatpush1.msra.mxu0 0.0
        %1149 = vmatprep.subr.mxu0 0.0
        %1150 = vmatpush1.msra.mxu0 0.0
        %1151 = vmatprep.subr.mxu0 0.0
        %1152 = vmatpush1.msra.mxu0 0.0
        %1153 = vmatprep.subr.mxu0 0.0
        %1154 = vmatpush1.msra.mxu0 0.0
        %1155 = vmatprep.subr.mxu0 0.0
        %1156 = vmatpush1.msra.mxu0 0.0
        %1157 = vmatprep.subr.mxu0 0.0
        %1158 = vmatpush1.msra.mxu0 0.0
        %1159 = vmatprep.subr.mxu0 0.0
        %1160 = vmatpush1.msra.mxu0 0.0
        %1161 = vmatprep.subr.mxu0 0.0
        %1162 = vmatpush1.msra.mxu0 0.0
        %1163 = vmatprep.subr.mxu0 0.0
        %1164 = vmatpush1.msra.mxu0 0.0
        %1165 = vmatprep.subr.mxu0 0.0
        %1166 = vmatpush1.msra.mxu0 0.0
        %1167 = vmatprep.subr.mxu0 0.0
        %1168 = vmatpush1.msra.mxu0 0.0
        %1169 = vmatprep.subr.mxu0 0.0
        %1170 = vmatpush1.msra.mxu0 0.0
        %1171 = vmatprep.subr.mxu0 0.0
        %1172 = vmatpush1.msra.mxu0 %v1136
        %1173 = vmatprep.subr.mxu0 0.0
        %1174 = vmatpush2.msra.mxu0 0.0
        %1175 = vmatprep.subr.mxu0 0.0
        %1176 = vmatpush2.msra.mxu0 0.0
        %1177 = vmatprep.subr.mxu0 0.0
        %1178 = vmatpush2.msra.mxu0 0.0
        %1179 = vmatprep.subr.mxu0 0.0
        %1180 = vmatpush2.msra.mxu0 0.0
        %1181 = vmatprep.subr.mxu0 0.0
        %1182 = vmatpush2.msra.mxu0 0.0
        %1183 = vmatprep.subr.mxu0 0.0
        %1184 = vmatpush2.msra.mxu0 0.0
        %1185 = vmatprep.subr.mxu0 0.0
        %1186 = vmatpush2.msra.mxu0 0.0
        %1187 = vmatprep.subr.mxu0 0.0
        %1188 = vmatpush2.msra.mxu0 0.0
        %1189 = vmatprep.subr.mxu0 0.0
        %1190 = vmatpush2.msra.mxu0 0.0
        %1191 = vmatprep.subr.mxu0 0.0
        %1192 = vmatpush2.msra.mxu0 0.0
        %1193 = vmatprep.subr.mxu0 0.0
        %1194 = vmatpush2.msra.mxu0 0.0
        %1195 = vmatprep.subr.mxu0 0.0
        %1196 = vmatpush2.msra.mxu0 0.0
        %1197 = vmatprep.subr.mxu0 0.0
        %1198 = vmatpush2.msra.mxu0 0.0
        %1199 = vmatprep.subr.mxu0 0.0
        %1200 = vmatpush2.msra.mxu0 0.0
        %1201 = vmatprep.subr.mxu0 0.0
        %1202 = vmatpush2.msra.mxu0 0.0
        %1203 = vmatprep.subr.mxu0 0.0
        %1204 = vmatpush2.msra.mxu0 0.0
        %1205 = vmatprep.mubr.f32.mxu0 0.0
        %1206 = vmatmul.mubr.f32.gmra.mxu0 %v1139
        %v1207 = vpop.f32.mrf.mxu0
        %v1208 = vadd.f32 0.0, %v1207
        %v1209 = vpop.f32.mrf.mxu0
        %1210 = vdwg.mxu0
        %1211 = vrot.lane.b32.xlu0 %v876, 120
        %v1212 = vpop.permute.xlu0 %1211
        %1213 = vrot.lane.b32.xlu0 %v876, 88
        %v1214 = vpop.permute.xlu0 %1213
        %v1215 = vsel %vm883, %v1212, 0
        %v1217 = vsel %vm883, %v1214, 0
        %1219 = vmatprep.subr.mxu0 0.0
        %1220 = vmatpush1.xpose.msra.mxu0 0.0
        %1221 = vmatprep.subr.mxu0 0.0
        %1222 = vmatpush1.xpose.msra.mxu0 0.0
        %1223 = vmatprep.subr.mxu0 0.0
        %1224 = vmatpush1.xpose.msra.mxu0 0.0
        %1225 = vmatprep.subr.mxu0 0.0
        %1226 = vmatpush1.xpose.msra.mxu0 0.0
        %1227 = vmatprep.subr.mxu0 0.0
        %1228 = vmatpush1.xpose.msra.mxu0 0.0
        %1229 = vmatprep.subr.mxu0 0.0
        %1230 = vmatpush1.xpose.msra.mxu0 0.0
        %1231 = vmatprep.subr.mxu0 0.0
        %1232 = vmatpush1.xpose.msra.mxu0 0.0
        %1233 = vmatprep.subr.mxu0 0.0
        %1234 = vmatpush1.xpose.msra.mxu0 0.0
        %1235 = vmatprep.subr.mxu0 0.0
        %1236 = vmatpush1.xpose.msra.mxu0 0.0
        %1237 = vmatprep.subr.mxu0 0.0
        %1238 = vmatpush1.xpose.msra.mxu0 0.0
        %1239 = vmatprep.subr.mxu0 0.0
        %1240 = vmatpush1.xpose.msra.mxu0 0.0
        %1241 = vmatprep.subr.mxu0 0.0
        %1242 = vmatpush1.xpose.msra.mxu0 0.0
        %1243 = vmatprep.subr.mxu0 0.0
        %1244 = vmatpush1.xpose.msra.mxu0 0.0
        %1245 = vmatprep.subr.mxu0 0.0
        %1246 = vmatpush1.xpose.msra.mxu0 0.0
        %1247 = vmatprep.subr.mxu0 0.0
        %1248 = vmatpush1.xpose.msra.mxu0 0.0
        %1249 = vmatprep.subr.mxu0 0.0
        %1250 = vmatpush1.xpose.msra.mxu0 %v1217
        %1251 = vmatprep.subr.mxu0 0.0
        %1252 = vmatpush2.xpose.msra.mxu0 0.0
        %1253 = vmatprep.subr.mxu0 0.0
        %1254 = vmatpush2.xpose.msra.mxu0 0.0
        %1255 = vmatprep.subr.mxu0 0.0
        %1256 = vmatpush2.xpose.msra.mxu0 0.0
        %1257 = vmatprep.subr.mxu0 0.0
        %1258 = vmatpush2.xpose.msra.mxu0 0.0
        %1259 = vmatprep.subr.mxu0 0.0
        %1260 = vmatpush2.xpose.msra.mxu0 0.0
        %1261 = vmatprep.subr.mxu0 0.0
        %1262 = vmatpush2.xpose.msra.mxu0 0.0
        %1263 = vmatprep.subr.mxu0 0.0
        %1264 = vmatpush2.xpose.msra.mxu0 0.0
        %1265 = vmatprep.subr.mxu0 0.0
        %1266 = vmatpush2.xpose.msra.mxu0 0.0
        %1267 = vmatprep.subr.mxu0 0.0
        %1268 = vmatpush2.xpose.msra.mxu0 0.0
        %1269 = vmatprep.subr.mxu0 0.0
        %1270 = vmatpush2.xpose.msra.mxu0 0.0
        %1271 = vmatprep.subr.mxu0 0.0
        %1272 = vmatpush2.xpose.msra.mxu0 0.0
        %1273 = vmatprep.subr.mxu0 0.0
        %1274 = vmatpush2.xpose.msra.mxu0 0.0
        %1275 = vmatprep.subr.mxu0 0.0
        %1276 = vmatpush2.xpose.msra.mxu0 0.0
        %1277 = vmatprep.subr.mxu0 0.0
        %1278 = vmatpush2.xpose.msra.mxu0 0.0
        %1279 = vmatprep.subr.mxu0 0.0
        %1280 = vmatpush2.xpose.msra.mxu0 0.0
        %1281 = vmatprep.subr.mxu0 0.0
        %1282 = vmatpush2.xpose.msra.mxu0 0.0
        %1283 = vmatprep.mubr.f32.mxu0 0.0
        %1284 = vmatmul.mubr.f32.gmra.mxu0 %v1215
        %v1285 = vpop.f32.mrf.mxu0
        %v1286 = vadd.f32 %v879, %v1285
        %v1287 = vpop.f32.mrf.mxu0
        %1288 = vdwg.mxu0
        %v1289 = vsel %vm958, %v1286, -inf
        %1290 = vmax.xlane.f32.xlu0 %v1289
        %v1291 = vpop.xlane.xlu0 %1290
        %v1292 = vsub.f32 %v1286, %v1291
        %v1293 = vmul.f32 %v1292, 1.442695
        %v1294 = vpow.pop %v1293
        %v1295 = vsel %vm958, %v1294, 0.0
        %1296 = vadd.xlane.f32.xlu0 %v1295
        %v1297 = vpop.xlane.xlu0 %1296
        %v1298 = vrcp.pop %v1297
        %v1299 = vmul.f32 %v1294, %v1298
        %1300 = vrot.lane.b32.xlu0 %v876, 56
        %v1301 = vpop.permute.xlu0 %1300
        %v1304 = vsel %vm958, %v1299, 0
        %1306 = vmatprep.subr.mxu0 0.0
        %1307 = vmatpush1.msra.mxu0 0.0
        %1308 = vmatprep.subr.mxu0 0.0
        %1309 = vmatpush1.msra.mxu0 0.0
        %1310 = vmatprep.subr.mxu0 0.0
        %1311 = vmatpush1.msra.mxu0 0.0
        %1312 = vmatprep.subr.mxu0 0.0
        %1313 = vmatpush1.msra.mxu0 0.0
        %1314 = vmatprep.subr.mxu0 0.0
        %1315 = vmatpush1.msra.mxu0 0.0
        %1316 = vmatprep.subr.mxu0 0.0
        %1317 = vmatpush1.msra.mxu0 0.0
        %1318 = vmatprep.subr.mxu0 0.0
        %1319 = vmatpush1.msra.mxu0 0.0
        %1320 = vmatprep.subr.mxu0 0.0
        %1321 = vmatpush1.msra.mxu0 0.0
        %1322 = vmatprep.subr.mxu0 0.0
        %1323 = vmatpush1.msra.mxu0 0.0
        %1324 = vmatprep.subr.mxu0 0.0
        %1325 = vmatpush1.msra.mxu0 0.0
        %1326 = vmatprep.subr.mxu0 0.0
        %1327 = vmatpush1.msra.mxu0 0.0
        %1328 = vmatprep.subr.mxu0 0.0
        %1329 = vmatpush1.msra.mxu0 0.0
        %1330 = vmatprep.subr.mxu0 0.0
        %1331 = vmatpush1.msra.mxu0 0.0
        %1332 = vmatprep.subr.mxu0 0.0
        %1333 = vmatpush1.msra.mxu0 0.0
        %1334 = vmatprep.subr.mxu0 0.0
        %1335 = vmatpush1.msra.mxu0 0.0
        %1336 = vmatprep.subr.mxu0 0.0
        %1337 = vmatpush1.msra.mxu0 %v1301
        %1338 = vmatprep.subr.mxu0 0.0
        %1339 = vmatpush2.msra.mxu0 0.0
        %1340 = vmatprep.subr.mxu0 0.0
        %1341 = vmatpush2.msra.mxu0 0.0
        %1342 = vmatprep.subr.mxu0 0.0
        %1343 = vmatpush2.msra.mxu0 0.0
        %1344 = vmatprep.subr.mxu0 0.0
        %1345 = vmatpush2.msra.mxu0 0.0
        %1346 = vmatprep.subr.mxu0 0.0
        %1347 = vmatpush2.msra.mxu0 0.0
        %1348 = vmatprep.subr.mxu0 0.0
        %1349 = vmatpush2.msra.mxu0 0.0
        %1350 = vmatprep.subr.mxu0 0.0
        %1351 = vmatpush2.msra.mxu0 0.0
        %1352 = vmatprep.subr.mxu0 0.0
        %1353 = vmatpush2.msra.mxu0 0.0
        %1354 = vmatprep.subr.mxu0 0.0
        %1355 = vmatpush2.msra.mxu0 0.0
        %1356 = vmatprep.subr.mxu0 0.0
        %1357 = vmatpush2.msra.mxu0 0.0
        %1358 = vmatprep.subr.mxu0 0.0
        %1359 = vmatpush2.msra.mxu0 0.0
        %1360 = vmatprep.subr.mxu0 0.0
        %1361 = vmatpush2.msra.mxu0 0.0
        %1362 = vmatprep.subr.mxu0 0.0
        %1363 = vmatpush2.msra.mxu0 0.0
        %1364 = vmatprep.subr.mxu0 0.0
        %1365 = vmatpush2.msra.mxu0 0.0
        %1366 = vmatprep.subr.mxu0 0.0
        %1367 = vmatpush2.msra.mxu0 0.0
        %1368 = vmatprep.subr.mxu0 0.0
        %1369 = vmatpush2.msra.mxu0 0.0
        %1370 = vmatprep.mubr.f32.mxu0 0.0
        %1371 = vmatmul.mubr.f32.gmra.mxu0 %v1304
        %v1372 = vpop.f32.mrf.mxu0
        %v1373 = vadd.f32 0.0, %v1372
        %v1374 = vpop.f32.mrf.mxu0
        %1375 = vdwg.mxu0
        %1376 = vrot.lane.b32.xlu0 %v876, 116
        %v1377 = vpop.permute.xlu0 %1376
        %1378 = vrot.lane.b32.xlu0 %v876, 84
        %v1379 = vpop.permute.xlu0 %1378
        %v1380 = vsel %vm883, %v1377, 0
        %v1382 = vsel %vm883, %v1379, 0
        %1384 = vmatprep.subr.mxu0 0.0
        %1385 = vmatpush1.xpose.msra.mxu0 0.0
        %1386 = vmatprep.subr.mxu0 0.0
        %1387 = vmatpush1.xpose.msra.mxu0 0.0
        %1388 = vmatprep.subr.mxu0 0.0
        %1389 = vmatpush1.xpose.msra.mxu0 0.0
        %1390 = vmatprep.subr.mxu0 0.0
        %1391 = vmatpush1.xpose.msra.mxu0 0.0
        %1392 = vmatprep.subr.mxu0 0.0
        %1393 = vmatpush1.xpose.msra.mxu0 0.0
        %1394 = vmatprep.subr.mxu0 0.0
        %1395 = vmatpush1.xpose.msra.mxu0 0.0
        %1396 = vmatprep.subr.mxu0 0.0
        %1397 = vmatpush1.xpose.msra.mxu0 0.0
        %1398 = vmatprep.subr.mxu0 0.0
        %1399 = vmatpush1.xpose.msra.mxu0 0.0
        %1400 = vmatprep.subr.mxu0 0.0
        %1401 = vmatpush1.xpose.msra.mxu0 0.0
        %1402 = vmatprep.subr.mxu0 0.0
        %1403 = vmatpush1.xpose.msra.mxu0 0.0
        %1404 = vmatprep.subr.mxu0 0.0
        %1405 = vmatpush1.xpose.msra.mxu0 0.0
        %1406 = vmatprep.subr.mxu0 0.0
        %1407 = vmatpush1.xpose.msra.mxu0 0.0
        %1408 = vmatprep.subr.mxu0 0.0
        %1409 = vmatpush1.xpose.msra.mxu0 0.0
        %1410 = vmatprep.subr.mxu0 0.0
        %1411 = vmatpush1.xpose.msra.mxu0 0.0
        %1412 = vmatprep.subr.mxu0 0.0
        %1413 = vmatpush1.xpose.msra.mxu0 0.0
        %1414 = vmatprep.subr.mxu0 0.0
        %1415 = vmatpush1.xpose.msra.mxu0 %v1382
        %1416 = vmatprep.subr.mxu0 0.0
        %1417 = vmatpush2.xpose.msra.mxu0 0.0
        %1418 = vmatprep.subr.mxu0 0.0
        %1419 = vmatpush2.xpose.msra.mxu0 0.0
        %1420 = vmatprep.subr.mxu0 0.0
        %1421 = vmatpush2.xpose.msra.mxu0 0.0
        %1422 = vmatprep.subr.mxu0 0.0
        %1423 = vmatpush2.xpose.msra.mxu0 0.0
        %1424 = vmatprep.subr.mxu0 0.0
        %1425 = vmatpush2.xpose.msra.mxu0 0.0
        %1426 = vmatprep.subr.mxu0 0.0
        %1427 = vmatpush2.xpose.msra.mxu0 0.0
        %1428 = vmatprep.subr.mxu0 0.0
        %1429 = vmatpush2.xpose.msra.mxu0 0.0
        %1430 = vmatprep.subr.mxu0 0.0
        %1431 = vmatpush2.xpose.msra.mxu0 0.0
        %1432 = vmatprep.subr.mxu0 0.0
        %1433 = vmatpush2.xpose.msra.mxu0 0.0
        %1434 = vmatprep.subr.mxu0 0.0
        %1435 = vmatpush2.xpose.msra.mxu0 0.0
        %1436 = vmatprep.subr.mxu0 0.0
        %1437 = vmatpush2.xpose.msra.mxu0 0.0
        %1438 = vmatprep.subr.mxu0 0.0
        %1439 = vmatpush2.xpose.msra.mxu0 0.0
        %1440 = vmatprep.subr.mxu0 0.0
        %1441 = vmatpush2.xpose.msra.mxu0 0.0
        %1442 = vmatprep.subr.mxu0 0.0
        %1443 = vmatpush2.xpose.msra.mxu0 0.0
        %1444 = vmatprep.subr.mxu0 0.0
        %1445 = vmatpush2.xpose.msra.mxu0 0.0
        %1446 = vmatprep.subr.mxu0 0.0
        %1447 = vmatpush2.xpose.msra.mxu0 0.0
        %1448 = vmatprep.mubr.f32.mxu0 0.0
        %1449 = vmatmul.mubr.f32.gmra.mxu0 %v1380
        %v1450 = vpop.f32.mrf.mxu0
        %v1451 = vadd.f32 %v879, %v1450
        %v1452 = vpop.f32.mrf.mxu0
        %1453 = vdwg.mxu0
        %v1454 = vsel %vm958, %v1451, -inf
        %1455 = vmax.xlane.f32.xlu0 %v1454
        %v1456 = vpop.xlane.xlu0 %1455
        %v1457 = vsub.f32 %v1451, %v1456
        %v1458 = vmul.f32 %v1457, 1.442695
        %v1459 = vpow.pop %v1458
        %v1460 = vsel %vm958, %v1459, 0.0
        %1461 = vadd.xlane.f32.xlu0 %v1460
        %v1462 = vpop.xlane.xlu0 %1461
        %v1463 = vrcp.pop %v1462
        %v1464 = vmul.f32 %v1459, %v1463
        %1465 = vrot.lane.b32.xlu0 %v876, 52
        %v1466 = vpop.permute.xlu0 %1465
        %v1469 = vsel %vm958, %v1464, 0
        %1471 = vmatprep.subr.mxu0 0.0
        %1472 = vmatpush1.msra.mxu0 0.0
        %1473 = vmatprep.subr.mxu0 0.0
        %1474 = vmatpush1.msra.mxu0 0.0
        %1475 = vmatprep.subr.mxu0 0.0
        %1476 = vmatpush1.msra.mxu0 0.0
        %1477 = vmatprep.subr.mxu0 0.0
        %1478 = vmatpush1.msra.mxu0 0.0
        %1479 = vmatprep.subr.mxu0 0.0
        %1480 = vmatpush1.msra.mxu0 0.0
        %1481 = vmatprep.subr.mxu0 0.0
        %1482 = vmatpush1.msra.mxu0 0.0
        %1483 = vmatprep.subr.mxu0 0.0
        %1484 = vmatpush1.msra.mxu0 0.0
        %1485 = vmatprep.subr.mxu0 0.0
        %1486 = vmatpush1.msra.mxu0 0.0
        %1487 = vmatprep.subr.mxu0 0.0
        %1488 = vmatpush1.msra.mxu0 0.0
        %1489 = vmatprep.subr.mxu0 0.0
        %1490 = vmatpush1.msra.mxu0 0.0
        %1491 = vmatprep.subr.mxu0 0.0
        %1492 = vmatpush1.msra.mxu0 0.0
        %1493 = vmatprep.subr.mxu0 0.0
        %1494 = vmatpush1.msra.mxu0 0.0
        %1495 = vmatprep.subr.mxu0 0.0
        %1496 = vmatpush1.msra.mxu0 0.0
        %1497 = vmatprep.subr.mxu0 0.0
        %1498 = vmatpush1.msra.mxu0 0.0
        %1499 = vmatprep.subr.mxu0 0.0
        %1500 = vmatpush1.msra.mxu0 0.0
        %1501 = vmatprep.subr.mxu0 0.0
        %1502 = vmatpush1.msra.mxu0 %v1466
        %1503 = vmatprep.subr.mxu0 0.0
        %1504 = vmatpush2.msra.mxu0 0.0
        %1505 = vmatprep.subr.mxu0 0.0
        %1506 = vmatpush2.msra.mxu0 0.0
        %1507 = vmatprep.subr.mxu0 0.0
        %1508 = vmatpush2.msra.mxu0 0.0
        %1509 = vmatprep.subr.mxu0 0.0
        %1510 = vmatpush2.msra.mxu0 0.0
        %1511 = vmatprep.subr.mxu0 0.0
        %1512 = vmatpush2.msra.mxu0 0.0
        %1513 = vmatprep.subr.mxu0 0.0
        %1514 = vmatpush2.msra.mxu0 0.0
        %1515 = vmatprep.subr.mxu0 0.0
        %1516 = vmatpush2.msra.mxu0 0.0
        %1517 = vmatprep.subr.mxu0 0.0
        %1518 = vmatpush2.msra.mxu0 0.0
        %1519 = vmatprep.subr.mxu0 0.0
        %1520 = vmatpush2.msra.mxu0 0.0
        %1521 = vmatprep.subr.mxu0 0.0
        %1522 = vmatpush2.msra.mxu0 0.0
        %1523 = vmatprep.subr.mxu0 0.0
        %1524 = vmatpush2.msra.mxu0 0.0
        %1525 = vmatprep.subr.mxu0 0.0
        %1526 = vmatpush2.msra.mxu0 0.0
        %1527 = vmatprep.subr.mxu0 0.0
        %1528 = vmatpush2.msra.mxu0 0.0
        %1529 = vmatprep.subr.mxu0 0.0
        %1530 = vmatpush2.msra.mxu0 0.0
        %1531 = vmatprep.subr.mxu0 0.0
        %1532 = vmatpush2.msra.mxu0 0.0
        %1533 = vmatprep.subr.mxu0 0.0
        %1534 = vmatpush2.msra.mxu0 0.0
        %1535 = vmatprep.mubr.f32.mxu0 0.0
        %1536 = vmatmul.mubr.f32.gmra.mxu0 %v1469
        %v1537 = vpop.f32.mrf.mxu0
        %v1538 = vadd.f32 0.0, %v1537
        %v1539 = vpop.f32.mrf.mxu0
        %1540 = vdwg.mxu0
        %1541 = vrot.lane.b32.xlu0 %v876, 112
        %v1542 = vpop.permute.xlu0 %1541
        %1543 = vrot.lane.b32.xlu0 %v876, 80
        %v1544 = vpop.permute.xlu0 %1543
        %v1545 = vsel %vm883, %v1542, 0
        %v1547 = vsel %vm883, %v1544, 0
        %1549 = vmatprep.subr.mxu0 0.0
        %1550 = vmatpush1.xpose.msra.mxu0 0.0
        %1551 = vmatprep.subr.mxu0 0.0
        %1552 = vmatpush1.xpose.msra.mxu0 0.0
        %1553 = vmatprep.subr.mxu0 0.0
        %1554 = vmatpush1.xpose.msra.mxu0 0.0
        %1555 = vmatprep.subr.mxu0 0.0
        %1556 = vmatpush1.xpose.msra.mxu0 0.0
        %1557 = vmatprep.subr.mxu0 0.0
        %1558 = vmatpush1.xpose.msra.mxu0 0.0
        %1559 = vmatprep.subr.mxu0 0.0
        %1560 = vmatpush1.xpose.msra.mxu0 0.0
        %1561 = vmatprep.subr.mxu0 0.0
        %1562 = vmatpush1.xpose.msra.mxu0 0.0
        %1563 = vmatprep.subr.mxu0 0.0
        %1564 = vmatpush1.xpose.msra.mxu0 0.0
        %1565 = vmatprep.subr.mxu0 0.0
        %1566 = vmatpush1.xpose.msra.mxu0 0.0
        %1567 = vmatprep.subr.mxu0 0.0
        %1568 = vmatpush1.xpose.msra.mxu0 0.0
        %1569 = vmatprep.subr.mxu0 0.0
        %1570 = vmatpush1.xpose.msra.mxu0 0.0
        %1571 = vmatprep.subr.mxu0 0.0
        %1572 = vmatpush1.xpose.msra.mxu0 0.0
        %1573 = vmatprep.subr.mxu0 0.0
        %1574 = vmatpush1.xpose.msra.mxu0 0.0
        %1575 = vmatprep.subr.mxu0 0.0
        %1576 = vmatpush1.xpose.msra.mxu0 0.0
        %1577 = vmatprep.subr.mxu0 0.0
        %1578 = vmatpush1.xpose.msra.mxu0 0.0
        %1579 = vmatprep.subr.mxu0 0.0
        %1580 = vmatpush1.xpose.msra.mxu0 %v1547
        %1581 = vmatprep.subr.mxu0 0.0
        %1582 = vmatpush2.xpose.msra.mxu0 0.0
        %1583 = vmatprep.subr.mxu0 0.0
        %1584 = vmatpush2.xpose.msra.mxu0 0.0
        %1585 = vmatprep.subr.mxu0 0.0
        %1586 = vmatpush2.xpose.msra.mxu0 0.0
        %1587 = vmatprep.subr.mxu0 0.0
        %1588 = vmatpush2.xpose.msra.mxu0 0.0
        %1589 = vmatprep.subr.mxu0 0.0
        %1590 = vmatpush2.xpose.msra.mxu0 0.0
        %1591 = vmatprep.subr.mxu0 0.0
        %1592 = vmatpush2.xpose.msra.mxu0 0.0
        %1593 = vmatprep.subr.mxu0 0.0
        %1594 = vmatpush2.xpose.msra.mxu0 0.0
        %1595 = vmatprep.subr.mxu0 0.0
        %1596 = vmatpush2.xpose.msra.mxu0 0.0
        %1597 = vmatprep.subr.mxu0 0.0
        %1598 = vmatpush2.xpose.msra.mxu0 0.0
        %1599 = vmatprep.subr.mxu0 0.0
        %1600 = vmatpush2.xpose.msra.mxu0 0.0
        %1601 = vmatprep.subr.mxu0 0.0
        %1602 = vmatpush2.xpose.msra.mxu0 0.0
        %1603 = vmatprep.subr.mxu0 0.0
        %1604 = vmatpush2.xpose.msra.mxu0 0.0
        %1605 = vmatprep.subr.mxu0 0.0
        %1606 = vmatpush2.xpose.msra.mxu0 0.0
        %1607 = vmatprep.subr.mxu0 0.0
        %1608 = vmatpush2.xpose.msra.mxu0 0.0
        %1609 = vmatprep.subr.mxu0 0.0
        %1610 = vmatpush2.xpose.msra.mxu0 0.0
        %1611 = vmatprep.subr.mxu0 0.0
        %1612 = vmatpush2.xpose.msra.mxu0 0.0
        %1613 = vmatprep.mubr.f32.mxu0 0.0
        %1614 = vmatmul.mubr.f32.gmra.mxu0 %v1545
        %v1615 = vpop.f32.mrf.mxu0
        %v1616 = vadd.f32 %v879, %v1615
        %v1617 = vpop.f32.mrf.mxu0
        %1618 = vdwg.mxu0
        %v1619 = vsel %vm958, %v1616, -inf
        %1620 = vmax.xlane.f32.xlu0 %v1619
        %v1621 = vpop.xlane.xlu0 %1620
        %v1622 = vsub.f32 %v1616, %v1621
        %v1623 = vmul.f32 %v1622, 1.442695
        %v1624 = vpow.pop %v1623
        %v1625 = vsel %vm958, %v1624, 0.0
        %1626 = vadd.xlane.f32.xlu0 %v1625
        %v1627 = vpop.xlane.xlu0 %1626
        %v1628 = vrcp.pop %v1627
        %v1629 = vmul.f32 %v1624, %v1628
        %1630 = vrot.lane.b32.xlu0 %v876, 48
        %v1631 = vpop.permute.xlu0 %1630
        %v1634 = vsel %vm958, %v1629, 0
        %1636 = vmatprep.subr.mxu0 0.0
        %1637 = vmatpush1.msra.mxu0 0.0
        %1638 = vmatprep.subr.mxu0 0.0
        %1639 = vmatpush1.msra.mxu0 0.0
        %1640 = vmatprep.subr.mxu0 0.0
        %1641 = vmatpush1.msra.mxu0 0.0
        %1642 = vmatprep.subr.mxu0 0.0
        %1643 = vmatpush1.msra.mxu0 0.0
        %1644 = vmatprep.subr.mxu0 0.0
        %1645 = vmatpush1.msra.mxu0 0.0
        %1646 = vmatprep.subr.mxu0 0.0
        %1647 = vmatpush1.msra.mxu0 0.0
        %1648 = vmatprep.subr.mxu0 0.0
        %1649 = vmatpush1.msra.mxu0 0.0
        %1650 = vmatprep.subr.mxu0 0.0
        %1651 = vmatpush1.msra.mxu0 0.0
        %1652 = vmatprep.subr.mxu0 0.0
        %1653 = vmatpush1.msra.mxu0 0.0
        %1654 = vmatprep.subr.mxu0 0.0
        %1655 = vmatpush1.msra.mxu0 0.0
        %1656 = vmatprep.subr.mxu0 0.0
        %1657 = vmatpush1.msra.mxu0 0.0
        %1658 = vmatprep.subr.mxu0 0.0
        %1659 = vmatpush1.msra.mxu0 0.0
        %1660 = vmatprep.subr.mxu0 0.0
        %1661 = vmatpush1.msra.mxu0 0.0
        %1662 = vmatprep.subr.mxu0 0.0
        %1663 = vmatpush1.msra.mxu0 0.0
        %1664 = vmatprep.subr.mxu0 0.0
        %1665 = vmatpush1.msra.mxu0 0.0
        %1666 = vmatprep.subr.mxu0 0.0
        %1667 = vmatpush1.msra.mxu0 %v1631
        %1668 = vmatprep.subr.mxu0 0.0
        %1669 = vmatpush2.msra.mxu0 0.0
        %1670 = vmatprep.subr.mxu0 0.0
        %1671 = vmatpush2.msra.mxu0 0.0
        %1672 = vmatprep.subr.mxu0 0.0
        %1673 = vmatpush2.msra.mxu0 0.0
        %1674 = vmatprep.subr.mxu0 0.0
        %1675 = vmatpush2.msra.mxu0 0.0
        %1676 = vmatprep.subr.mxu0 0.0
        %1677 = vmatpush2.msra.mxu0 0.0
        %1678 = vmatprep.subr.mxu0 0.0
        %1679 = vmatpush2.msra.mxu0 0.0
        %1680 = vmatprep.subr.mxu0 0.0
        %1681 = vmatpush2.msra.mxu0 0.0
        %1682 = vmatprep.subr.mxu0 0.0
        %1683 = vmatpush2.msra.mxu0 0.0
        %1684 = vmatprep.subr.mxu0 0.0
        %1685 = vmatpush2.msra.mxu0 0.0
        %1686 = vmatprep.subr.mxu0 0.0
        %1687 = vmatpush2.msra.mxu0 0.0
        %1688 = vmatprep.subr.mxu0 0.0
        %1689 = vmatpush2.msra.mxu0 0.0
        %1690 = vmatprep.subr.mxu0 0.0
        %1691 = vmatpush2.msra.mxu0 0.0
        %1692 = vmatprep.subr.mxu0 0.0
        %1693 = vmatpush2.msra.mxu0 0.0
        %1694 = vmatprep.subr.mxu0 0.0
        %1695 = vmatpush2.msra.mxu0 0.0
        %1696 = vmatprep.subr.mxu0 0.0
        %1697 = vmatpush2.msra.mxu0 0.0
        %1698 = vmatprep.subr.mxu0 0.0
        %1699 = vmatpush2.msra.mxu0 0.0
        %1700 = vmatprep.mubr.f32.mxu0 0.0
        %1701 = vmatmul.mubr.f32.gmra.mxu0 %v1634
        %v1702 = vpop.f32.mrf.mxu0
        %v1703 = vadd.f32 0.0, %v1702
        %v1704 = vpop.f32.mrf.mxu0
        %1705 = vdwg.mxu0
        %1706 = vrot.lane.b32.xlu0 %v876, 108
        %v1707 = vpop.permute.xlu0 %1706
        %1708 = vrot.lane.b32.xlu0 %v876, 76
        %v1709 = vpop.permute.xlu0 %1708
        %v1710 = vsel %vm883, %v1707, 0
        %v1712 = vsel %vm883, %v1709, 0
        %1714 = vmatprep.subr.mxu0 0.0
        %1715 = vmatpush1.xpose.msra.mxu0 0.0
        %1716 = vmatprep.subr.mxu0 0.0
        %1717 = vmatpush1.xpose.msra.mxu0 0.0
        %1718 = vmatprep.subr.mxu0 0.0
        %1719 = vmatpush1.xpose.msra.mxu0 0.0
        %1720 = vmatprep.subr.mxu0 0.0
        %1721 = vmatpush1.xpose.msra.mxu0 0.0
        %1722 = vmatprep.subr.mxu0 0.0
        %1723 = vmatpush1.xpose.msra.mxu0 0.0
        %1724 = vmatprep.subr.mxu0 0.0
        %1725 = vmatpush1.xpose.msra.mxu0 0.0
        %1726 = vmatprep.subr.mxu0 0.0
        %1727 = vmatpush1.xpose.msra.mxu0 0.0
        %1728 = vmatprep.subr.mxu0 0.0
        %1729 = vmatpush1.xpose.msra.mxu0 0.0
        %1730 = vmatprep.subr.mxu0 0.0
        %1731 = vmatpush1.xpose.msra.mxu0 0.0
        %1732 = vmatprep.subr.mxu0 0.0
        %1733 = vmatpush1.xpose.msra.mxu0 0.0
        %1734 = vmatprep.subr.mxu0 0.0
        %1735 = vmatpush1.xpose.msra.mxu0 0.0
        %1736 = vmatprep.subr.mxu0 0.0
        %1737 = vmatpush1.xpose.msra.mxu0 0.0
        %1738 = vmatprep.subr.mxu0 0.0
        %1739 = vmatpush1.xpose.msra.mxu0 0.0
        %1740 = vmatprep.subr.mxu0 0.0
        %1741 = vmatpush1.xpose.msra.mxu0 0.0
        %1742 = vmatprep.subr.mxu0 0.0
        %1743 = vmatpush1.xpose.msra.mxu0 0.0
        %1744 = vmatprep.subr.mxu0 0.0
        %1745 = vmatpush1.xpose.msra.mxu0 %v1712
        %1746 = vmatprep.subr.mxu0 0.0
        %1747 = vmatpush2.xpose.msra.mxu0 0.0
        %1748 = vmatprep.subr.mxu0 0.0
        %1749 = vmatpush2.xpose.msra.mxu0 0.0
        %1750 = vmatprep.subr.mxu0 0.0
        %1751 = vmatpush2.xpose.msra.mxu0 0.0
        %1752 = vmatprep.subr.mxu0 0.0
        %1753 = vmatpush2.xpose.msra.mxu0 0.0
        %1754 = vmatprep.subr.mxu0 0.0
        %1755 = vmatpush2.xpose.msra.mxu0 0.0
        %1756 = vmatprep.subr.mxu0 0.0
        %1757 = vmatpush2.xpose.msra.mxu0 0.0
        %1758 = vmatprep.subr.mxu0 0.0
        %1759 = vmatpush2.xpose.msra.mxu0 0.0
        %1760 = vmatprep.subr.mxu0 0.0
        %1761 = vmatpush2.xpose.msra.mxu0 0.0
        %1762 = vmatprep.subr.mxu0 0.0
        %1763 = vmatpush2.xpose.msra.mxu0 0.0
        %1764 = vmatprep.subr.mxu0 0.0
        %1765 = vmatpush2.xpose.msra.mxu0 0.0
        %1766 = vmatprep.subr.mxu0 0.0
        %1767 = vmatpush2.xpose.msra.mxu0 0.0
        %1768 = vmatprep.subr.mxu0 0.0
        %1769 = vmatpush2.xpose.msra.mxu0 0.0
        %1770 = vmatprep.subr.mxu0 0.0
        %1771 = vmatpush2.xpose.msra.mxu0 0.0
        %1772 = vmatprep.subr.mxu0 0.0
        %1773 = vmatpush2.xpose.msra.mxu0 0.0
        %1774 = vmatprep.subr.mxu0 0.0
        %1775 = vmatpush2.xpose.msra.mxu0 0.0
        %1776 = vmatprep.subr.mxu0 0.0
        %1777 = vmatpush2.xpose.msra.mxu0 0.0
        %1778 = vmatprep.mubr.f32.mxu0 0.0
        %1779 = vmatmul.mubr.f32.gmra.mxu0 %v1710
        %v1780 = vpop.f32.mrf.mxu0
        %v1781 = vadd.f32 %v879, %v1780
        %v1782 = vpop.f32.mrf.mxu0
        %1783 = vdwg.mxu0
        %v1784 = vsel %vm958, %v1781, -inf
        %1785 = vmax.xlane.f32.xlu0 %v1784
        %v1786 = vpop.xlane.xlu0 %1785
        %v1787 = vsub.f32 %v1781, %v1786
        %v1788 = vmul.f32 %v1787, 1.442695
        %v1789 = vpow.pop %v1788
        %v1790 = vsel %vm958, %v1789, 0.0
        %1791 = vadd.xlane.f32.xlu0 %v1790
        %v1792 = vpop.xlane.xlu0 %1791
        %v1793 = vrcp.pop %v1792
        %v1794 = vmul.f32 %v1789, %v1793
        %1795 = vrot.lane.b32.xlu0 %v876, 44
        %v1796 = vpop.permute.xlu0 %1795
        %v1799 = vsel %vm958, %v1794, 0
        %1801 = vmatprep.subr.mxu0 0.0
        %1802 = vmatpush1.msra.mxu0 0.0
        %1803 = vmatprep.subr.mxu0 0.0
        %1804 = vmatpush1.msra.mxu0 0.0
        %1805 = vmatprep.subr.mxu0 0.0
        %1806 = vmatpush1.msra.mxu0 0.0
        %1807 = vmatprep.subr.mxu0 0.0
        %1808 = vmatpush1.msra.mxu0 0.0
        %1809 = vmatprep.subr.mxu0 0.0
        %1810 = vmatpush1.msra.mxu0 0.0
        %1811 = vmatprep.subr.mxu0 0.0
        %1812 = vmatpush1.msra.mxu0 0.0
        %1813 = vmatprep.subr.mxu0 0.0
        %1814 = vmatpush1.msra.mxu0 0.0
        %1815 = vmatprep.subr.mxu0 0.0
        %1816 = vmatpush1.msra.mxu0 0.0
        %1817 = vmatprep.subr.mxu0 0.0
        %1818 = vmatpush1.msra.mxu0 0.0
        %1819 = vmatprep.subr.mxu0 0.0
        %1820 = vmatpush1.msra.mxu0 0.0
        %1821 = vmatprep.subr.mxu0 0.0
        %1822 = vmatpush1.msra.mxu0 0.0
        %1823 = vmatprep.subr.mxu0 0.0
        %1824 = vmatpush1.msra.mxu0 0.0
        %1825 = vmatprep.subr.mxu0 0.0
        %1826 = vmatpush1.msra.mxu0 0.0
        %1827 = vmatprep.subr.mxu0 0.0
        %1828 = vmatpush1.msra.mxu0 0.0
        %1829 = vmatprep.subr.mxu0 0.0
        %1830 = vmatpush1.msra.mxu0 0.0
        %1831 = vmatprep.subr.mxu0 0.0
        %1832 = vmatpush1.msra.mxu0 %v1796
        %1833 = vmatprep.subr.mxu0 0.0
        %1834 = vmatpush2.msra.mxu0 0.0
        %1835 = vmatprep.subr.mxu0 0.0
        %1836 = vmatpush2.msra.mxu0 0.0
        %1837 = vmatprep.subr.mxu0 0.0
        %1838 = vmatpush2.msra.mxu0 0.0
        %1839 = vmatprep.subr.mxu0 0.0
        %1840 = vmatpush2.msra.mxu0 0.0
        %1841 = vmatprep.subr.mxu0 0.0
        %1842 = vmatpush2.msra.mxu0 0.0
        %1843 = vmatprep.subr.mxu0 0.0
        %1844 = vmatpush2.msra.mxu0 0.0
        %1845 = vmatprep.subr.mxu0 0.0
        %1846 = vmatpush2.msra.mxu0 0.0
        %1847 = vmatprep.subr.mxu0 0.0
        %1848 = vmatpush2.msra.mxu0 0.0
        %1849 = vmatprep.subr.mxu0 0.0
        %1850 = vmatpush2.msra.mxu0 0.0
        %1851 = vmatprep.subr.mxu0 0.0
        %1852 = vmatpush2.msra.mxu0 0.0
        %1853 = vmatprep.subr.mxu0 0.0
        %1854 = vmatpush2.msra.mxu0 0.0
        %1855 = vmatprep.subr.mxu0 0.0
        %1856 = vmatpush2.msra.mxu0 0.0
        %1857 = vmatprep.subr.mxu0 0.0
        %1858 = vmatpush2.msra.mxu0 0.0
        %1859 = vmatprep.subr.mxu0 0.0
        %1860 = vmatpush2.msra.mxu0 0.0
        %1861 = vmatprep.subr.mxu0 0.0
        %1862 = vmatpush2.msra.mxu0 0.0
        %1863 = vmatprep.subr.mxu0 0.0
        %1864 = vmatpush2.msra.mxu0 0.0
        %1865 = vmatprep.mubr.f32.mxu0 0.0
        %1866 = vmatmul.mubr.f32.gmra.mxu0 %v1799
        %v1867 = vpop.f32.mrf.mxu0
        %v1868 = vadd.f32 0.0, %v1867
        %v1869 = vpop.f32.mrf.mxu0
        %1870 = vdwg.mxu0
        %1871 = vrot.lane.b32.xlu0 %v876, 104
        %v1872 = vpop.permute.xlu0 %1871
        %1873 = vrot.lane.b32.xlu0 %v876, 72
        %v1874 = vpop.permute.xlu0 %1873
        %v1875 = vsel %vm883, %v1872, 0
        %v1877 = vsel %vm883, %v1874, 0
        %1879 = vmatprep.subr.mxu0 0.0
        %1880 = vmatpush1.xpose.msra.mxu0 0.0
        %1881 = vmatprep.subr.mxu0 0.0
        %1882 = vmatpush1.xpose.msra.mxu0 0.0
        %1883 = vmatprep.subr.mxu0 0.0
        %1884 = vmatpush1.xpose.msra.mxu0 0.0
        %1885 = vmatprep.subr.mxu0 0.0
        %1886 = vmatpush1.xpose.msra.mxu0 0.0
        %1887 = vmatprep.subr.mxu0 0.0
        %1888 = vmatpush1.xpose.msra.mxu0 0.0
        %1889 = vmatprep.subr.mxu0 0.0
        %1890 = vmatpush1.xpose.msra.mxu0 0.0
        %1891 = vmatprep.subr.mxu0 0.0
        %1892 = vmatpush1.xpose.msra.mxu0 0.0
        %1893 = vmatprep.subr.mxu0 0.0
        %1894 = vmatpush1.xpose.msra.mxu0 0.0
        %1895 = vmatprep.subr.mxu0 0.0
        %1896 = vmatpush1.xpose.msra.mxu0 0.0
        %1897 = vmatprep.subr.mxu0 0.0
        %1898 = vmatpush1.xpose.msra.mxu0 0.0
        %1899 = vmatprep.subr.mxu0 0.0
        %1900 = vmatpush1.xpose.msra.mxu0 0.0
        %1901 = vmatprep.subr.mxu0 0.0
        %1902 = vmatpush1.xpose.msra.mxu0 0.0
        %1903 = vmatprep.subr.mxu0 0.0
        %1904 = vmatpush1.xpose.msra.mxu0 0.0
        %1905 = vmatprep.subr.mxu0 0.0
        %1906 = vmatpush1.xpose.msra.mxu0 0.0
        %1907 = vmatprep.subr.mxu0 0.0
        %1908 = vmatpush1.xpose.msra.mxu0 0.0
        %1909 = vmatprep.subr.mxu0 0.0
        %1910 = vmatpush1.xpose.msra.mxu0 %v1877
        %1911 = vmatprep.subr.mxu0 0.0
        %1912 = vmatpush2.xpose.msra.mxu0 0.0
        %1913 = vmatprep.subr.mxu0 0.0
        %1914 = vmatpush2.xpose.msra.mxu0 0.0
        %1915 = vmatprep.subr.mxu0 0.0
        %1916 = vmatpush2.xpose.msra.mxu0 0.0
        %1917 = vmatprep.subr.mxu0 0.0
        %1918 = vmatpush2.xpose.msra.mxu0 0.0
        %1919 = vmatprep.subr.mxu0 0.0
        %1920 = vmatpush2.xpose.msra.mxu0 0.0
        %1921 = vmatprep.subr.mxu0 0.0
        %1922 = vmatpush2.xpose.msra.mxu0 0.0
        %1923 = vmatprep.subr.mxu0 0.0
        %1924 = vmatpush2.xpose.msra.mxu0 0.0
        %1925 = vmatprep.subr.mxu0 0.0
        %1926 = vmatpush2.xpose.msra.mxu0 0.0
        %1927 = vmatprep.subr.mxu0 0.0
        %1928 = vmatpush2.xpose.msra.mxu0 0.0
        %1929 = vmatprep.subr.mxu0 0.0
        %1930 = vmatpush2.xpose.msra.mxu0 0.0
        %1931 = vmatprep.subr.mxu0 0.0
        %1932 = vmatpush2.xpose.msra.mxu0 0.0
        %1933 = vmatprep.subr.mxu0 0.0
        %1934 = vmatpush2.xpose.msra.mxu0 0.0
        %1935 = vmatprep.subr.mxu0 0.0
        %1936 = vmatpush2.xpose.msra.mxu0 0.0
        %1937 = vmatprep.subr.mxu0 0.0
        %1938 = vmatpush2.xpose.msra.mxu0 0.0
        %1939 = vmatprep.subr.mxu0 0.0
        %1940 = vmatpush2.xpose.msra.mxu0 0.0
        %1941 = vmatprep.subr.mxu0 0.0
        %1942 = vmatpush2.xpose.msra.mxu0 0.0
        %1943 = vmatprep.mubr.f32.mxu0 0.0
        %1944 = vmatmul.mubr.f32.gmra.mxu0 %v1875
        %v1945 = vpop.f32.mrf.mxu0
        %v1946 = vadd.f32 %v879, %v1945
        %v1947 = vpop.f32.mrf.mxu0
        %1948 = vdwg.mxu0
        %v1949 = vsel %vm958, %v1946, -inf
        %1950 = vmax.xlane.f32.xlu0 %v1949
        %v1951 = vpop.xlane.xlu0 %1950
        %v1952 = vsub.f32 %v1946, %v1951
        %v1953 = vmul.f32 %v1952, 1.442695
        %v1954 = vpow.pop %v1953
        %v1955 = vsel %vm958, %v1954, 0.0
        %1956 = vadd.xlane.f32.xlu0 %v1955
        %v1957 = vpop.xlane.xlu0 %1956
        %v1958 = vrcp.pop %v1957
        %v1959 = vmul.f32 %v1954, %v1958
        %1960 = vrot.lane.b32.xlu0 %v876, 40
        %v1961 = vpop.permute.xlu0 %1960
        %v1964 = vsel %vm958, %v1959, 0
        %1966 = vmatprep.subr.mxu0 0.0
        %1967 = vmatpush1.msra.mxu0 0.0
        %1968 = vmatprep.subr.mxu0 0.0
        %1969 = vmatpush1.msra.mxu0 0.0
        %1970 = vmatprep.subr.mxu0 0.0
        %1971 = vmatpush1.msra.mxu0 0.0
        %1972 = vmatprep.subr.mxu0 0.0
        %1973 = vmatpush1.msra.mxu0 0.0
        %1974 = vmatprep.subr.mxu0 0.0
        %1975 = vmatpush1.msra.mxu0 0.0
        %1976 = vmatprep.subr.mxu0 0.0
        %1977 = vmatpush1.msra.mxu0 0.0
        %1978 = vmatprep.subr.mxu0 0.0
        %1979 = vmatpush1.msra.mxu0 0.0
        %1980 = vmatprep.subr.mxu0 0.0
        %1981 = vmatpush1.msra.mxu0 0.0
        %1982 = vmatprep.subr.mxu0 0.0
        %1983 = vmatpush1.msra.mxu0 0.0
        %1984 = vmatprep.subr.mxu0 0.0
        %1985 = vmatpush1.msra.mxu0 0.0
        %1986 = vmatprep.subr.mxu0 0.0
        %1987 = vmatpush1.msra.mxu0 0.0
        %1988 = vmatprep.subr.mxu0 0.0
        %1989 = vmatpush1.msra.mxu0 0.0
        %1990 = vmatprep.subr.mxu0 0.0
        %1991 = vmatpush1.msra.mxu0 0.0
        %1992 = vmatprep.subr.mxu0 0.0
        %1993 = vmatpush1.msra.mxu0 0.0
        %1994 = vmatprep.subr.mxu0 0.0
        %1995 = vmatpush1.msra.mxu0 0.0
        %1996 = vmatprep.subr.mxu0 0.0
        %1997 = vmatpush1.msra.mxu0 %v1961
        %1998 = vmatprep.subr.mxu0 0.0
        %1999 = vmatpush2.msra.mxu0 0.0
        %2000 = vmatprep.subr.mxu0 0.0
        %2001 = vmatpush2.msra.mxu0 0.0
        %2002 = vmatprep.subr.mxu0 0.0
        %2003 = vmatpush2.msra.mxu0 0.0
        %2004 = vmatprep.subr.mxu0 0.0
        %2005 = vmatpush2.msra.mxu0 0.0
        %2006 = vmatprep.subr.mxu0 0.0
        %2007 = vmatpush2.msra.mxu0 0.0
        %2008 = vmatprep.subr.mxu0 0.0
        %2009 = vmatpush2.msra.mxu0 0.0
        %2010 = vmatprep.subr.mxu0 0.0
        %2011 = vmatpush2.msra.mxu0 0.0
        %2012 = vmatprep.subr.mxu0 0.0
        %2013 = vmatpush2.msra.mxu0 0.0
        %2014 = vmatprep.subr.mxu0 0.0
        %2015 = vmatpush2.msra.mxu0 0.0
        %2016 = vmatprep.subr.mxu0 0.0
        %2017 = vmatpush2.msra.mxu0 0.0
        %2018 = vmatprep.subr.mxu0 0.0
        %2019 = vmatpush2.msra.mxu0 0.0
        %2020 = vmatprep.subr.mxu0 0.0
        %2021 = vmatpush2.msra.mxu0 0.0
        %2022 = vmatprep.subr.mxu0 0.0
        %2023 = vmatpush2.msra.mxu0 0.0
        %2024 = vmatprep.subr.mxu0 0.0
        %2025 = vmatpush2.msra.mxu0 0.0
        %2026 = vmatprep.subr.mxu0 0.0
        %2027 = vmatpush2.msra.mxu0 0.0
        %2028 = vmatprep.subr.mxu0 0.0
        %2029 = vmatpush2.msra.mxu0 0.0
        %2030 = vmatprep.mubr.f32.mxu0 0.0
        %2031 = vmatmul.mubr.f32.gmra.mxu0 %v1964
        %v2032 = vpop.f32.mrf.mxu0
        %v2033 = vadd.f32 0.0, %v2032
        %v2034 = vpop.f32.mrf.mxu0
        %2035 = vdwg.mxu0
        %2036 = vrot.lane.b32.xlu0 %v876, 100
        %v2037 = vpop.permute.xlu0 %2036
        %2038 = vrot.lane.b32.xlu0 %v876, 68
        %v2039 = vpop.permute.xlu0 %2038
        %v2040 = vsel %vm883, %v2037, 0
        %v2042 = vsel %vm883, %v2039, 0
        %2044 = vmatprep.subr.mxu0 0.0
        %2045 = vmatpush1.xpose.msra.mxu0 0.0
        %2046 = vmatprep.subr.mxu0 0.0
        %2047 = vmatpush1.xpose.msra.mxu0 0.0
        %2048 = vmatprep.subr.mxu0 0.0
        %2049 = vmatpush1.xpose.msra.mxu0 0.0
        %2050 = vmatprep.subr.mxu0 0.0
        %2051 = vmatpush1.xpose.msra.mxu0 0.0
        %2052 = vmatprep.subr.mxu0 0.0
        %2053 = vmatpush1.xpose.msra.mxu0 0.0
        %2054 = vmatprep.subr.mxu0 0.0
        %2055 = vmatpush1.xpose.msra.mxu0 0.0
        %2056 = vmatprep.subr.mxu0 0.0
        %2057 = vmatpush1.xpose.msra.mxu0 0.0
        %2058 = vmatprep.subr.mxu0 0.0
        %2059 = vmatpush1.xpose.msra.mxu0 0.0
        %2060 = vmatprep.subr.mxu0 0.0
        %2061 = vmatpush1.xpose.msra.mxu0 0.0
        %2062 = vmatprep.subr.mxu0 0.0
        %2063 = vmatpush1.xpose.msra.mxu0 0.0
        %2064 = vmatprep.subr.mxu0 0.0
        %2065 = vmatpush1.xpose.msra.mxu0 0.0
        %2066 = vmatprep.subr.mxu0 0.0
        %2067 = vmatpush1.xpose.msra.mxu0 0.0
        %2068 = vmatprep.subr.mxu0 0.0
        %2069 = vmatpush1.xpose.msra.mxu0 0.0
        %2070 = vmatprep.subr.mxu0 0.0
        %2071 = vmatpush1.xpose.msra.mxu0 0.0
        %2072 = vmatprep.subr.mxu0 0.0
        %2073 = vmatpush1.xpose.msra.mxu0 0.0
        %2074 = vmatprep.subr.mxu0 0.0
        %2075 = vmatpush1.xpose.msra.mxu0 %v2042
        %2076 = vmatprep.subr.mxu0 0.0
        %2077 = vmatpush2.xpose.msra.mxu0 0.0
        %2078 = vmatprep.subr.mxu0 0.0
        %2079 = vmatpush2.xpose.msra.mxu0 0.0
        %2080 = vmatprep.subr.mxu0 0.0
        %2081 = vmatpush2.xpose.msra.mxu0 0.0
        %2082 = vmatprep.subr.mxu0 0.0
        %2083 = vmatpush2.xpose.msra.mxu0 0.0
        %2084 = vmatprep.subr.mxu0 0.0
        %2085 = vmatpush2.xpose.msra.mxu0 0.0
        %2086 = vmatprep.subr.mxu0 0.0
        %2087 = vmatpush2.xpose.msra.mxu0 0.0
        %2088 = vmatprep.subr.mxu0 0.0
        %2089 = vmatpush2.xpose.msra.mxu0 0.0
        %2090 = vmatprep.subr.mxu0 0.0
        %2091 = vmatpush2.xpose.msra.mxu0 0.0
        %2092 = vmatprep.subr.mxu0 0.0
        %2093 = vmatpush2.xpose.msra.mxu0 0.0
        %2094 = vmatprep.subr.mxu0 0.0
        %2095 = vmatpush2.xpose.msra.mxu0 0.0
        %2096 = vmatprep.subr.mxu0 0.0
        %2097 = vmatpush2.xpose.msra.mxu0 0.0
        %2098 = vmatprep.subr.mxu0 0.0
        %2099 = vmatpush2.xpose.msra.mxu0 0.0
        %2100 = vmatprep.subr.mxu0 0.0
        %2101 = vmatpush2.xpose.msra.mxu0 0.0
        %2102 = vmatprep.subr.mxu0 0.0
        %2103 = vmatpush2.xpose.msra.mxu0 0.0
        %2104 = vmatprep.subr.mxu0 0.0
        %2105 = vmatpush2.xpose.msra.mxu0 0.0
        %2106 = vmatprep.subr.mxu0 0.0
        %2107 = vmatpush2.xpose.msra.mxu0 0.0
        %2108 = vmatprep.mubr.f32.mxu0 0.0
        %2109 = vmatmul.mubr.f32.gmra.mxu0 %v2040
        %v2110 = vpop.f32.mrf.mxu0
        %v2111 = vadd.f32 %v879, %v2110
        %v2112 = vpop.f32.mrf.mxu0
        %2113 = vdwg.mxu0
        %v2114 = vsel %vm958, %v2111, -inf
        %2115 = vmax.xlane.f32.xlu0 %v2114
        %v2116 = vpop.xlane.xlu0 %2115
        %v2117 = vsub.f32 %v2111, %v2116
        %v2118 = vmul.f32 %v2117, 1.442695
        %v2119 = vpow.pop %v2118
        %v2120 = vsel %vm958, %v2119, 0.0
        %2121 = vadd.xlane.f32.xlu0 %v2120
        %v2122 = vpop.xlane.xlu0 %2121
        %v2123 = vrcp.pop %v2122
        %v2124 = vmul.f32 %v2119, %v2123
        %2125 = vrot.lane.b32.xlu0 %v876, 36
        %v2126 = vpop.permute.xlu0 %2125
        %v2129 = vsel %vm958, %v2124, 0
        %2131 = vmatprep.subr.mxu0 0.0
        %2132 = vmatpush1.msra.mxu0 0.0
        %2133 = vmatprep.subr.mxu0 0.0
        %2134 = vmatpush1.msra.mxu0 0.0
        %2135 = vmatprep.subr.mxu0 0.0
        %2136 = vmatpush1.msra.mxu0 0.0
        %2137 = vmatprep.subr.mxu0 0.0
        %2138 = vmatpush1.msra.mxu0 0.0
        %2139 = vmatprep.subr.mxu0 0.0
        %2140 = vmatpush1.msra.mxu0 0.0
        %2141 = vmatprep.subr.mxu0 0.0
        %2142 = vmatpush1.msra.mxu0 0.0
        %2143 = vmatprep.subr.mxu0 0.0
        %2144 = vmatpush1.msra.mxu0 0.0
        %2145 = vmatprep.subr.mxu0 0.0
        %2146 = vmatpush1.msra.mxu0 0.0
        %2147 = vmatprep.subr.mxu0 0.0
        %2148 = vmatpush1.msra.mxu0 0.0
        %2149 = vmatprep.subr.mxu0 0.0
        %2150 = vmatpush1.msra.mxu0 0.0
        %2151 = vmatprep.subr.mxu0 0.0
        %2152 = vmatpush1.msra.mxu0 0.0
        %2153 = vmatprep.subr.mxu0 0.0
        %2154 = vmatpush1.msra.mxu0 0.0
        %2155 = vmatprep.subr.mxu0 0.0
        %2156 = vmatpush1.msra.mxu0 0.0
        %2157 = vmatprep.subr.mxu0 0.0
        %2158 = vmatpush1.msra.mxu0 0.0
        %2159 = vmatprep.subr.mxu0 0.0
        %2160 = vmatpush1.msra.mxu0 0.0
        %2161 = vmatprep.subr.mxu0 0.0
        %2162 = vmatpush1.msra.mxu0 %v2126
        %2163 = vmatprep.subr.mxu0 0.0
        %2164 = vmatpush2.msra.mxu0 0.0
        %2165 = vmatprep.subr.mxu0 0.0
        %2166 = vmatpush2.msra.mxu0 0.0
        %2167 = vmatprep.subr.mxu0 0.0
        %2168 = vmatpush2.msra.mxu0 0.0
        %2169 = vmatprep.subr.mxu0 0.0
        %2170 = vmatpush2.msra.mxu0 0.0
        %2171 = vmatprep.subr.mxu0 0.0
        %2172 = vmatpush2.msra.mxu0 0.0
        %2173 = vmatprep.subr.mxu0 0.0
        %2174 = vmatpush2.msra.mxu0 0.0
        %2175 = vmatprep.subr.mxu0 0.0
        %2176 = vmatpush2.msra.mxu0 0.0
        %2177 = vmatprep.subr.mxu0 0.0
        %2178 = vmatpush2.msra.mxu0 0.0
        %2179 = vmatprep.subr.mxu0 0.0
        %2180 = vmatpush2.msra.mxu0 0.0
        %2181 = vmatprep.subr.mxu0 0.0
        %2182 = vmatpush2.msra.mxu0 0.0
        %2183 = vmatprep.subr.mxu0 0.0
        %2184 = vmatpush2.msra.mxu0 0.0
        %2185 = vmatprep.subr.mxu0 0.0
        %2186 = vmatpush2.msra.mxu0 0.0
        %2187 = vmatprep.subr.mxu0 0.0
        %2188 = vmatpush2.msra.mxu0 0.0
        %2189 = vmatprep.subr.mxu0 0.0
        %2190 = vmatpush2.msra.mxu0 0.0
        %2191 = vmatprep.subr.mxu0 0.0
        %2192 = vmatpush2.msra.mxu0 0.0
        %2193 = vmatprep.subr.mxu0 0.0
        %2194 = vmatpush2.msra.mxu0 0.0
        %2195 = vmatprep.mubr.f32.mxu0 0.0
        %2196 = vmatmul.mubr.f32.gmra.mxu0 %v2129
        %v2197 = vpop.f32.mrf.mxu0
        %v2198 = vadd.f32 0.0, %v2197
        %v2199 = vpop.f32.mrf.mxu0
        %2200 = vdwg.mxu0
        %2202 = vrot.lane.b32.xlu0 %v1208, 4
        %v2203 = vpop.permute.xlu0 %2202
        %2206 = vrot.lane.b32.xlu0 %v1373, 8
        %v2207 = vpop.permute.xlu0 %2206
        %2210 = vrot.lane.b32.xlu0 %v1538, 12
        %v2211 = vpop.permute.xlu0 %2210
        %2214 = vrot.lane.b32.xlu0 %v1703, 16
        %v2215 = vpop.permute.xlu0 %2214
        %2218 = vrot.lane.b32.xlu0 %v1868, 20
        %v2219 = vpop.permute.xlu0 %2218
        %2222 = vrot.lane.b32.xlu0 %v2033, 24
        %v2223 = vpop.permute.xlu0 %2222
        %2226 = vrot.lane.b32.xlu0 %v2198, 28
        %v2227 = vpop.permute.xlu0 %2226
        %v2229 = vsel %vm883, %v1043, %v2203
        %v2230 = vsel %vm958, %v2229, %v2207
        %vm2231 = vcmask 97280
        %v2232 = vsel %vm2231, %v2230, %v2211
        %vm2233 = vcmask 130048
        %v2234 = vsel %vm2233, %v2232, %v2215
        %vm2235 = vcmask 162816
        %v2236 = vsel %vm2235, %v2234, %v2219
        %vm2237 = vcmask 195584
        %v2238 = vsel %vm2237, %v2236, %v2223
        %vm2239 = vcmask 228352
        %v2240 = vsel %vm2239, %v2238, %v2227
        %v2241 = vld [vmem:[%s7] sm:$0xff]
        %v2242 = vld [vmem:[%s7 + $0x8] sm:$0xff]
        %v2243 = vld [vmem:[%s7 + $0x10] sm:$0xff]
        %v2244 = vld [vmem:[%s7 + $0x18] sm:$0xff]
        %v2246 = vsel %vm773, %v2240, 0
        %2248 = vmatprep.subr.mxu0 0.0
        %2249 = vmatpush1.msra.mxu0 0.0
        %2250 = vmatprep.subr.mxu0 0.0
        %2251 = vmatpush1.msra.mxu0 0.0
        %2252 = vmatprep.subr.mxu0 0.0
        %2253 = vmatpush1.msra.mxu0 0.0
        %2254 = vmatprep.subr.mxu0 0.0
        %2255 = vmatpush1.msra.mxu0 0.0
        %2256 = vmatprep.subr.mxu0 0.0
        %2257 = vmatpush1.msra.mxu0 0.0
        %2258 = vmatprep.subr.mxu0 0.0
        %2259 = vmatpush1.msra.mxu0 0.0
        %2260 = vmatprep.subr.mxu0 0.0
        %2261 = vmatpush1.msra.mxu0 0.0
        %2262 = vmatprep.subr.mxu0 0.0
        %2263 = vmatpush1.msra.mxu0 0.0
        %2264 = vmatprep.subr.mxu0 0.0
        %2265 = vmatpush1.msra.mxu0 0.0
        %2266 = vmatprep.subr.mxu0 0.0
        %2267 = vmatpush1.msra.mxu0 0.0
        %2268 = vmatprep.subr.mxu0 0.0
        %2269 = vmatpush1.msra.mxu0 0.0
        %2270 = vmatprep.subr.mxu0 0.0
        %2271 = vmatpush1.msra.mxu0 0.0
        %2272 = vmatprep.subr.mxu0 0.0
        %2273 = vmatpush1.msra.mxu0 %v2244
        %2274 = vmatprep.subr.mxu0 0.0
        %2275 = vmatpush1.msra.mxu0 %v2243
        %2276 = vmatprep.subr.mxu0 0.0
        %2277 = vmatpush1.msra.mxu0 %v2242
        %2278 = vmatprep.subr.mxu0 0.0
        %2279 = vmatpush1.msra.mxu0 %v2241
        %2280 = vmatprep.subr.mxu0 0.0
        %2281 = vmatpush2.msra.mxu0 0.0
        %2282 = vmatprep.subr.mxu0 0.0
        %2283 = vmatpush2.msra.mxu0 0.0
        %2284 = vmatprep.subr.mxu0 0.0
        %2285 = vmatpush2.msra.mxu0 0.0
        %2286 = vmatprep.subr.mxu0 0.0
        %2287 = vmatpush2.msra.mxu0 0.0
        %2288 = vmatprep.subr.mxu0 0.0
        %2289 = vmatpush2.msra.mxu0 0.0
        %2290 = vmatprep.subr.mxu0 0.0
        %2291 = vmatpush2.msra.mxu0 0.0
        %2292 = vmatprep.subr.mxu0 0.0
        %2293 = vmatpush2.msra.mxu0 0.0
        %2294 = vmatprep.subr.mxu0 0.0
        %2295 = vmatpush2.msra.mxu0 0.0
        %2296 = vmatprep.subr.mxu0 0.0
        %2297 = vmatpush2.msra.mxu0 0.0
        %2298 = vmatprep.subr.mxu0 0.0
        %2299 = vmatpush2.msra.mxu0 0.0
        %2300 = vmatprep.subr.mxu0 0.0
        %2301 = vmatpush2.msra.mxu0 0.0
        %2302 = vmatprep.subr.mxu0 0.0
        %2303 = vmatpush2.msra.mxu0 0.0
        %2304 = vmatprep.subr.mxu0 0.0
        %2305 = vmatpush2.msra.mxu0 0.0
        %2306 = vmatprep.subr.mxu0 0.0
        %2307 = vmatpush2.msra.mxu0 0.0
        %2308 = vmatprep.subr.mxu0 0.0
        %2309 = vmatpush2.msra.mxu0 0.0
        %2310 = vmatprep.subr.mxu0 0.0
        %2311 = vmatpush2.msra.mxu0 0.0
        %2312 = vmatprep.mubr.f32.mxu0 0.0
        %2313 = vmatmul.mubr.f32.gmra.mxu0 %v2246
        %v2314 = vpop.f32.mrf.mxu0
        %v2315 = vadd.f32 0.0, %v2314
        %v2316 = vpop.f32.mrf.mxu0
        %2317 = vdwg.mxu0
        %v2318 = vadd.f32 %v769, %v2315
        %v2319 = vld [vmem:[%s8] sm:$0x1]
        %v2320 = vld [vmem:[%s9] sm:$0x1]
        %v2321 = vsel %vm773, %v2318, 0.0
        %2322 = vadd.xlane.f32.xlu0 %v2321
        %v2323 = vpop.xlane.xlu0 %2322
        %v2324 = vmul.f32 %v2323, %v777
        %v2325 = vsub.f32 %v2318, %v2324
        %v2326 = vmul.f32 %v2325, %v2325
        %v2327 = vsel %vm773, %v2326, 0.0
        %2328 = vadd.xlane.f32.xlu0 %v2327
        %v2329 = vpop.xlane.xlu0 %2328
        %v2330 = vmul.f32 %v2329, %v777
        %v2331 = vadd.f32 %v2330, 1e-06
        %v2332 = vrsqrt.pop %v2331
        %v2333 = vmul.f32 %v2325, %v2332
        %v2335 = vlaneseq
        %v2336 = vshrl.u32 %v2335, 7
        %v2337 = vsub.s32 0, %v2336
        %v2338 = vrot.slane %v2319, %v2337
        %v2340 = vmul.f32 %v2333, %v2338
        %v2342 = vlaneseq
        %v2343 = vshrl.u32 %v2342, 7
        %v2344 = vsub.s32 0, %v2343
        %v2345 = vrot.slane %v2320, %v2344
        %v2347 = vadd.f32 %v2340, %v2345
        %v2348 = vld [vmem:[%s10] sm:$0xff]
        %v2349 = vld [vmem:[%s10 + $0x8] sm:$0xff]
        %v2350 = vld [vmem:[%s10 + $0x10] sm:$0xff]
        %v2351 = vld [vmem:[%s10 + $0x18] sm:$0xff]
        %v2353 = vsel %vm773, %v2347, 0
        %2355 = vmatprep.subr.mxu0 0.0
        %2356 = vmatpush1.msra.mxu0 0.0
        %2357 = vmatprep.subr.mxu0 0.0
        %2358 = vmatpush1.msra.mxu0 0.0
        %2359 = vmatprep.subr.mxu0 0.0
        %2360 = vmatpush1.msra.mxu0 0.0
        %2361 = vmatprep.subr.mxu0 0.0
        %2362 = vmatpush1.msra.mxu0 0.0
        %2363 = vmatprep.subr.mxu0 0.0
        %2364 = vmatpush1.msra.mxu0 0.0
        %2365 = vmatprep.subr.mxu0 0.0
        %2366 = vmatpush1.msra.mxu0 0.0
        %2367 = vmatprep.subr.mxu0 0.0
        %2368 = vmatpush1.msra.mxu0 0.0
        %2369 = vmatprep.subr.mxu0 0.0
        %2370 = vmatpush1.msra.mxu0 0.0
        %2371 = vmatprep.subr.mxu0 0.0
        %2372 = vmatpush1.msra.mxu0 0.0
        %2373 = vmatprep.subr.mxu0 0.0
        %2374 = vmatpush1.msra.mxu0 0.0
        %2375 = vmatprep.subr.mxu0 0.0
        %2376 = vmatpush1.msra.mxu0 0.0
        %2377 = vmatprep.subr.mxu0 0.0
        %2378 = vmatpush1.msra.mxu0 0.0
        %2379 = vmatprep.subr.mxu0 0.0
        %2380 = vmatpush1.msra.mxu0 %v2351
        %2381 = vmatprep.subr.mxu0 0.0
        %2382 = vmatpush1.msra.mxu0 %v2350
        %2383 = vmatprep.subr.mxu0 0.0
        %2384 = vmatpush1.msra.mxu0 %v2349
        %2385 = vmatprep.subr.mxu0 0.0
        %2386 = vmatpush1.msra.mxu0 %v2348
        %2387 = vmatprep.subr.mxu0 0.0
        %2388 = vmatpush2.msra.mxu0 0.0
        %2389 = vmatprep.subr.mxu0 0.0
        %2390 = vmatpush2.msra.mxu0 0.0
        %2391 = vmatprep.subr.mxu0 0.0
        %2392 = vmatpush2.msra.mxu0 0.0
        %2393 = vmatprep.subr.mxu0 0.0
        %2394 = vmatpush2.msra.mxu0 0.0
        %2395 = vmatprep.subr.mxu0 0.0
        %2396 = vmatpush2.msra.mxu0 0.0
        %2397 = vmatprep.subr.mxu0 0.0
        %2398 = vmatpush2.msra.mxu0 0.0
        %2399 = vmatprep.subr.mxu0 0.0
        %2400 = vmatpush2.msra.mxu0 0.0
        %2401 = vmatprep.subr.mxu0 0.0
        %2402 = vmatpush2.msra.mxu0 0.0
        %2403 = vmatprep.subr.mxu0 0.0
        %2404 = vmatpush2.msra.mxu0 0.0
        %2405 = vmatprep.subr.mxu0 0.0
        %2406 = vmatpush2.msra.mxu0 0.0
        %2407 = vmatprep.subr.mxu0 0.0
        %2408 = vmatpush2.msra.mxu0 0.0
        %2409 = vmatprep.subr.mxu0 0.0
        %2410 = vmatpush2.msra.mxu0 0.0
        %2411 = vmatprep.subr.mxu0 0.0
        %2412 = vmatpush2.msra.mxu0 0.0
        %2413 = vmatprep.subr.mxu0 0.0
        %2414 = vmatpush2.msra.mxu0 0.0
        %2415 = vmatprep.subr.mxu0 0.0
        %2416 = vmatpush2.msra.mxu0 0.0
        %2417 = vmatprep.subr.mxu0 0.0
        %2418 = vmatpush2.msra.mxu0 0.0
        %2419 = vmatprep.mubr.f32.mxu0 0.0
        %2420 = vmatmul.mubr.f32.gmra.mxu0 %v2353
        %v2421 = vpop.f32.mrf.mxu0
        %v2422 = vadd.f32 0.0, %v2421
        %v2423 = vpop.f32.mrf.mxu0
        %2424 = vdwg.mxu0
        %v2425 = vld [vmem:[#allocation10] sm:$0xff]
        %v2426 = vld [vmem:[#allocation10 + $0x8] sm:$0xff]
        %v2427 = vld [vmem:[#allocation10 + $0x10] sm:$0xff]
        %v2428 = vld [vmem:[#allocation10 + $0x18] sm:$0xff]
        %v2430 = vsel %vm773, %v770, 0
        %2432 = vmatprep.subr.mxu0 0.0
        %2433 = vmatpush1.msra.mxu0 0.0
        %2434 = vmatprep.subr.mxu0 0.0
        %2435 = vmatpush1.msra.mxu0 0.0
        %2436 = vmatprep.subr.mxu0 0.0
        %2437 = vmatpush1.msra.mxu0 0.0
        %2438 = vmatprep.subr.mxu0 0.0
        %2439 = vmatpush1.msra.mxu0 0.0
        %2440 = vmatprep.subr.mxu0 0.0
        %2441 = vmatpush1.msra.mxu0 0.0
        %2442 = vmatprep.subr.mxu0 0.0
        %2443 = vmatpush1.msra.mxu0 0.0
        %2444 = vmatprep.subr.mxu0 0.0
        %2445 = vmatpush1.msra.mxu0 0.0
        %2446 = vmatprep.subr.mxu0 0.0
        %2447 = vmatpush1.msra.mxu0 0.0
        %2448 = vmatprep.subr.mxu0 0.0
        %2449 = vmatpush1.msra.mxu0 0.0
        %2450 = vmatprep.subr.mxu0 0.0
        %2451 = vmatpush1.msra.mxu0 0.0
        %2452 = vmatprep.subr.mxu0 0.0
        %2453 = vmatpush1.msra.mxu0 0.0
        %2454 = vmatprep.subr.mxu0 0.0
        %2455 = vmatpush1.msra.mxu0 0.0
        %2456 = vmatprep.subr.mxu0 0.0
        %2457 = vmatpush1.msra.mxu0 %v2428
        %2458 = vmatprep.subr.mxu0 0.0
        %2459 = vmatpush1.msra.mxu0 %v2427
        %2460 = vmatprep.subr.mxu0 0.0
        %2461 = vmatpush1.msra.mxu0 %v2426
        %2462 = vmatprep.subr.mxu0 0.0
        %2463 = vmatpush1.msra.mxu0 %v2425
        %2464 = vmatprep.subr.mxu0 0.0
        %2465 = vmatpush2.msra.mxu0 0.0
        %2466 = vmatprep.subr.mxu0 0.0
        %2467 = vmatpush2.msra.mxu0 0.0
        %2468 = vmatprep.subr.mxu0 0.0
        %2469 = vmatpush2.msra.mxu0 0.0
        %2470 = vmatprep.subr.mxu0 0.0
        %2471 = vmatpush2.msra.mxu0 0.0
        %2472 = vmatprep.subr.mxu0 0.0
        %2473 = vmatpush2.msra.mxu0 0.0
        %2474 = vmatprep.subr.mxu0 0.0
        %2475 = vmatpush2.msra.mxu0 0.0
        %2476 = vmatprep.subr.mxu0 0.0
        %2477 = vmatpush2.msra.mxu0 0.0
        %2478 = vmatprep.subr.mxu0 0.0
        %2479 = vmatpush2.msra.mxu0 0.0
        %2480 = vmatprep.subr.mxu0 0.0
        %2481 = vmatpush2.msra.mxu0 0.0
        %2482 = vmatprep.subr.mxu0 0.0
        %2483 = vmatpush2.msra.mxu0 0.0
        %2484 = vmatprep.subr.mxu0 0.0
        %2485 = vmatpush2.msra.mxu0 0.0
        %2486 = vmatprep.subr.mxu0 0.0
        %2487 = vmatpush2.msra.mxu0 0.0
        %2488 = vmatprep.subr.mxu0 0.0
        %2489 = vmatpush2.msra.mxu0 0.0
        %2490 = vmatprep.subr.mxu0 0.0
        %2491 = vmatpush2.msra.mxu0 0.0
        %2492 = vmatprep.subr.mxu0 0.0
        %2493 = vmatpush2.msra.mxu0 0.0
        %2494 = vmatprep.subr.mxu0 0.0
        %2495 = vmatpush2.msra.mxu0 0.0
        %2496 = vmatprep.mubr.f32.mxu0 0.0
        %2497 = vmatmul.mubr.f32.gmra.mxu0 %v2430
        %v2498 = vpop.f32.mrf.mxu0
        %v2499 = vadd.f32 0.0, %v2498
        %v2500 = vpop.f32.mrf.mxu0
        %2501 = vdwg.mxu0
        %v2502 = vld [vmem:[%s687] sm:$0xff]
        %v2504 = vsel %vm883, %v2422, 0
        %v2507 = vsel %vm883, %v2499, 0
        %2509 = vmatprep.subr.mxu0 0.0
        %2510 = vmatpush1.xpose.msra.mxu0 0.0
        %2511 = vmatprep.subr.mxu0 0.0
        %2512 = vmatpush1.xpose.msra.mxu0 0.0
        %2513 = vmatprep.subr.mxu0 0.0
        %2514 = vmatpush1.xpose.msra.mxu0 0.0
        %2515 = vmatprep.subr.mxu0 0.0
        %2516 = vmatpush1.xpose.msra.mxu0 0.0
        %2517 = vmatprep.subr.mxu0 0.0
        %2518 = vmatpush1.xpose.msra.mxu0 0.0
        %2519 = vmatprep.subr.mxu0 0.0
        %2520 = vmatpush1.xpose.msra.mxu0 0.0
        %2521 = vmatprep.subr.mxu0 0.0
        %2522 = vmatpush1.xpose.msra.mxu0 0.0
        %2523 = vmatprep.subr.mxu0 0.0
        %2524 = vmatpush1.xpose.msra.mxu0 0.0
        %2525 = vmatprep.subr.mxu0 0.0
        %2526 = vmatpush1.xpose.msra.mxu0 0.0
        %2527 = vmatprep.subr.mxu0 0.0
        %2528 = vmatpush1.xpose.msra.mxu0 0.0
        %2529 = vmatprep.subr.mxu0 0.0
        %2530 = vmatpush1.xpose.msra.mxu0 0.0
        %2531 = vmatprep.subr.mxu0 0.0
        %2532 = vmatpush1.xpose.msra.mxu0 0.0
        %2533 = vmatprep.subr.mxu0 0.0
        %2534 = vmatpush1.xpose.msra.mxu0 0.0
        %2535 = vmatprep.subr.mxu0 0.0
        %2536 = vmatpush1.xpose.msra.mxu0 0.0
        %2537 = vmatprep.subr.mxu0 0.0
        %2538 = vmatpush1.xpose.msra.mxu0 0.0
        %2539 = vmatprep.subr.mxu0 0.0
        %2540 = vmatpush1.xpose.msra.mxu0 %v2507
        %2541 = vmatprep.subr.mxu0 0.0
        %2542 = vmatpush2.xpose.msra.mxu0 0.0
        %2543 = vmatprep.subr.mxu0 0.0
        %2544 = vmatpush2.xpose.msra.mxu0 0.0
        %2545 = vmatprep.subr.mxu0 0.0
        %2546 = vmatpush2.xpose.msra.mxu0 0.0
        %2547 = vmatprep.subr.mxu0 0.0
        %2548 = vmatpush2.xpose.msra.mxu0 0.0
        %2549 = vmatprep.subr.mxu0 0.0
        %2550 = vmatpush2.xpose.msra.mxu0 0.0
        %2551 = vmatprep.subr.mxu0 0.0
        %2552 = vmatpush2.xpose.msra.mxu0 0.0
        %2553 = vmatprep.subr.mxu0 0.0
        %2554 = vmatpush2.xpose.msra.mxu0 0.0
        %2555 = vmatprep.subr.mxu0 0.0
        %2556 = vmatpush2.xpose.msra.mxu0 0.0
        %2557 = vmatprep.subr.mxu0 0.0
        %2558 = vmatpush2.xpose.msra.mxu0 0.0
        %2559 = vmatprep.subr.mxu0 0.0
        %2560 = vmatpush2.xpose.msra.mxu0 0.0
        %2561 = vmatprep.subr.mxu0 0.0
        %2562 = vmatpush2.xpose.msra.mxu0 0.0
        %2563 = vmatprep.subr.mxu0 0.0
        %2564 = vmatpush2.xpose.msra.mxu0 0.0
        %2565 = vmatprep.subr.mxu0 0.0
        %2566 = vmatpush2.xpose.msra.mxu0 0.0
        %2567 = vmatprep.subr.mxu0 0.0
        %2568 = vmatpush2.xpose.msra.mxu0 0.0
        %2569 = vmatprep.subr.mxu0 0.0
        %2570 = vmatpush2.xpose.msra.mxu0 0.0
        %2571 = vmatprep.subr.mxu0 0.0
        %2572 = vmatpush2.xpose.msra.mxu0 0.0
        %2573 = vmatprep.mubr.f32.mxu0 0.0
        %2574 = vmatmul.mubr.f32.gmra.mxu0 %v2504
        %v2575 = vpop.f32.mrf.mxu0
        %v2576 = vadd.f32 %v2502, %v2575
        %v2577 = vpop.f32.mrf.mxu0
        %2578 = vdwg.mxu0
        %v2579 = vsel %vm958, %v2576, -inf
        %2580 = vmax.xlane.f32.xlu0 %v2579
        %v2581 = vpop.xlane.xlu0 %2580
        %v2582 = vsub.f32 %v2576, %v2581
        %v2583 = vmul.f32 %v2582, 1.442695
        %v2584 = vpow.pop %v2583
        %v2585 = vsel %vm958, %v2584, 0.0
        %2586 = vadd.xlane.f32.xlu0 %v2585
        %v2587 = vpop.xlane.xlu0 %2586
        %v2588 = vrcp.pop %v2587
        %v2589 = vmul.f32 %v2584, %v2588
        %2590 = vrot.lane.b32.xlu0 %v2499, 96
        %v2591 = vpop.permute.xlu0 %2590
        %v2594 = vsel %vm958, %v2589, 0
        %2596 = vmatprep.subr.mxu0 0.0
        %2597 = vmatpush1.msra.mxu0 0.0
        %2598 = vmatprep.subr.mxu0 0.0
        %2599 = vmatpush1.msra.mxu0 0.0
        %2600 = vmatprep.subr.mxu0 0.0
        %2601 = vmatpush1.msra.mxu0 0.0
        %2602 = vmatprep.subr.mxu0 0.0
        %2603 = vmatpush1.msra.mxu0 0.0
        %2604 = vmatprep.subr.mxu0 0.0
        %2605 = vmatpush1.msra.mxu0 0.0
        %2606 = vmatprep.subr.mxu0 0.0
        %2607 = vmatpush1.msra.mxu0 0.0
        %2608 = vmatprep.subr.mxu0 0.0
        %2609 = vmatpush1.msra.mxu0 0.0
        %2610 = vmatprep.subr.mxu0 0.0
        %2611 = vmatpush1.msra.mxu0 0.0
        %2612 = vmatprep.subr.mxu0 0.0
        %2613 = vmatpush1.msra.mxu0 0.0
        %2614 = vmatprep.subr.mxu0 0.0
        %2615 = vmatpush1.msra.mxu0 0.0
        %2616 = vmatprep.subr.mxu0 0.0
        %2617 = vmatpush1.msra.mxu0 0.0
        %2618 = vmatprep.subr.mxu0 0.0
        %2619 = vmatpush1.msra.mxu0 0.0
        %2620 = vmatprep.subr.mxu0 0.0
        %2621 = vmatpush1.msra.mxu0 0.0
        %2622 = vmatprep.subr.mxu0 0.0
        %2623 = vmatpush1.msra.mxu0 0.0
        %2624 = vmatprep.subr.mxu0 0.0
        %2625 = vmatpush1.msra.mxu0 0.0
        %2626 = vmatprep.subr.mxu0 0.0
        %2627 = vmatpush1.msra.mxu0 %v2591
        %2628 = vmatprep.subr.mxu0 0.0
        %2629 = vmatpush2.msra.mxu0 0.0
        %2630 = vmatprep.subr.mxu0 0.0
        %2631 = vmatpush2.msra.mxu0 0.0
        %2632 = vmatprep.subr.mxu0 0.0
        %2633 = vmatpush2.msra.mxu0 0.0
        %2634 = vmatprep.subr.mxu0 0.0
        %2635 = vmatpush2.msra.mxu0 0.0
        %2636 = vmatprep.subr.mxu0 0.0
        %2637 = vmatpush2.msra.mxu0 0.0
        %2638 = vmatprep.subr.mxu0 0.0
        %2639 = vmatpush2.msra.mxu0 0.0
        %2640 = vmatprep.subr.mxu0 0.0
        %2641 = vmatpush2.msra.mxu0 0.0
        %2642 = vmatprep.subr.mxu0 0.0
        %2643 = vmatpush2.msra.mxu0 0.0
        %2644 = vmatprep.subr.mxu0 0.0
        %2645 = vmatpush2.msra.mxu0 0.0
        %2646 = vmatprep.subr.mxu0 0.0
        %2647 = vmatpush2.msra.mxu0 0.0
        %2648 = vmatprep.subr.mxu0 0.0
        %2649 = vmatpush2.msra.mxu0 0.0
        %2650 = vmatprep.subr.mxu0 0.0
        %2651 = vmatpush2.msra.mxu0 0.0
        %2652 = vmatprep.subr.mxu0 0.0
        %2653 = vmatpush2.msra.mxu0 0.0
        %2654 = vmatprep.subr.mxu0 0.0
        %2655 = vmatpush2.msra.mxu0 0.0
        %2656 = vmatprep.subr.mxu0 0.0
        %2657 = vmatpush2.msra.mxu0 0.0
        %2658 = vmatprep.subr.mxu0 0.0
        %2659 = vmatpush2.msra.mxu0 0.0
        %2660 = vmatprep.mubr.f32.mxu0 0.0
        %2661 = vmatmul.mubr.f32.gmra.mxu0 %v2594
        %v2662 = vpop.f32.mrf.mxu0
        %v2663 = vadd.f32 0.0, %v2662
        %v2664 = vpop.f32.mrf.mxu0
        %2665 = vdwg.mxu0
        %2666 = vrot.lane.b32.xlu0 %v2422, 124
        %v2667 = vpop.permute.xlu0 %2666
        %2668 = vrot.lane.b32.xlu0 %v2499, 124
        %v2669 = vpop.permute.xlu0 %2668
        %v2670 = vsel %vm883, %v2667, 0
        %v2672 = vsel %vm883, %v2669, 0
        %2674 = vmatprep.subr.mxu0 0.0
        %2675 = vmatpush1.xpose.msra.mxu0 0.0
        %2676 = vmatprep.subr.mxu0 0.0
        %2677 = vmatpush1.xpose.msra.mxu0 0.0
        %2678 = vmatprep.subr.mxu0 0.0
        %2679 = vmatpush1.xpose.msra.mxu0 0.0
        %2680 = vmatprep.subr.mxu0 0.0
        %2681 = vmatpush1.xpose.msra.mxu0 0.0
        %2682 = vmatprep.subr.mxu0 0.0
        %2683 = vmatpush1.xpose.msra.mxu0 0.0
        %2684 = vmatprep.subr.mxu0 0.0
        %2685 = vmatpush1.xpose.msra.mxu0 0.0
        %2686 = vmatprep.subr.mxu0 0.0
        %2687 = vmatpush1.xpose.msra.mxu0 0.0
        %2688 = vmatprep.subr.mxu0 0.0
        %2689 = vmatpush1.xpose.msra.mxu0 0.0
        %2690 = vmatprep.subr.mxu0 0.0
        %2691 = vmatpush1.xpose.msra.mxu0 0.0
        %2692 = vmatprep.subr.mxu0 0.0
        %2693 = vmatpush1.xpose.msra.mxu0 0.0
        %2694 = vmatprep.subr.mxu0 0.0
        %2695 = vmatpush1.xpose.msra.mxu0 0.0
        %2696 = vmatprep.subr.mxu0 0.0
        %2697 = vmatpush1.xpose.msra.mxu0 0.0
        %2698 = vmatprep.subr.mxu0 0.0
        %2699 = vmatpush1.xpose.msra.mxu0 0.0
        %2700 = vmatprep.subr.mxu0 0.0
        %2701 = vmatpush1.xpose.msra.mxu0 0.0
        %2702 = vmatprep.subr.mxu0 0.0
        %2703 = vmatpush1.xpose.msra.mxu0 0.0
        %2704 = vmatprep.subr.mxu0 0.0
        %2705 = vmatpush1.xpose.msra.mxu0 %v2672
        %2706 = vmatprep.subr.mxu0 0.0
        %2707 = vmatpush2.xpose.msra.mxu0 0.0
        %2708 = vmatprep.subr.mxu0 0.0
        %2709 = vmatpush2.xpose.msra.mxu0 0.0
        %2710 = vmatprep.subr.mxu0 0.0
        %2711 = vmatpush2.xpose.msra.mxu0 0.0
        %2712 = vmatprep.subr.mxu0 0.0
        %2713 = vmatpush2.xpose.msra.mxu0 0.0
        %2714 = vmatprep.subr.mxu0 0.0
        %2715 = vmatpush2.xpose.msra.mxu0 0.0
        %2716 = vmatprep.subr.mxu0 0.0
        %2717 = vmatpush2.xpose.msra.mxu0 0.0
        %2718 = vmatprep.subr.mxu0 0.0
        %2719 = vmatpush2.xpose.msra.mxu0 0.0
        %2720 = vmatprep.subr.mxu0 0.0
        %2721 = vmatpush2.xpose.msra.mxu0 0.0
        %2722 = vmatprep.subr.mxu0 0.0
        %2723 = vmatpush2.xpose.msra.mxu0 0.0
        %2724 = vmatprep.subr.mxu0 0.0
        %2725 = vmatpush2.xpose.msra.mxu0 0.0
        %2726 = vmatprep.subr.mxu0 0.0
        %2727 = vmatpush2.xpose.msra.mxu0 0.0
        %2728 = vmatprep.subr.mxu0 0.0
        %2729 = vmatpush2.xpose.msra.mxu0 0.0
        %2730 = vmatprep.subr.mxu0 0.0
        %2731 = vmatpush2.xpose.msra.mxu0 0.0
        %2732 = vmatprep.subr.mxu0 0.0
        %2733 = vmatpush2.xpose.msra.mxu0 0.0
        %2734 = vmatprep.subr.mxu0 0.0
        %2735 = vmatpush2.xpose.msra.mxu0 0.0
        %2736 = vmatprep.subr.mxu0 0.0
        %2737 = vmatpush2.xpose.msra.mxu0 0.0
        %2738 = vmatprep.mubr.f32.mxu0 0.0
        %2739 = vmatmul.mubr.f32.gmra.mxu0 %v2670
        %v2740 = vpop.f32.mrf.mxu0
        %v2741 = vadd.f32 %v2502, %v2740
        %v2742 = vpop.f32.mrf.mxu0
        %2743 = vdwg.mxu0
        %v2744 = vsel %vm958, %v2741, -inf
        %2745 = vmax.xlane.f32.xlu0 %v2744
        %v2746 = vpop.xlane.xlu0 %2745
        %v2747 = vsub.f32 %v2741, %v2746
        %v2748 = vmul.f32 %v2747, 1.442695
        %v2749 = vpow.pop %v2748
        %v2750 = vsel %vm958, %v2749, 0.0
        %2751 = vadd.xlane.f32.xlu0 %v2750
        %v2752 = vpop.xlane.xlu0 %2751
        %v2753 = vrcp.pop %v2752
        %v2754 = vmul.f32 %v2749, %v2753
        %2755 = vrot.lane.b32.xlu0 %v2499, 92
        %v2756 = vpop.permute.xlu0 %2755
        %v2759 = vsel %vm958, %v2754, 0
        %2761 = vmatprep.subr.mxu0 0.0
        %2762 = vmatpush1.msra.mxu0 0.0
        %2763 = vmatprep.subr.mxu0 0.0
        %2764 = vmatpush1.msra.mxu0 0.0
        %2765 = vmatprep.subr.mxu0 0.0
        %2766 = vmatpush1.msra.mxu0 0.0
        %2767 = vmatprep.subr.mxu0 0.0
        %2768 = vmatpush1.msra.mxu0 0.0
        %2769 = vmatprep.subr.mxu0 0.0
        %2770 = vmatpush1.msra.mxu0 0.0
        %2771 = vmatprep.subr.mxu0 0.0
        %2772 = vmatpush1.msra.mxu0 0.0
        %2773 = vmatprep.subr.mxu0 0.0
        %2774 = vmatpush1.msra.mxu0 0.0
        %2775 = vmatprep.subr.mxu0 0.0
        %2776 = vmatpush1.msra.mxu0 0.0
        %2777 = vmatprep.subr.mxu0 0.0
        %2778 = vmatpush1.msra.mxu0 0.0
        %2779 = vmatprep.subr.mxu0 0.0
        %2780 = vmatpush1.msra.mxu0 0.0
        %2781 = vmatprep.subr.mxu0 0.0
        %2782 = vmatpush1.msra.mxu0 0.0
        %2783 = vmatprep.subr.mxu0 0.0
        %2784 = vmatpush1.msra.mxu0 0.0
        %2785 = vmatprep.subr.mxu0 0.0
        %2786 = vmatpush1.msra.mxu0 0.0
        %2787 = vmatprep.subr.mxu0 0.0
        %2788 = vmatpush1.msra.mxu0 0.0
        %2789 = vmatprep.subr.mxu0 0.0
        %2790 = vmatpush1.msra.mxu0 0.0
        %2791 = vmatprep.subr.mxu0 0.0
        %2792 = vmatpush1.msra.mxu0 %v2756
        %2793 = vmatprep.subr.mxu0 0.0
        %2794 = vmatpush2.msra.mxu0 0.0
        %2795 = vmatprep.subr.mxu0 0.0
        %2796 = vmatpush2.msra.mxu0 0.0
        %2797 = vmatprep.subr.mxu0 0.0
        %2798 = vmatpush2.msra.mxu0 0.0
        %2799 = vmatprep.subr.mxu0 0.0
        %2800 = vmatpush2.msra.mxu0 0.0
        %2801 = vmatprep.subr.mxu0 0.0
        %2802 = vmatpush2.msra.mxu0 0.0
        %2803 = vmatprep.subr.mxu0 0.0
        %2804 = vmatpush2.msra.mxu0 0.0
        %2805 = vmatprep.subr.mxu0 0.0
        %2806 = vmatpush2.msra.mxu0 0.0
        %2807 = vmatprep.subr.mxu0 0.0
        %2808 = vmatpush2.msra.mxu0 0.0
        %2809 = vmatprep.subr.mxu0 0.0
        %2810 = vmatpush2.msra.mxu0 0.0
        %2811 = vmatprep.subr.mxu0 0.0
        %2812 = vmatpush2.msra.mxu0 0.0
        %2813 = vmatprep.subr.mxu0 0.0
        %2814 = vmatpush2.msra.mxu0 0.0
        %2815 = vmatprep.subr.mxu0 0.0
        %2816 = vmatpush2.msra.mxu0 0.0
        %2817 = vmatprep.subr.mxu0 0.0
        %2818 = vmatpush2.msra.mxu0 0.0
        %2819 = vmatprep.subr.mxu0 0.0
        %2820 = vmatpush2.msra.mxu0 0.0
        %2821 = vmatprep.subr.mxu0 0.0
        %2822 = vmatpush2.msra.mxu0 0.0
        %2823 = vmatprep.subr.mxu0 0.0
        %2824 = vmatpush2.msra.mxu0 0.0
        %2825 = vmatprep.mubr.f32.mxu0 0.0
        %2826 = vmatmul.mubr.f32.gmra.mxu0 %v2759
        %v2827 = vpop.f32.mrf.mxu0
        %v2828 = vadd.f32 0.0, %v2827
        %v2829 = vpop.f32.mrf.mxu0
        %2830 = vdwg.mxu0
        %2831 = vrot.lane.b32.xlu0 %v2422, 120
        %v2832 = vpop.permute.xlu0 %2831
        %2833 = vrot.lane.b32.xlu0 %v2499, 120
        %v2834 = vpop.permute.xlu0 %2833
        %v2835 = vsel %vm883, %v2832, 0
        %v2837 = vsel %vm883, %v2834, 0
        %2839 = vmatprep.subr.mxu0 0.0
        %2840 = vmatpush1.xpose.msra.mxu0 0.0
        %2841 = vmatprep.subr.mxu0 0.0
        %2842 = vmatpush1.xpose.msra.mxu0 0.0
        %2843 = vmatprep.subr.mxu0 0.0
        %2844 = vmatpush1.xpose.msra.mxu0 0.0
        %2845 = vmatprep.subr.mxu0 0.0
        %2846 = vmatpush1.xpose.msra.mxu0 0.0
        %2847 = vmatprep.subr.mxu0 0.0
        %2848 = vmatpush1.xpose.msra.mxu0 0.0
        %2849 = vmatprep.subr.mxu0 0.0
        %2850 = vmatpush1.xpose.msra.mxu0 0.0
        %2851 = vmatprep.subr.mxu0 0.0
        %2852 = vmatpush1.xpose.msra.mxu0 0.0
        %2853 = vmatprep.subr.mxu0 0.0
        %2854 = vmatpush1.xpose.msra.mxu0 0.0
        %2855 = vmatprep.subr.mxu0 0.0
        %2856 = vmatpush1.xpose.msra.mxu0 0.0
        %2857 = vmatprep.subr.mxu0 0.0
        %2858 = vmatpush1.xpose.msra.mxu0 0.0
        %2859 = vmatprep.subr.mxu0 0.0
        %2860 = vmatpush1.xpose.msra.mxu0 0.0
        %2861 = vmatprep.subr.mxu0 0.0
        %2862 = vmatpush1.xpose.msra.mxu0 0.0
        %2863 = vmatprep.subr.mxu0 0.0
        %2864 = vmatpush1.xpose.msra.mxu0 0.0
        %2865 = vmatprep.subr.mxu0 0.0
        %2866 = vmatpush1.xpose.msra.mxu0 0.0
        %2867 = vmatprep.subr.mxu0 0.0
        %2868 = vmatpush1.xpose.msra.mxu0 0.0
        %2869 = vmatprep.subr.mxu0 0.0
        %2870 = vmatpush1.xpose.msra.mxu0 %v2837
        %2871 = vmatprep.subr.mxu0 0.0
        %2872 = vmatpush2.xpose.msra.mxu0 0.0
        %2873 = vmatprep.subr.mxu0 0.0
        %2874 = vmatpush2.xpose.msra.mxu0 0.0
        %2875 = vmatprep.subr.mxu0 0.0
        %2876 = vmatpush2.xpose.msra.mxu0 0.0
        %2877 = vmatprep.subr.mxu0 0.0
        %2878 = vmatpush2.xpose.msra.mxu0 0.0
        %2879 = vmatprep.subr.mxu0 0.0
        %2880 = vmatpush2.xpose.msra.mxu0 0.0
        %2881 = vmatprep.subr.mxu0 0.0
        %2882 = vmatpush2.xpose.msra.mxu0 0.0
        %2883 = vmatprep.subr.mxu0 0.0
        %2884 = vmatpush2.xpose.msra.mxu0 0.0
        %2885 = vmatprep.subr.mxu0 0.0
        %2886 = vmatpush2.xpose.msra.mxu0 0.0
        %2887 = vmatprep.subr.mxu0 0.0
        %2888 = vmatpush2.xpose.msra.mxu0 0.0
        %2889 = vmatprep.subr.mxu0 0.0
        %2890 = vmatpush2.xpose.msra.mxu0 0.0
        %2891 = vmatprep.subr.mxu0 0.0
        %2892 = vmatpush2.xpose.msra.mxu0 0.0
        %2893 = vmatprep.subr.mxu0 0.0
        %2894 = vmatpush2.xpose.msra.mxu0 0.0
        %2895 = vmatprep.subr.mxu0 0.0
        %2896 = vmatpush2.xpose.msra.mxu0 0.0
        %2897 = vmatprep.subr.mxu0 0.0
        %2898 = vmatpush2.xpose.msra.mxu0 0.0
        %2899 = vmatprep.subr.mxu0 0.0
        %2900 = vmatpush2.xpose.msra.mxu0 0.0
        %2901 = vmatprep.subr.mxu0 0.0
        %2902 = vmatpush2.xpose.msra.mxu0 0.0
        %2903 = vmatprep.mubr.f32.mxu0 0.0
        %2904 = vmatmul.mubr.f32.gmra.mxu0 %v2835
        %v2905 = vpop.f32.mrf.mxu0
        %v2906 = vadd.f32 %v2502, %v2905
        %v2907 = vpop.f32.mrf.mxu0
        %2908 = vdwg.mxu0
        %v2909 = vsel %vm958, %v2906, -inf
        %2910 = vmax.xlane.f32.xlu0 %v2909
        %v2911 = vpop.xlane.xlu0 %2910
        %v2912 = vsub.f32 %v2906, %v2911
        %v2913 = vmul.f32 %v2912, 1.442695
        %v2914 = vpow.pop %v2913
        %v2915 = vsel %vm958, %v2914, 0.0
        %2916 = vadd.xlane.f32.xlu0 %v2915
        %v2917 = vpop.xlane.xlu0 %2916
        %v2918 = vrcp.pop %v2917
        %v2919 = vmul.f32 %v2914, %v2918
        %2920 = vrot.lane.b32.xlu0 %v2499, 88
        %v2921 = vpop.permute.xlu0 %2920
        %v2924 = vsel %vm958, %v2919, 0
        %2926 = vmatprep.subr.mxu0 0.0
        %2927 = vmatpush1.msra.mxu0 0.0
        %2928 = vmatprep.subr.mxu0 0.0
        %2929 = vmatpush1.msra.mxu0 0.0
        %2930 = vmatprep.subr.mxu0 0.0
        %2931 = vmatpush1.msra.mxu0 0.0
        %2932 = vmatprep.subr.mxu0 0.0
        %2933 = vmatpush1.msra.mxu0 0.0
        %2934 = vmatprep.subr.mxu0 0.0
        %2935 = vmatpush1.msra.mxu0 0.0
        %2936 = vmatprep.subr.mxu0 0.0
        %2937 = vmatpush1.msra.mxu0 0.0
        %2938 = vmatprep.subr.mxu0 0.0
        %2939 = vmatpush1.msra.mxu0 0.0
        %2940 = vmatprep.subr.mxu0 0.0
        %2941 = vmatpush1.msra.mxu0 0.0
        %2942 = vmatprep.subr.mxu0 0.0
        %2943 = vmatpush1.msra.mxu0 0.0
        %2944 = vmatprep.subr.mxu0 0.0
        %2945 = vmatpush1.msra.mxu0 0.0
        %2946 = vmatprep.subr.mxu0 0.0
        %2947 = vmatpush1.msra.mxu0 0.0
        %2948 = vmatprep.subr.mxu0 0.0
        %2949 = vmatpush1.msra.mxu0 0.0
        %2950 = vmatprep.subr.mxu0 0.0
        %2951 = vmatpush1.msra.mxu0 0.0
        %2952 = vmatprep.subr.mxu0 0.0
        %2953 = vmatpush1.msra.mxu0 0.0
        %2954 = vmatprep.subr.mxu0 0.0
        %2955 = vmatpush1.msra.mxu0 0.0
        %2956 = vmatprep.subr.mxu0 0.0
        %2957 = vmatpush1.msra.mxu0 %v2921
        %2958 = vmatprep.subr.mxu0 0.0
        %2959 = vmatpush2.msra.mxu0 0.0
        %2960 = vmatprep.subr.mxu0 0.0
        %2961 = vmatpush2.msra.mxu0 0.0
        %2962 = vmatprep.subr.mxu0 0.0
        %2963 = vmatpush2.msra.mxu0 0.0
        %2964 = vmatprep.subr.mxu0 0.0
        %2965 = vmatpush2.msra.mxu0 0.0
        %2966 = vmatprep.subr.mxu0 0.0
        %2967 = vmatpush2.msra.mxu0 0.0
        %2968 = vmatprep.subr.mxu0 0.0
        %2969 = vmatpush2.msra.mxu0 0.0
        %2970 = vmatprep.subr.mxu0 0.0
        %2971 = vmatpush2.msra.mxu0 0.0
        %2972 = vmatprep.subr.mxu0 0.0
        %2973 = vmatpush2.msra.mxu0 0.0
        %2974 = vmatprep.subr.mxu0 0.0
        %2975 = vmatpush2.msra.mxu0 0.0
        %2976 = vmatprep.subr.mxu0 0.0
        %2977 = vmatpush2.msra.mxu0 0.0
        %2978 = vmatprep.subr.mxu0 0.0
        %2979 = vmatpush2.msra.mxu0 0.0
        %2980 = vmatprep.subr.mxu0 0.0
        %2981 = vmatpush2.msra.mxu0 0.0
        %2982 = vmatprep.subr.mxu0 0.0
        %2983 = vmatpush2.msra.mxu0 0.0
        %2984 = vmatprep.subr.mxu0 0.0
        %2985 = vmatpush2.msra.mxu0 0.0
        %2986 = vmatprep.subr.mxu0 0.0
        %2987 = vmatpush2.msra.mxu0 0.0
        %2988 = vmatprep.subr.mxu0 0.0
        %2989 = vmatpush2.msra.mxu0 0.0
        %2990 = vmatprep.mubr.f32.mxu0 0.0
        %2991 = vmatmul.mubr.f32.gmra.mxu0 %v2924
        %v2992 = vpop.f32.mrf.mxu0
        %v2993 = vadd.f32 0.0, %v2992
        %v2994 = vpop.f32.mrf.mxu0
        %2995 = vdwg.mxu0
        %2996 = vrot.lane.b32.xlu0 %v2422, 116
        %v2997 = vpop.permute.xlu0 %2996
        %2998 = vrot.lane.b32.xlu0 %v2499, 116
        %v2999 = vpop.permute.xlu0 %2998
        %v3000 = vsel %vm883, %v2997, 0
        %v3002 = vsel %vm883, %v2999, 0
        %3004 = vmatprep.subr.mxu0 0.0
        %3005 = vmatpush1.xpose.msra.mxu0 0.0
        %3006 = vmatprep.subr.mxu0 0.0
        %3007 = vmatpush1.xpose.msra.mxu0 0.0
        %3008 = vmatprep.subr.mxu0 0.0
        %3009 = vmatpush1.xpose.msra.mxu0 0.0
        %3010 = vmatprep.subr.mxu0 0.0
        %3011 = vmatpush1.xpose.msra.mxu0 0.0
        %3012 = vmatprep.subr.mxu0 0.0
        %3013 = vmatpush1.xpose.msra.mxu0 0.0
        %3014 = vmatprep.subr.mxu0 0.0
        %3015 = vmatpush1.xpose.msra.mxu0 0.0
        %3016 = vmatprep.subr.mxu0 0.0
        %3017 = vmatpush1.xpose.msra.mxu0 0.0
        %3018 = vmatprep.subr.mxu0 0.0
        %3019 = vmatpush1.xpose.msra.mxu0 0.0
        %3020 = vmatprep.subr.mxu0 0.0
        %3021 = vmatpush1.xpose.msra.mxu0 0.0
        %3022 = vmatprep.subr.mxu0 0.0
        %3023 = vmatpush1.xpose.msra.mxu0 0.0
        %3024 = vmatprep.subr.mxu0 0.0
        %3025 = vmatpush1.xpose.msra.mxu0 0.0
        %3026 = vmatprep.subr.mxu0 0.0
        %3027 = vmatpush1.xpose.msra.mxu0 0.0
        %3028 = vmatprep.subr.mxu0 0.0
        %3029 = vmatpush1.xpose.msra.mxu0 0.0
        %3030 = vmatprep.subr.mxu0 0.0
        %3031 = vmatpush1.xpose.msra.mxu0 0.0
        %3032 = vmatprep.subr.mxu0 0.0
        %3033 = vmatpush1.xpose.msra.mxu0 0.0
        %3034 = vmatprep.subr.mxu0 0.0
        %3035 = vmatpush1.xpose.msra.mxu0 %v3002
        %3036 = vmatprep.subr.mxu0 0.0
        %3037 = vmatpush2.xpose.msra.mxu0 0.0
        %3038 = vmatprep.subr.mxu0 0.0
        %3039 = vmatpush2.xpose.msra.mxu0 0.0
        %3040 = vmatprep.subr.mxu0 0.0
        %3041 = vmatpush2.xpose.msra.mxu0 0.0
        %3042 = vmatprep.subr.mxu0 0.0
        %3043 = vmatpush2.xpose.msra.mxu0 0.0
        %3044 = vmatprep.subr.mxu0 0.0
        %3045 = vmatpush2.xpose.msra.mxu0 0.0
        %3046 = vmatprep.subr.mxu0 0.0
        %3047 = vmatpush2.xpose.msra.mxu0 0.0
        %3048 = vmatprep.subr.mxu0 0.0
        %3049 = vmatpush2.xpose.msra.mxu0 0.0
        %3050 = vmatprep.subr.mxu0 0.0
        %3051 = vmatpush2.xpose.msra.mxu0 0.0
        %3052 = vmatprep.subr.mxu0 0.0
        %3053 = vmatpush2.xpose.msra.mxu0 0.0
        %3054 = vmatprep.subr.mxu0 0.0
        %3055 = vmatpush2.xpose.msra.mxu0 0.0
        %3056 = vmatprep.subr.mxu0 0.0
        %3057 = vmatpush2.xpose.msra.mxu0 0.0
        %3058 = vmatprep.subr.mxu0 0.0
        %3059 = vmatpush2.xpose.msra.mxu0 0.0
        %3060 = vmatprep.subr.mxu0 0.0
        %3061 = vmatpush2.xpose.msra.mxu0 0.0
        %3062 = vmatprep.subr.mxu0 0.0
        %3063 = vmatpush2.xpose.msra.mxu0 0.0
        %3064 = vmatprep.subr.mxu0 0.0
        %3065 = vmatpush2.xpose.msra.mxu0 0.0
        %3066 = vmatprep.subr.mxu0 0.0
        %3067 = vmatpush2.xpose.msra.mxu0 0.0
        %3068 = vmatprep.mubr.f32.mxu0 0.0
        %3069 = vmatmul.mubr.f32.gmra.mxu0 %v3000
        %v3070 = vpop.f32.mrf.mxu0
        %v3071 = vadd.f32 %v2502, %v3070
        %v3072 = vpop.f32.mrf.mxu0
        %3073 = vdwg.mxu0
        %v3074 = vsel %vm958, %v3071, -inf
        %3075 = vmax.xlane.f32.xlu0 %v3074
        %v3076 = vpop.xlane.xlu0 %3075
        %v3077 = vsub.f32 %v3071, %v3076
        %v3078 = vmul.f32 %v3077, 1.442695
        %v3079 = vpow.pop %v3078
        %v3080 = vsel %vm958, %v3079, 0.0
        %3081 = vadd.xlane.f32.xlu0 %v3080
        %v3082 = vpop.xlane.xlu0 %3081
        %v3083 = vrcp.pop %v3082
        %v3084 = vmul.f32 %v3079, %v3083
        %3085 = vrot.lane.b32.xlu0 %v2499, 84
        %v3086 = vpop.permute.xlu0 %3085
        %v3089 = vsel %vm958, %v3084, 0
        %3091 = vmatprep.subr.mxu0 0.0
        %3092 = vmatpush1.msra.mxu0 0.0
        %3093 = vmatprep.subr.mxu0 0.0
        %3094 = vmatpush1.msra.mxu0 0.0
        %3095 = vmatprep.subr.mxu0 0.0
        %3096 = vmatpush1.msra.mxu0 0.0
        %3097 = vmatprep.subr.mxu0 0.0
        %3098 = vmatpush1.msra.mxu0 0.0
        %3099 = vmatprep.subr.mxu0 0.0
        %3100 = vmatpush1.msra.mxu0 0.0
        %3101 = vmatprep.subr.mxu0 0.0
        %3102 = vmatpush1.msra.mxu0 0.0
        %3103 = vmatprep.subr.mxu0 0.0
        %3104 = vmatpush1.msra.mxu0 0.0
        %3105 = vmatprep.subr.mxu0 0.0
        %3106 = vmatpush1.msra.mxu0 0.0
        %3107 = vmatprep.subr.mxu0 0.0
        %3108 = vmatpush1.msra.mxu0 0.0
        %3109 = vmatprep.subr.mxu0 0.0
        %3110 = vmatpush1.msra.mxu0 0.0
        %3111 = vmatprep.subr.mxu0 0.0
        %3112 = vmatpush1.msra.mxu0 0.0
        %3113 = vmatprep.subr.mxu0 0.0
        %3114 = vmatpush1.msra.mxu0 0.0
        %3115 = vmatprep.subr.mxu0 0.0
        %3116 = vmatpush1.msra.mxu0 0.0
        %3117 = vmatprep.subr.mxu0 0.0
        %3118 = vmatpush1.msra.mxu0 0.0
        %3119 = vmatprep.subr.mxu0 0.0
        %3120 = vmatpush1.msra.mxu0 0.0
        %3121 = vmatprep.subr.mxu0 0.0
        %3122 = vmatpush1.msra.mxu0 %v3086
        %3123 = vmatprep.subr.mxu0 0.0
        %3124 = vmatpush2.msra.mxu0 0.0
        %3125 = vmatprep.subr.mxu0 0.0
        %3126 = vmatpush2.msra.mxu0 0.0
        %3127 = vmatprep.subr.mxu0 0.0
        %3128 = vmatpush2.msra.mxu0 0.0
        %3129 = vmatprep.subr.mxu0 0.0
        %3130 = vmatpush2.msra.mxu0 0.0
        %3131 = vmatprep.subr.mxu0 0.0
        %3132 = vmatpush2.msra.mxu0 0.0
        %3133 = vmatprep.subr.mxu0 0.0
        %3134 = vmatpush2.msra.mxu0 0.0
        %3135 = vmatprep.subr.mxu0 0.0
        %3136 = vmatpush2.msra.mxu0 0.0
        %3137 = vmatprep.subr.mxu0 0.0
        %3138 = vmatpush2.msra.mxu0 0.0
        %3139 = vmatprep.subr.mxu0 0.0
        %3140 = vmatpush2.msra.mxu0 0.0
        %3141 = vmatprep.subr.mxu0 0.0
        %3142 = vmatpush2.msra.mxu0 0.0
        %3143 = vmatprep.subr.mxu0 0.0
        %3144 = vmatpush2.msra.mxu0 0.0
        %3145 = vmatprep.subr.mxu0 0.0
        %3146 = vmatpush2.msra.mxu0 0.0
        %3147 = vmatprep.subr.mxu0 0.0
        %3148 = vmatpush2.msra.mxu0 0.0
        %3149 = vmatprep.subr.mxu0 0.0
        %3150 = vmatpush2.msra.mxu0 0.0
        %3151 = vmatprep.subr.mxu0 0.0
        %3152 = vmatpush2.msra.mxu0 0.0
        %3153 = vmatprep.subr.mxu0 0.0
        %3154 = vmatpush2.msra.mxu0 0.0
        %3155 = vmatprep.mubr.f32.mxu0 0.0
        %3156 = vmatmul.mubr.f32.gmra.mxu0 %v3089
        %v3157 = vpop.f32.mrf.mxu0
        %v3158 = vadd.f32 0.0, %v3157
        %v3159 = vpop.f32.mrf.mxu0
        %3160 = vdwg.mxu0
        %3161 = vrot.lane.b32.xlu0 %v2422, 112
        %v3162 = vpop.permute.xlu0 %3161
        %3163 = vrot.lane.b32.xlu0 %v2499, 112
        %v3164 = vpop.permute.xlu0 %3163
        %v3165 = vsel %vm883, %v3162, 0
        %v3167 = vsel %vm883, %v3164, 0
        %3169 = vmatprep.subr.mxu0 0.0
        %3170 = vmatpush1.xpose.msra.mxu0 0.0
        %3171 = vmatprep.subr.mxu0 0.0
        %3172 = vmatpush1.xpose.msra.mxu0 0.0
        %3173 = vmatprep.subr.mxu0 0.0
        %3174 = vmatpush1.xpose.msra.mxu0 0.0
        %3175 = vmatprep.subr.mxu0 0.0
        %3176 = vmatpush1.xpose.msra.mxu0 0.0
        %3177 = vmatprep.subr.mxu0 0.0
        %3178 = vmatpush1.xpose.msra.mxu0 0.0
        %3179 = vmatprep.subr.mxu0 0.0
        %3180 = vmatpush1.xpose.msra.mxu0 0.0
        %3181 = vmatprep.subr.mxu0 0.0
        %3182 = vmatpush1.xpose.msra.mxu0 0.0
        %3183 = vmatprep.subr.mxu0 0.0
        %3184 = vmatpush1.xpose.msra.mxu0 0.0
        %3185 = vmatprep.subr.mxu0 0.0
        %3186 = vmatpush1.xpose.msra.mxu0 0.0
        %3187 = vmatprep.subr.mxu0 0.0
        %3188 = vmatpush1.xpose.msra.mxu0 0.0
        %3189 = vmatprep.subr.mxu0 0.0
        %3190 = vmatpush1.xpose.msra.mxu0 0.0
        %3191 = vmatprep.subr.mxu0 0.0
        %3192 = vmatpush1.xpose.msra.mxu0 0.0
        %3193 = vmatprep.subr.mxu0 0.0
        %3194 = vmatpush1.xpose.msra.mxu0 0.0
        %3195 = vmatprep.subr.mxu0 0.0
        %3196 = vmatpush1.xpose.msra.mxu0 0.0
        %3197 = vmatprep.subr.mxu0 0.0
        %3198 = vmatpush1.xpose.msra.mxu0 0.0
        %3199 = vmatprep.subr.mxu0 0.0
        %3200 = vmatpush1.xpose.msra.mxu0 %v3167
        %3201 = vmatprep.subr.mxu0 0.0
        %3202 = vmatpush2.xpose.msra.mxu0 0.0
        %3203 = vmatprep.subr.mxu0 0.0
        %3204 = vmatpush2.xpose.msra.mxu0 0.0
        %3205 = vmatprep.subr.mxu0 0.0
        %3206 = vmatpush2.xpose.msra.mxu0 0.0
        %3207 = vmatprep.subr.mxu0 0.0
        %3208 = vmatpush2.xpose.msra.mxu0 0.0
        %3209 = vmatprep.subr.mxu0 0.0
        %3210 = vmatpush2.xpose.msra.mxu0 0.0
        %3211 = vmatprep.subr.mxu0 0.0
        %3212 = vmatpush2.xpose.msra.mxu0 0.0
        %3213 = vmatprep.subr.mxu0 0.0
        %3214 = vmatpush2.xpose.msra.mxu0 0.0
        %3215 = vmatprep.subr.mxu0 0.0
        %3216 = vmatpush2.xpose.msra.mxu0 0.0
        %3217 = vmatprep.subr.mxu0 0.0
        %3218 = vmatpush2.xpose.msra.mxu0 0.0
        %3219 = vmatprep.subr.mxu0 0.0
        %3220 = vmatpush2.xpose.msra.mxu0 0.0
        %3221 = vmatprep.subr.mxu0 0.0
        %3222 = vmatpush2.xpose.msra.mxu0 0.0
        %3223 = vmatprep.subr.mxu0 0.0
        %3224 = vmatpush2.xpose.msra.mxu0 0.0
        %3225 = vmatprep.subr.mxu0 0.0
        %3226 = vmatpush2.xpose.msra.mxu0 0.0
        %3227 = vmatprep.subr.mxu0 0.0
        %3228 = vmatpush2.xpose.msra.mxu0 0.0
        %3229 = vmatprep.subr.mxu0 0.0
        %3230 = vmatpush2.xpose.msra.mxu0 0.0
        %3231 = vmatprep.subr.mxu0 0.0
        %3232 = vmatpush2.xpose.msra.mxu0 0.0
        %3233 = vmatprep.mubr.f32.mxu0 0.0
        %3234 = vmatmul.mubr.f32.gmra.mxu0 %v3165
        %v3235 = vpop.f32.mrf.mxu0
        %v3236 = vadd.f32 %v2502, %v3235
        %v3237 = vpop.f32.mrf.mxu0
        %3238 = vdwg.mxu0
        %v3239 = vsel %vm958, %v3236, -inf
        %3240 = vmax.xlane.f32.xlu0 %v3239
        %v3241 = vpop.xlane.xlu0 %3240
        %v3242 = vsub.f32 %v3236, %v3241
        %v3243 = vmul.f32 %v3242, 1.442695
        %v3244 = vpow.pop %v3243
        %v3245 = vsel %vm958, %v3244, 0.0
        %3246 = vadd.xlane.f32.xlu0 %v3245
        %v3247 = vpop.xlane.xlu0 %3246
        %v3248 = vrcp.pop %v3247
        %v3249 = vmul.f32 %v3244, %v3248
        %3250 = vrot.lane.b32.xlu0 %v2499, 80
        %v3251 = vpop.permute.xlu0 %3250
        %v3254 = vsel %vm958, %v3249, 0
        %3256 = vmatprep.subr.mxu0 0.0
        %3257 = vmatpush1.msra.mxu0 0.0
        %3258 = vmatprep.subr.mxu0 0.0
        %3259 = vmatpush1.msra.mxu0 0.0
        %3260 = vmatprep.subr.mxu0 0.0
        %3261 = vmatpush1.msra.mxu0 0.0
        %3262 = vmatprep.subr.mxu0 0.0
        %3263 = vmatpush1.msra.mxu0 0.0
        %3264 = vmatprep.subr.mxu0 0.0
        %3265 = vmatpush1.msra.mxu0 0.0
        %3266 = vmatprep.subr.mxu0 0.0
        %3267 = vmatpush1.msra.mxu0 0.0
        %3268 = vmatprep.subr.mxu0 0.0
        %3269 = vmatpush1.msra.mxu0 0.0
        %3270 = vmatprep.subr.mxu0 0.0
        %3271 = vmatpush1.msra.mxu0 0.0
        %3272 = vmatprep.subr.mxu0 0.0
        %3273 = vmatpush1.msra.mxu0 0.0
        %3274 = vmatprep.subr.mxu0 0.0
        %3275 = vmatpush1.msra.mxu0 0.0
        %3276 = vmatprep.subr.mxu0 0.0
        %3277 = vmatpush1.msra.mxu0 0.0
        %3278 = vmatprep.subr.mxu0 0.0
        %3279 = vmatpush1.msra.mxu0 0.0
        %3280 = vmatprep.subr.mxu0 0.0
        %3281 = vmatpush1.msra.mxu0 0.0
        %3282 = vmatprep.subr.mxu0 0.0
        %3283 = vmatpush1.msra.mxu0 0.0
        %3284 = vmatprep.subr.mxu0 0.0
        %3285 = vmatpush1.msra.mxu0 0.0
        %3286 = vmatprep.subr.mxu0 0.0
        %3287 = vmatpush1.msra.mxu0 %v3251
        %3288 = vmatprep.subr.mxu0 0.0
        %3289 = vmatpush2.msra.mxu0 0.0
        %3290 = vmatprep.subr.mxu0 0.0
        %3291 = vmatpush2.msra.mxu0 0.0
        %3292 = vmatprep.subr.mxu0 0.0
        %3293 = vmatpush2.msra.mxu0 0.0
        %3294 = vmatprep.subr.mxu0 0.0
        %3295 = vmatpush2.msra.mxu0 0.0
        %3296 = vmatprep.subr.mxu0 0.0
        %3297 = vmatpush2.msra.mxu0 0.0
        %3298 = vmatprep.subr.mxu0 0.0
        %3299 = vmatpush2.msra.mxu0 0.0
        %3300 = vmatprep.subr.mxu0 0.0
        %3301 = vmatpush2.msra.mxu0 0.0
        %3302 = vmatprep.subr.mxu0 0.0
        %3303 = vmatpush2.msra.mxu0 0.0
        %3304 = vmatprep.subr.mxu0 0.0
        %3305 = vmatpush2.msra.mxu0 0.0
        %3306 = vmatprep.subr.mxu0 0.0
        %3307 = vmatpush2.msra.mxu0 0.0
        %3308 = vmatprep.subr.mxu0 0.0
        %3309 = vmatpush2.msra.mxu0 0.0
        %3310 = vmatprep.subr.mxu0 0.0
        %3311 = vmatpush2.msra.mxu0 0.0
        %3312 = vmatprep.subr.mxu0 0.0
        %3313 = vmatpush2.msra.mxu0 0.0
        %3314 = vmatprep.subr.mxu0 0.0
        %3315 = vmatpush2.msra.mxu0 0.0
        %3316 = vmatprep.subr.mxu0 0.0
        %3317 = vmatpush2.msra.mxu0 0.0
        %3318 = vmatprep.subr.mxu0 0.0
        %3319 = vmatpush2.msra.mxu0 0.0
        %3320 = vmatprep.mubr.f32.mxu0 0.0
        %3321 = vmatmul.mubr.f32.gmra.mxu0 %v3254
        %v3322 = vpop.f32.mrf.mxu0
        %v3323 = vadd.f32 0.0, %v3322
        %v3324 = vpop.f32.mrf.mxu0
        %3325 = vdwg.mxu0
        %3326 = vrot.lane.b32.xlu0 %v2422, 108
        %v3327 = vpop.permute.xlu0 %3326
        %3328 = vrot.lane.b32.xlu0 %v2499, 108
        %v3329 = vpop.permute.xlu0 %3328
        %v3330 = vsel %vm883, %v3327, 0
        %v3332 = vsel %vm883, %v3329, 0
        %3334 = vmatprep.subr.mxu0 0.0
        %3335 = vmatpush1.xpose.msra.mxu0 0.0
        %3336 = vmatprep.subr.mxu0 0.0
        %3337 = vmatpush1.xpose.msra.mxu0 0.0
        %3338 = vmatprep.subr.mxu0 0.0
        %3339 = vmatpush1.xpose.msra.mxu0 0.0
        %3340 = vmatprep.subr.mxu0 0.0
        %3341 = vmatpush1.xpose.msra.mxu0 0.0
        %3342 = vmatprep.subr.mxu0 0.0
        %3343 = vmatpush1.xpose.msra.mxu0 0.0
        %3344 = vmatprep.subr.mxu0 0.0
        %3345 = vmatpush1.xpose.msra.mxu0 0.0
        %3346 = vmatprep.subr.mxu0 0.0
        %3347 = vmatpush1.xpose.msra.mxu0 0.0
        %3348 = vmatprep.subr.mxu0 0.0
        %3349 = vmatpush1.xpose.msra.mxu0 0.0
        %3350 = vmatprep.subr.mxu0 0.0
        %3351 = vmatpush1.xpose.msra.mxu0 0.0
        %3352 = vmatprep.subr.mxu0 0.0
        %3353 = vmatpush1.xpose.msra.mxu0 0.0
        %3354 = vmatprep.subr.mxu0 0.0
        %3355 = vmatpush1.xpose.msra.mxu0 0.0
        %3356 = vmatprep.subr.mxu0 0.0
        %3357 = vmatpush1.xpose.msra.mxu0 0.0
        %3358 = vmatprep.subr.mxu0 0.0
        %3359 = vmatpush1.xpose.msra.mxu0 0.0
        %3360 = vmatprep.subr.mxu0 0.0
        %3361 = vmatpush1.xpose.msra.mxu0 0.0
        %3362 = vmatprep.subr.mxu0 0.0
        %3363 = vmatpush1.xpose.msra.mxu0 0.0
        %3364 = vmatprep.subr.mxu0 0.0
        %3365 = vmatpush1.xpose.msra.mxu0 %v3332
        %3366 = vmatprep.subr.mxu0 0.0
        %3367 = vmatpush2.xpose.msra.mxu0 0.0
        %3368 = vmatprep.subr.mxu0 0.0
        %3369 = vmatpush2.xpose.msra.mxu0 0.0
        %3370 = vmatprep.subr.mxu0 0.0
        %3371 = vmatpush2.xpose.msra.mxu0 0.0
        %3372 = vmatprep.subr.mxu0 0.0
        %3373 = vmatpush2.xpose.msra.mxu0 0.0
        %3374 = vmatprep.subr.mxu0 0.0
        %3375 = vmatpush2.xpose.msra.mxu0 0.0
        %3376 = vmatprep.subr.mxu0 0.0
        %3377 = vmatpush2.xpose.msra.mxu0 0.0
        %3378 = vmatprep.subr.mxu0 0.0
        %3379 = vmatpush2.xpose.msra.mxu0 0.0
        %3380 = vmatprep.subr.mxu0 0.0
        %3381 = vmatpush2.xpose.msra.mxu0 0.0
        %3382 = vmatprep.subr.mxu0 0.0
        %3383 = vmatpush2.xpose.msra.mxu0 0.0
        %3384 = vmatprep.subr.mxu0 0.0
        %3385 = vmatpush2.xpose.msra.mxu0 0.0
        %3386 = vmatprep.subr.mxu0 0.0
        %3387 = vmatpush2.xpose.msra.mxu0 0.0
        %3388 = vmatprep.subr.mxu0 0.0
        %3389 = vmatpush2.xpose.msra.mxu0 0.0
        %3390 = vmatprep.subr.mxu0 0.0
        %3391 = vmatpush2.xpose.msra.mxu0 0.0
        %3392 = vmatprep.subr.mxu0 0.0
        %3393 = vmatpush2.xpose.msra.mxu0 0.0
        %3394 = vmatprep.subr.mxu0 0.0
        %3395 = vmatpush2.xpose.msra.mxu0 0.0
        %3396 = vmatprep.subr.mxu0 0.0
        %3397 = vmatpush2.xpose.msra.mxu0 0.0
        %3398 = vmatprep.mubr.f32.mxu0 0.0
        %3399 = vmatmul.mubr.f32.gmra.mxu0 %v3330
        %v3400 = vpop.f32.mrf.mxu0
        %v3401 = vadd.f32 %v2502, %v3400
        %v3402 = vpop.f32.mrf.mxu0
        %3403 = vdwg.mxu0
        %v3404 = vsel %vm958, %v3401, -inf
        %3405 = vmax.xlane.f32.xlu0 %v3404
        %v3406 = vpop.xlane.xlu0 %3405
        %v3407 = vsub.f32 %v3401, %v3406
        %v3408 = vmul.f32 %v3407, 1.442695
        %v3409 = vpow.pop %v3408
        %v3410 = vsel %vm958, %v3409, 0.0
        %3411 = vadd.xlane.f32.xlu0 %v3410
        %v3412 = vpop.xlane.xlu0 %3411
        %v3413 = vrcp.pop %v3412
        %v3414 = vmul.f32 %v3409, %v3413
        %3415 = vrot.lane.b32.xlu0 %v2499, 76
        %v3416 = vpop.permute.xlu0 %3415
        %v3419 = vsel %vm958, %v3414, 0
        %3421 = vmatprep.subr.mxu0 0.0
        %3422 = vmatpush1.msra.mxu0 0.0
        %3423 = vmatprep.subr.mxu0 0.0
        %3424 = vmatpush1.msra.mxu0 0.0
        %3425 = vmatprep.subr.mxu0 0.0
        %3426 = vmatpush1.msra.mxu0 0.0
        %3427 = vmatprep.subr.mxu0 0.0
        %3428 = vmatpush1.msra.mxu0 0.0
        %3429 = vmatprep.subr.mxu0 0.0
        %3430 = vmatpush1.msra.mxu0 0.0
        %3431 = vmatprep.subr.mxu0 0.0
        %3432 = vmatpush1.msra.mxu0 0.0
        %3433 = vmatprep.subr.mxu0 0.0
        %3434 = vmatpush1.msra.mxu0 0.0
        %3435 = vmatprep.subr.mxu0 0.0
        %3436 = vmatpush1.msra.mxu0 0.0
        %3437 = vmatprep.subr.mxu0 0.0
        %3438 = vmatpush1.msra.mxu0 0.0
        %3439 = vmatprep.subr.mxu0 0.0
        %3440 = vmatpush1.msra.mxu0 0.0
        %3441 = vmatprep.subr.mxu0 0.0
        %3442 = vmatpush1.msra.mxu0 0.0
        %3443 = vmatprep.subr.mxu0 0.0
        %3444 = vmatpush1.msra.mxu0 0.0
        %3445 = vmatprep.subr.mxu0 0.0
        %3446 = vmatpush1.msra.mxu0 0.0
        %3447 = vmatprep.subr.mxu0 0.0
        %3448 = vmatpush1.msra.mxu0 0.0
        %3449 = vmatprep.subr.mxu0 0.0
        %3450 = vmatpush1.msra.mxu0 0.0
        %3451 = vmatprep.subr.mxu0 0.0
        %3452 = vmatpush1.msra.mxu0 %v3416
        %3453 = vmatprep.subr.mxu0 0.0
        %3454 = vmatpush2.msra.mxu0 0.0
        %3455 = vmatprep.subr.mxu0 0.0
        %3456 = vmatpush2.msra.mxu0 0.0
        %3457 = vmatprep.subr.mxu0 0.0
        %3458 = vmatpush2.msra.mxu0 0.0
        %3459 = vmatprep.subr.mxu0 0.0
        %3460 = vmatpush2.msra.mxu0 0.0
        %3461 = vmatprep.subr.mxu0 0.0
        %3462 = vmatpush2.msra.mxu0 0.0
        %3463 = vmatprep.subr.mxu0 0.0
        %3464 = vmatpush2.msra.mxu0 0.0
        %3465 = vmatprep.subr.mxu0 0.0
        %3466 = vmatpush2.msra.mxu0 0.0
        %3467 = vmatprep.subr.mxu0 0.0
        %3468 = vmatpush2.msra.mxu0 0.0
        %3469 = vmatprep.subr.mxu0 0.0
        %3470 = vmatpush2.msra.mxu0 0.0
        %3471 = vmatprep.subr.mxu0 0.0
        %3472 = vmatpush2.msra.mxu0 0.0
        %3473 = vmatprep.subr.mxu0 0.0
        %3474 = vmatpush2.msra.mxu0 0.0
        %3475 = vmatprep.subr.mxu0 0.0
        %3476 = vmatpush2.msra.mxu0 0.0
        %3477 = vmatprep.subr.mxu0 0.0
        %3478 = vmatpush2.msra.mxu0 0.0
        %3479 = vmatprep.subr.mxu0 0.0
        %3480 = vmatpush2.msra.mxu0 0.0
        %3481 = vmatprep.subr.mxu0 0.0
        %3482 = vmatpush2.msra.mxu0 0.0
        %3483 = vmatprep.subr.mxu0 0.0
        %3484 = vmatpush2.msra.mxu0 0.0
        %3485 = vmatprep.mubr.f32.mxu0 0.0
        %3486 = vmatmul.mubr.f32.gmra.mxu0 %v3419
        %v3487 = vpop.f32.mrf.mxu0
        %v3488 = vadd.f32 0.0, %v3487
        %v3489 = vpop.f32.mrf.mxu0
        %3490 = vdwg.mxu0
        %3491 = vrot.lane.b32.xlu0 %v2422, 104
        %v3492 = vpop.permute.xlu0 %3491
        %3493 = vrot.lane.b32.xlu0 %v2499, 104
        %v3494 = vpop.permute.xlu0 %3493
        %v3495 = vsel %vm883, %v3492, 0
        %v3497 = vsel %vm883, %v3494, 0
        %3499 = vmatprep.subr.mxu0 0.0
        %3500 = vmatpush1.xpose.msra.mxu0 0.0
        %3501 = vmatprep.subr.mxu0 0.0
        %3502 = vmatpush1.xpose.msra.mxu0 0.0
        %3503 = vmatprep.subr.mxu0 0.0
        %3504 = vmatpush1.xpose.msra.mxu0 0.0
        %3505 = vmatprep.subr.mxu0 0.0
        %3506 = vmatpush1.xpose.msra.mxu0 0.0
        %3507 = vmatprep.subr.mxu0 0.0
        %3508 = vmatpush1.xpose.msra.mxu0 0.0
        %3509 = vmatprep.subr.mxu0 0.0
        %3510 = vmatpush1.xpose.msra.mxu0 0.0
        %3511 = vmatprep.subr.mxu0 0.0
        %3512 = vmatpush1.xpose.msra.mxu0 0.0
        %3513 = vmatprep.subr.mxu0 0.0
        %3514 = vmatpush1.xpose.msra.mxu0 0.0
        %3515 = vmatprep.subr.mxu0 0.0
        %3516 = vmatpush1.xpose.msra.mxu0 0.0
        %3517 = vmatprep.subr.mxu0 0.0
        %3518 = vmatpush1.xpose.msra.mxu0 0.0
        %3519 = vmatprep.subr.mxu0 0.0
        %3520 = vmatpush1.xpose.msra.mxu0 0.0
        %3521 = vmatprep.subr.mxu0 0.0
        %3522 = vmatpush1.xpose.msra.mxu0 0.0
        %3523 = vmatprep.subr.mxu0 0.0
        %3524 = vmatpush1.xpose.msra.mxu0 0.0
        %3525 = vmatprep.subr.mxu0 0.0
        %3526 = vmatpush1.xpose.msra.mxu0 0.0
        %3527 = vmatprep.subr.mxu0 0.0
        %3528 = vmatpush1.xpose.msra.mxu0 0.0
        %3529 = vmatprep.subr.mxu0 0.0
        %3530 = vmatpush1.xpose.msra.mxu0 %v3497
        %3531 = vmatprep.subr.mxu0 0.0
        %3532 = vmatpush2.xpose.msra.mxu0 0.0
        %3533 = vmatprep.subr.mxu0 0.0
        %3534 = vmatpush2.xpose.msra.mxu0 0.0
        %3535 = vmatprep.subr.mxu0 0.0
        %3536 = vmatpush2.xpose.msra.mxu0 0.0
        %3537 = vmatprep.subr.mxu0 0.0
        %3538 = vmatpush2.xpose.msra.mxu0 0.0
        %3539 = vmatprep.subr.mxu0 0.0
        %3540 = vmatpush2.xpose.msra.mxu0 0.0
        %3541 = vmatprep.subr.mxu0 0.0
        %3542 = vmatpush2.xpose.msra.mxu0 0.0
        %3543 = vmatprep.subr.mxu0 0.0
        %3544 = vmatpush2.xpose.msra.mxu0 0.0
        %3545 = vmatprep.subr.mxu0 0.0
        %3546 = vmatpush2.xpose.msra.mxu0 0.0
        %3547 = vmatprep.subr.mxu0 0.0
        %3548 = vmatpush2.xpose.msra.mxu0 0.0
        %3549 = vmatprep.subr.mxu0 0.0
        %3550 = vmatpush2.xpose.msra.mxu0 0.0
        %3551 = vmatprep.subr.mxu0 0.0
        %3552 = vmatpush2.xpose.msra.mxu0 0.0
        %3553 = vmatprep.subr.mxu0 0.0
        %3554 = vmatpush2.xpose.msra.mxu0 0.0
        %3555 = vmatprep.subr.mxu0 0.0
        %3556 = vmatpush2.xpose.msra.mxu0 0.0
        %3557 = vmatprep.subr.mxu0 0.0
        %3558 = vmatpush2.xpose.msra.mxu0 0.0
        %3559 = vmatprep.subr.mxu0 0.0
        %3560 = vmatpush2.xpose.msra.mxu0 0.0
        %3561 = vmatprep.subr.mxu0 0.0
        %3562 = vmatpush2.xpose.msra.mxu0 0.0
        %3563 = vmatprep.mubr.f32.mxu0 0.0
        %3564 = vmatmul.mubr.f32.gmra.mxu0 %v3495
        %v3565 = vpop.f32.mrf.mxu0
        %v3566 = vadd.f32 %v2502, %v3565
        %v3567 = vpop.f32.mrf.mxu0
        %3568 = vdwg.mxu0
        %v3569 = vsel %vm958, %v3566, -inf
        %3570 = vmax.xlane.f32.xlu0 %v3569
        %v3571 = vpop.xlane.xlu0 %3570
        %v3572 = vsub.f32 %v3566, %v3571
        %v3573 = vmul.f32 %v3572, 1.442695
        %v3574 = vpow.pop %v3573
        %v3575 = vsel %vm958, %v3574, 0.0
        %3576 = vadd.xlane.f32.xlu0 %v3575
        %v3577 = vpop.xlane.xlu0 %3576
        %v3578 = vrcp.pop %v3577
        %v3579 = vmul.f32 %v3574, %v3578
        %3580 = vrot.lane.b32.xlu0 %v2499, 72
        %v3581 = vpop.permute.xlu0 %3580
        %v3584 = vsel %vm958, %v3579, 0
        %3586 = vmatprep.subr.mxu0 0.0
        %3587 = vmatpush1.msra.mxu0 0.0
        %3588 = vmatprep.subr.mxu0 0.0
        %3589 = vmatpush1.msra.mxu0 0.0
        %3590 = vmatprep.subr.mxu0 0.0
        %3591 = vmatpush1.msra.mxu0 0.0
        %3592 = vmatprep.subr.mxu0 0.0
        %3593 = vmatpush1.msra.mxu0 0.0
        %3594 = vmatprep.subr.mxu0 0.0
        %3595 = vmatpush1.msra.mxu0 0.0
        %3596 = vmatprep.subr.mxu0 0.0
        %3597 = vmatpush1.msra.mxu0 0.0
        %3598 = vmatprep.subr.mxu0 0.0
        %3599 = vmatpush1.msra.mxu0 0.0
        %3600 = vmatprep.subr.mxu0 0.0
        %3601 = vmatpush1.msra.mxu0 0.0
        %3602 = vmatprep.subr.mxu0 0.0
        %3603 = vmatpush1.msra.mxu0 0.0
        %3604 = vmatprep.subr.mxu0 0.0
        %3605 = vmatpush1.msra.mxu0 0.0
        %3606 = vmatprep.subr.mxu0 0.0
        %3607 = vmatpush1.msra.mxu0 0.0
        %3608 = vmatprep.subr.mxu0 0.0
        %3609 = vmatpush1.msra.mxu0 0.0
        %3610 = vmatprep.subr.mxu0 0.0
        %3611 = vmatpush1.msra.mxu0 0.0
        %3612 = vmatprep.subr.mxu0 0.0
        %3613 = vmatpush1.msra.mxu0 0.0
        %3614 = vmatprep.subr.mxu0 0.0
        %3615 = vmatpush1.msra.mxu0 0.0
        %3616 = vmatprep.subr.mxu0 0.0
        %3617 = vmatpush1.msra.mxu0 %v3581
        %3618 = vmatprep.subr.mxu0 0.0
        %3619 = vmatpush2.msra.mxu0 0.0
        %3620 = vmatprep.subr.mxu0 0.0
        %3621 = vmatpush2.msra.mxu0 0.0
        %3622 = vmatprep.subr.mxu0 0.0
        %3623 = vmatpush2.msra.mxu0 0.0
        %3624 = vmatprep.subr.mxu0 0.0
        %3625 = vmatpush2.msra.mxu0 0.0
        %3626 = vmatprep.subr.mxu0 0.0
        %3627 = vmatpush2.msra.mxu0 0.0
        %3628 = vmatprep.subr.mxu0 0.0
        %3629 = vmatpush2.msra.mxu0 0.0
        %3630 = vmatprep.subr.mxu0 0.0
        %3631 = vmatpush2.msra.mxu0 0.0
        %3632 = vmatprep.subr.mxu0 0.0
        %3633 = vmatpush2.msra.mxu0 0.0
        %3634 = vmatprep.subr.mxu0 0.0
        %3635 = vmatpush2.msra.mxu0 0.0
        %3636 = vmatprep.subr.mxu0 0.0
        %3637 = vmatpush2.msra.mxu0 0.0
        %3638 = vmatprep.subr.mxu0 0.0
        %3639 = vmatpush2.msra.mxu0 0.0
        %3640 = vmatprep.subr.mxu0 0.0
        %3641 = vmatpush2.msra.mxu0 0.0
        %3642 = vmatprep.subr.mxu0 0.0
        %3643 = vmatpush2.msra.mxu0 0.0
        %3644 = vmatprep.subr.mxu0 0.0
        %3645 = vmatpush2.msra.mxu0 0.0
        %3646 = vmatprep.subr.mxu0 0.0
        %3647 = vmatpush2.msra.mxu0 0.0
        %3648 = vmatprep.subr.mxu0 0.0
        %3649 = vmatpush2.msra.mxu0 0.0
        %3650 = vmatprep.mubr.f32.mxu0 0.0
        %3651 = vmatmul.mubr.f32.gmra.mxu0 %v3584
        %v3652 = vpop.f32.mrf.mxu0
        %v3653 = vadd.f32 0.0, %v3652
        %v3654 = vpop.f32.mrf.mxu0
        %3655 = vdwg.mxu0
        %3656 = vrot.lane.b32.xlu0 %v2422, 100
        %v3657 = vpop.permute.xlu0 %3656
        %3658 = vrot.lane.b32.xlu0 %v2499, 100
        %v3659 = vpop.permute.xlu0 %3658
        %v3660 = vsel %vm883, %v3657, 0
        %v3662 = vsel %vm883, %v3659, 0
        %3664 = vmatprep.subr.mxu0 0.0
        %3665 = vmatpush1.xpose.msra.mxu0 0.0
        %3666 = vmatprep.subr.mxu0 0.0
        %3667 = vmatpush1.xpose.msra.mxu0 0.0
        %3668 = vmatprep.subr.mxu0 0.0
        %3669 = vmatpush1.xpose.msra.mxu0 0.0
        %3670 = vmatprep.subr.mxu0 0.0
        %3671 = vmatpush1.xpose.msra.mxu0 0.0
        %3672 = vmatprep.subr.mxu0 0.0
        %3673 = vmatpush1.xpose.msra.mxu0 0.0
        %3674 = vmatprep.subr.mxu0 0.0
        %3675 = vmatpush1.xpose.msra.mxu0 0.0
        %3676 = vmatprep.subr.mxu0 0.0
        %3677 = vmatpush1.xpose.msra.mxu0 0.0
        %3678 = vmatprep.subr.mxu0 0.0
        %3679 = vmatpush1.xpose.msra.mxu0 0.0
        %3680 = vmatprep.subr.mxu0 0.0
        %3681 = vmatpush1.xpose.msra.mxu0 0.0
        %3682 = vmatprep.subr.mxu0 0.0
        %3683 = vmatpush1.xpose.msra.mxu0 0.0
        %3684 = vmatprep.subr.mxu0 0.0
        %3685 = vmatpush1.xpose.msra.mxu0 0.0
        %3686 = vmatprep.subr.mxu0 0.0
        %3687 = vmatpush1.xpose.msra.mxu0 0.0
        %3688 = vmatprep.subr.mxu0 0.0
        %3689 = vmatpush1.xpose.msra.mxu0 0.0
        %3690 = vmatprep.subr.mxu0 0.0
        %3691 = vmatpush1.xpose.msra.mxu0 0.0
        %3692 = vmatprep.subr.mxu0 0.0
        %3693 = vmatpush1.xpose.msra.mxu0 0.0
        %3694 = vmatprep.subr.mxu0 0.0
        %3695 = vmatpush1.xpose.msra.mxu0 %v3662
        %3696 = vmatprep.subr.mxu0 0.0
        %3697 = vmatpush2.xpose.msra.mxu0 0.0
        %3698 = vmatprep.subr.mxu0 0.0
        %3699 = vmatpush2.xpose.msra.mxu0 0.0
        %3700 = vmatprep.subr.mxu0 0.0
        %3701 = vmatpush2.xpose.msra.mxu0 0.0
        %3702 = vmatprep.subr.mxu0 0.0
        %3703 = vmatpush2.xpose.msra.mxu0 0.0
        %3704 = vmatprep.subr.mxu0 0.0
        %3705 = vmatpush2.xpose.msra.mxu0 0.0
        %3706 = vmatprep.subr.mxu0 0.0
        %3707 = vmatpush2.xpose.msra.mxu0 0.0
        %3708 = vmatprep.subr.mxu0 0.0
        %3709 = vmatpush2.xpose.msra.mxu0 0.0
        %3710 = vmatprep.subr.mxu0 0.0
        %3711 = vmatpush2.xpose.msra.mxu0 0.0
        %3712 = vmatprep.subr.mxu0 0.0
        %3713 = vmatpush2.xpose.msra.mxu0 0.0
        %3714 = vmatprep.subr.mxu0 0.0
        %3715 = vmatpush2.xpose.msra.mxu0 0.0
        %3716 = vmatprep.subr.mxu0 0.0
        %3717 = vmatpush2.xpose.msra.mxu0 0.0
        %3718 = vmatprep.subr.mxu0 0.0
        %3719 = vmatpush2.xpose.msra.mxu0 0.0
        %3720 = vmatprep.subr.mxu0 0.0
        %3721 = vmatpush2.xpose.msra.mxu0 0.0
        %3722 = vmatprep.subr.mxu0 0.0
        %3723 = vmatpush2.xpose.msra.mxu0 0.0
        %3724 = vmatprep.subr.mxu0 0.0
        %3725 = vmatpush2.xpose.msra.mxu0 0.0
        %3726 = vmatprep.subr.mxu0 0.0
        %3727 = vmatpush2.xpose.msra.mxu0 0.0
        %3728 = vmatprep.mubr.f32.mxu0 0.0
        %3729 = vmatmul.mubr.f32.gmra.mxu0 %v3660
        %v3730 = vpop.f32.mrf.mxu0
        %v3731 = vadd.f32 %v2502, %v3730
        %v3732 = vpop.f32.mrf.mxu0
        %3733 = vdwg.mxu0
        %v3734 = vsel %vm958, %v3731, -inf
        %3735 = vmax.xlane.f32.xlu0 %v3734
        %v3736 = vpop.xlane.xlu0 %3735
        %v3737 = vsub.f32 %v3731, %v3736
        %v3738 = vmul.f32 %v3737, 1.442695
        %v3739 = vpow.pop %v3738
        %v3740 = vsel %vm958, %v3739, 0.0
        %3741 = vadd.xlane.f32.xlu0 %v3740
        %v3742 = vpop.xlane.xlu0 %3741
        %v3743 = vrcp.pop %v3742
        %v3744 = vmul.f32 %v3739, %v3743
        %3745 = vrot.lane.b32.xlu0 %v2499, 68
        %v3746 = vpop.permute.xlu0 %3745
        %v3749 = vsel %vm958, %v3744, 0
        %3751 = vmatprep.subr.mxu0 0.0
        %3752 = vmatpush1.msra.mxu0 0.0
        %3753 = vmatprep.subr.mxu0 0.0
        %3754 = vmatpush1.msra.mxu0 0.0
        %3755 = vmatprep.subr.mxu0 0.0
        %3756 = vmatpush1.msra.mxu0 0.0
        %3757 = vmatprep.subr.mxu0 0.0
        %3758 = vmatpush1.msra.mxu0 0.0
        %3759 = vmatprep.subr.mxu0 0.0
        %3760 = vmatpush1.msra.mxu0 0.0
        %3761 = vmatprep.subr.mxu0 0.0
        %3762 = vmatpush1.msra.mxu0 0.0
        %3763 = vmatprep.subr.mxu0 0.0
        %3764 = vmatpush1.msra.mxu0 0.0
        %3765 = vmatprep.subr.mxu0 0.0
        %3766 = vmatpush1.msra.mxu0 0.0
        %3767 = vmatprep.subr.mxu0 0.0
        %3768 = vmatpush1.msra.mxu0 0.0
        %3769 = vmatprep.subr.mxu0 0.0
        %3770 = vmatpush1.msra.mxu0 0.0
        %3771 = vmatprep.subr.mxu0 0.0
        %3772 = vmatpush1.msra.mxu0 0.0
        %3773 = vmatprep.subr.mxu0 0.0
        %3774 = vmatpush1.msra.mxu0 0.0
        %3775 = vmatprep.subr.mxu0 0.0
        %3776 = vmatpush1.msra.mxu0 0.0
        %3777 = vmatprep.subr.mxu0 0.0
        %3778 = vmatpush1.msra.mxu0 0.0
        %3779 = vmatprep.subr.mxu0 0.0
        %3780 = vmatpush1.msra.mxu0 0.0
        %3781 = vmatprep.subr.mxu0 0.0
        %3782 = vmatpush1.msra.mxu0 %v3746
        %3783 = vmatprep.subr.mxu0 0.0
        %3784 = vmatpush2.msra.mxu0 0.0
        %3785 = vmatprep.subr.mxu0 0.0
        %3786 = vmatpush2.msra.mxu0 0.0
        %3787 = vmatprep.subr.mxu0 0.0
        %3788 = vmatpush2.msra.mxu0 0.0
        %3789 = vmatprep.subr.mxu0 0.0
        %3790 = vmatpush2.msra.mxu0 0.0
        %3791 = vmatprep.subr.mxu0 0.0
        %3792 = vmatpush2.msra.mxu0 0.0
        %3793 = vmatprep.subr.mxu0 0.0
        %3794 = vmatpush2.msra.mxu0 0.0
        %3795 = vmatprep.subr.mxu0 0.0
        %3796 = vmatpush2.msra.mxu0 0.0
        %3797 = vmatprep.subr.mxu0 0.0
        %3798 = vmatpush2.msra.mxu0 0.0
        %3799 = vmatprep.subr.mxu0 0.0
        %3800 = vmatpush2.msra.mxu0 0.0
        %3801 = vmatprep.subr.mxu0 0.0
        %3802 = vmatpush2.msra.mxu0 0.0
        %3803 = vmatprep.subr.mxu0 0.0
        %3804 = vmatpush2.msra.mxu0 0.0
        %3805 = vmatprep.subr.mxu0 0.0
        %3806 = vmatpush2.msra.mxu0 0.0
        %3807 = vmatprep.subr.mxu0 0.0
        %3808 = vmatpush2.msra.mxu0 0.0
        %3809 = vmatprep.subr.mxu0 0.0
        %3810 = vmatpush2.msra.mxu0 0.0
        %3811 = vmatprep.subr.mxu0 0.0
        %3812 = vmatpush2.msra.mxu0 0.0
        %3813 = vmatprep.subr.mxu0 0.0
        %3814 = vmatpush2.msra.mxu0 0.0
        %3815 = vmatprep.mubr.f32.mxu0 0.0
        %3816 = vmatmul.mubr.f32.gmra.mxu0 %v3749
        %v3817 = vpop.f32.mrf.mxu0
        %v3818 = vadd.f32 0.0, %v3817
        %v3819 = vpop.f32.mrf.mxu0
        %3820 = vdwg.mxu0
        %3822 = vrot.lane.b32.xlu0 %v2828, 4
        %v3823 = vpop.permute.xlu0 %3822
        %3826 = vrot.lane.b32.xlu0 %v2993, 8
        %v3827 = vpop.permute.xlu0 %3826
        %3830 = vrot.lane.b32.xlu0 %v3158, 12
        %v3831 = vpop.permute.xlu0 %3830
        %3834 = vrot.lane.b32.xlu0 %v3323, 16
        %v3835 = vpop.permute.xlu0 %3834
        %3838 = vrot.lane.b32.xlu0 %v3488, 20
        %v3839 = vpop.permute.xlu0 %3838
        %3842 = vrot.lane.b32.xlu0 %v3653, 24
        %v3843 = vpop.permute.xlu0 %3842
        %3846 = vrot.lane.b32.xlu0 %v3818, 28
        %v3847 = vpop.permute.xlu0 %3846
        %v3849 = vsel %vm883, %v2663, %v3823
        %v3850 = vsel %vm958, %v3849, %v3827
        %v3851 = vsel %vm2231, %v3850, %v3831
        %v3852 = vsel %vm2233, %v3851, %v3835
        %v3853 = vsel %vm2235, %v3852, %v3839
        %v3854 = vsel %vm2237, %v3853, %v3843
        %v3855 = vsel %vm2239, %v3854, %v3847
        %v3856 = vld [vmem:[#allocation11] sm:$0xff]
        %v3857 = vld [vmem:[#allocation11 + $0x8] sm:$0xff]
        %v3858 = vld [vmem:[#allocation11 + $0x10] sm:$0xff]
        %v3859 = vld [vmem:[#allocation11 + $0x18] sm:$0xff]
        %v3861 = vsel %vm773, %v3855, 0
        %3863 = vmatprep.subr.mxu0 0.0
        %3864 = vmatpush1.msra.mxu0 0.0
        %3865 = vmatprep.subr.mxu0 0.0
        %3866 = vmatpush1.msra.mxu0 0.0
        %3867 = vmatprep.subr.mxu0 0.0
        %3868 = vmatpush1.msra.mxu0 0.0
        %3869 = vmatprep.subr.mxu0 0.0
        %3870 = vmatpush1.msra.mxu0 0.0
        %3871 = vmatprep.subr.mxu0 0.0
        %3872 = vmatpush1.msra.mxu0 0.0
        %3873 = vmatprep.subr.mxu0 0.0
        %3874 = vmatpush1.msra.mxu0 0.0
        %3875 = vmatprep.subr.mxu0 0.0
        %3876 = vmatpush1.msra.mxu0 0.0
        %3877 = vmatprep.subr.mxu0 0.0
        %3878 = vmatpush1.msra.mxu0 0.0
        %3879 = vmatprep.subr.mxu0 0.0
        %3880 = vmatpush1.msra.mxu0 0.0
        %3881 = vmatprep.subr.mxu0 0.0
        %3882 = vmatpush1.msra.mxu0 0.0
        %3883 = vmatprep.subr.mxu0 0.0
        %3884 = vmatpush1.msra.mxu0 0.0
        %3885 = vmatprep.subr.mxu0 0.0
        %3886 = vmatpush1.msra.mxu0 0.0
        %3887 = vmatprep.subr.mxu0 0.0
        %3888 = vmatpush1.msra.mxu0 %v3859
        %3889 = vmatprep.subr.mxu0 0.0
        %3890 = vmatpush1.msra.mxu0 %v3858
        %3891 = vmatprep.subr.mxu0 0.0
        %3892 = vmatpush1.msra.mxu0 %v3857
        %3893 = vmatprep.subr.mxu0 0.0
        %3894 = vmatpush1.msra.mxu0 %v3856
        %3895 = vmatprep.subr.mxu0 0.0
        %3896 = vmatpush2.msra.mxu0 0.0
        %3897 = vmatprep.subr.mxu0 0.0
        %3898 = vmatpush2.msra.mxu0 0.0
        %3899 = vmatprep.subr.mxu0 0.0
        %3900 = vmatpush2.msra.mxu0 0.0
        %3901 = vmatprep.subr.mxu0 0.0
        %3902 = vmatpush2.msra.mxu0 0.0
        %3903 = vmatprep.subr.mxu0 0.0
        %3904 = vmatpush2.msra.mxu0 0.0
        %3905 = vmatprep.subr.mxu0 0.0
        %3906 = vmatpush2.msra.mxu0 0.0
        %3907 = vmatprep.subr.mxu0 0.0
        %3908 = vmatpush2.msra.mxu0 0.0
        %3909 = vmatprep.subr.mxu0 0.0
        %3910 = vmatpush2.msra.mxu0 0.0
        %3911 = vmatprep.subr.mxu0 0.0
        %3912 = vmatpush2.msra.mxu0 0.0
        %3913 = vmatprep.subr.mxu0 0.0
        %3914 = vmatpush2.msra.mxu0 0.0
        %3915 = vmatprep.subr.mxu0 0.0
        %3916 = vmatpush2.msra.mxu0 0.0
        %3917 = vmatprep.subr.mxu0 0.0
        %3918 = vmatpush2.msra.mxu0 0.0
        %3919 = vmatprep.subr.mxu0 0.0
        %3920 = vmatpush2.msra.mxu0 0.0
        %3921 = vmatprep.subr.mxu0 0.0
        %3922 = vmatpush2.msra.mxu0 0.0
        %3923 = vmatprep.subr.mxu0 0.0
        %3924 = vmatpush2.msra.mxu0 0.0
        %3925 = vmatprep.subr.mxu0 0.0
        %3926 = vmatpush2.msra.mxu0 0.0
        %3927 = vmatprep.mubr.f32.mxu0 0.0
        %3928 = vmatmul.mubr.f32.gmra.mxu0 %v3861
        %v3929 = vpop.f32.mrf.mxu0
        %v3930 = vadd.f32 0.0, %v3929
        %v3931 = vpop.f32.mrf.mxu0
        %3932 = vdwg.mxu0
        %v3933 = vadd.f32 %v2318, %v3930
        %v3934 = vld [vmem:[%s13] sm:$0x1]
        %v3935 = vld [vmem:[%s14] sm:$0x1]
        %v3936 = vsel %vm773, %v3933, 0.0
        %3937 = vadd.xlane.f32.xlu0 %v3936
        %v3938 = vpop.xlane.xlu0 %3937
        %v3939 = vmul.f32 %v3938, %v777
        %v3940 = vsub.f32 %v3933, %v3939
        %v3941 = vmul.f32 %v3940, %v3940
        %v3942 = vsel %vm773, %v3941, 0.0
        %3943 = vadd.xlane.f32.xlu0 %v3942
        %v3944 = vpop.xlane.xlu0 %3943
        %v3945 = vmul.f32 %v3944, %v777
        %v3946 = vadd.f32 %v3945, 1e-06
        %v3947 = vrsqrt.pop %v3946
        %v3948 = vmul.f32 %v3940, %v3947
        %v3950 = vlaneseq
        %v3951 = vshrl.u32 %v3950, 7
        %v3952 = vsub.s32 0, %v3951
        %v3953 = vrot.slane %v3934, %v3952
        %v3955 = vmul.f32 %v3948, %v3953
        %v3957 = vlaneseq
        %v3958 = vshrl.u32 %v3957, 7
        %v3959 = vsub.s32 0, %v3958
        %v3960 = vrot.slane %v3935, %v3959
        %v3962 = vadd.f32 %v3955, %v3960
        %v3963 = vld [vmem:[#allocation13] sm:$0xff]
        %v3964 = vld [vmem:[#allocation13 + $0x8] sm:$0xff]
        %v3965 = vld [vmem:[#allocation13 + $0x10] sm:$0xff]
        %v3966 = vld [vmem:[#allocation13 + $0x18] sm:$0xff]
        %v3967 = vld [vmem:[%s16] sm:$0x1]
        %v3969 = vlaneseq
        %v3970 = vshrl.u32 %v3969, 7
        %v3971 = vsub.s32 0, %v3970
        %v3972 = vrot.slane %v3967, %v3971
        %v3975 = vsel %vm773, %v3962, 0
        %3977 = vmatprep.subr.mxu0 0.0
        %3978 = vmatpush1.msra.mxu0 0.0
        %3979 = vmatprep.subr.mxu0 0.0
        %3980 = vmatpush1.msra.mxu0 0.0
        %3981 = vmatprep.subr.mxu0 0.0
        %3982 = vmatpush1.msra.mxu0 0.0
        %3983 = vmatprep.subr.mxu0 0.0
        %3984 = vmatpush1.msra.mxu0 0.0
        %3985 = vmatprep.subr.mxu0 0.0
        %3986 = vmatpush1.msra.mxu0 0.0
        %3987 = vmatprep.subr.mxu0 0.0
        %3988 = vmatpush1.msra.mxu0 0.0
        %3989 = vmatprep.subr.mxu0 0.0
        %3990 = vmatpush1.msra.mxu0 0.0
        %3991 = vmatprep.subr.mxu0 0.0
        %3992 = vmatpush1.msra.mxu0 0.0
        %3993 = vmatprep.subr.mxu0 0.0
        %3994 = vmatpush1.msra.mxu0 0.0
        %3995 = vmatprep.subr.mxu0 0.0
        %3996 = vmatpush1.msra.mxu0 0.0
        %3997 = vmatprep.subr.mxu0 0.0
        %3998 = vmatpush1.msra.mxu0 0.0
        %3999 = vmatprep.subr.mxu0 0.0
        %4000 = vmatpush1.msra.mxu0 0.0
        %4001 = vmatprep.subr.mxu0 0.0
        %4002 = vmatpush1.msra.mxu0 %v3966
        %4003 = vmatprep.subr.mxu0 0.0
        %4004 = vmatpush1.msra.mxu0 %v3965
        %4005 = vmatprep.subr.mxu0 0.0
        %4006 = vmatpush1.msra.mxu0 %v3964
        %4007 = vmatprep.subr.mxu0 0.0
        %4008 = vmatpush1.msra.mxu0 %v3963
        %4009 = vmatprep.subr.mxu0 0.0
        %4010 = vmatpush2.msra.mxu0 0.0
        %4011 = vmatprep.subr.mxu0 0.0
        %4012 = vmatpush2.msra.mxu0 0.0
        %4013 = vmatprep.subr.mxu0 0.0
        %4014 = vmatpush2.msra.mxu0 0.0
        %4015 = vmatprep.subr.mxu0 0.0
        %4016 = vmatpush2.msra.mxu0 0.0
        %4017 = vmatprep.subr.mxu0 0.0
        %4018 = vmatpush2.msra.mxu0 0.0
        %4019 = vmatprep.subr.mxu0 0.0
        %4020 = vmatpush2.msra.mxu0 0.0
        %4021 = vmatprep.subr.mxu0 0.0
        %4022 = vmatpush2.msra.mxu0 0.0
        %4023 = vmatprep.subr.mxu0 0.0
        %4024 = vmatpush2.msra.mxu0 0.0
        %4025 = vmatprep.subr.mxu0 0.0
        %4026 = vmatpush2.msra.mxu0 0.0
        %4027 = vmatprep.subr.mxu0 0.0
        %4028 = vmatpush2.msra.mxu0 0.0
        %4029 = vmatprep.subr.mxu0 0.0
        %4030 = vmatpush2.msra.mxu0 0.0
        %4031 = vmatprep.subr.mxu0 0.0
        %4032 = vmatpush2.msra.mxu0 0.0
        %4033 = vmatprep.subr.mxu0 0.0
        %4034 = vmatpush2.msra.mxu0 0.0
        %4035 = vmatprep.subr.mxu0 0.0
        %4036 = vmatpush2.msra.mxu0 0.0
        %4037 = vmatprep.subr.mxu0 0.0
        %4038 = vmatpush2.msra.mxu0 0.0
        %4039 = vmatprep.subr.mxu0 0.0
        %4040 = vmatpush2.msra.mxu0 0.0
        %4041 = vmatprep.mubr.f32.mxu0 0.0
        %4042 = vmatmul.mubr.f32.gmra.mxu0 %v3975
        %v4043 = vpop.f32.mrf.mxu0
        %v4044 = vadd.f32 %v3972, %v4043
        %v4045 = vpop.f32.mrf.mxu0
        %4046 = vdwg.mxu0
        %v4047 = vmax.f32 %v4044, 0.0
        %v4048 = vld [vmem:[%s17] sm:$0xff]
        %v4049 = vld [vmem:[%s17 + $0x8] sm:$0xff]
        %v4050 = vld [vmem:[%s17 + $0x10] sm:$0xff]
        %v4051 = vld [vmem:[%s17 + $0x18] sm:$0xff]
        %v4052 = vld [vmem:[%s17 + $0x20] sm:$0xff]
        %v4053 = vld [vmem:[%s17 + $0x28] sm:$0xff]
        %v4054 = vld [vmem:[%s17 + $0x30] sm:$0xff]
        %v4055 = vld [vmem:[%s17 + $0x38] sm:$0xff]
        %vm4056 = vcmask 523264
        %v4058 = vsel %vm4056, %v4047, 0
        %4060 = vmatprep.subr.mxu0 0.0
        %4061 = vmatpush1.msra.mxu0 0.0
        %4062 = vmatprep.subr.mxu0 0.0
        %4063 = vmatpush1.msra.mxu0 0.0
        %4064 = vmatprep.subr.mxu0 0.0
        %4065 = vmatpush1.msra.mxu0 0.0
        %4066 = vmatprep.subr.mxu0 0.0
        %4067 = vmatpush1.msra.mxu0 0.0
        %4068 = vmatprep.subr.mxu0 0.0
        %4069 = vmatpush1.msra.mxu0 0.0
        %4070 = vmatprep.subr.mxu0 0.0
        %4071 = vmatpush1.msra.mxu0 0.0
        %4072 = vmatprep.subr.mxu0 0.0
        %4073 = vmatpush1.msra.mxu0 0.0
        %4074 = vmatprep.subr.mxu0 0.0
        %4075 = vmatpush1.msra.mxu0 0.0
        %4076 = vmatprep.subr.mxu0 0.0
        %4077 = vmatpush1.msra.mxu0 %v4055
        %4078 = vmatprep.subr.mxu0 0.0
        %4079 = vmatpush1.msra.mxu0 %v4054
        %4080 = vmatprep.subr.mxu0 0.0
        %4081 = vmatpush1.msra.mxu0 %v4053
        %4082 = vmatprep.subr.mxu0 0.0
        %4083 = vmatpush1.msra.mxu0 %v4052
        %4084 = vmatprep.subr.mxu0 0.0
        %4085 = vmatpush1.msra.mxu0 %v4051
        %4086 = vmatprep.subr.mxu0 0.0
        %4087 = vmatpush1.msra.mxu0 %v4050
        %4088 = vmatprep.subr.mxu0 0.0
        %4089 = vmatpush1.msra.mxu0 %v4049
        %4090 = vmatprep.subr.mxu0 0.0
        %4091 = vmatpush1.msra.mxu0 %v4048
        %4092 = vmatprep.subr.mxu0 0.0
        %4093 = vmatpush2.msra.mxu0 0.0
        %4094 = vmatprep.subr.mxu0 0.0
        %4095 = vmatpush2.msra.mxu0 0.0
        %4096 = vmatprep.subr.mxu0 0.0
        %4097 = vmatpush2.msra.mxu0 0.0
        %4098 = vmatprep.subr.mxu0 0.0
        %4099 = vmatpush2.msra.mxu0 0.0
        %4100 = vmatprep.subr.mxu0 0.0
        %4101 = vmatpush2.msra.mxu0 0.0
        %4102 = vmatprep.subr.mxu0 0.0
        %4103 = vmatpush2.msra.mxu0 0.0
        %4104 = vmatprep.subr.mxu0 0.0
        %4105 = vmatpush2.msra.mxu0 0.0
        %4106 = vmatprep.subr.mxu0 0.0
        %4107 = vmatpush2.msra.mxu0 0.0
        %4108 = vmatprep.subr.mxu0 0.0
        %4109 = vmatpush2.msra.mxu0 0.0
        %4110 = vmatprep.subr.mxu0 0.0
        %4111 = vmatpush2.msra.mxu0 0.0
        %4112 = vmatprep.subr.mxu0 0.0
        %4113 = vmatpush2.msra.mxu0 0.0
        %4114 = vmatprep.subr.mxu0 0.0
        %4115 = vmatpush2.msra.mxu0 0.0
        %4116 = vmatprep.subr.mxu0 0.0
        %4117 = vmatpush2.msra.mxu0 0.0
        %4118 = vmatprep.subr.mxu0 0.0
        %4119 = vmatpush2.msra.mxu0 0.0
        %4120 = vmatprep.subr.mxu0 0.0
        %4121 = vmatpush2.msra.mxu0 0.0
        %4122 = vmatprep.subr.mxu0 0.0
        %4123 = vmatpush2.msra.mxu0 0.0
        %4124 = vmatprep.mubr.f32.mxu0 0.0
        %4125 = vmatmul.mubr.f32.gmra.mxu0 %v4058
        %v4126 = vpop.f32.mrf.mxu0
        %v4127 = vadd.f32 0.0, %v4126
        %v4128 = vpop.f32.mrf.mxu0
        %4129 = vdwg.mxu0
        %v4130 = vadd.f32 %v3933, %v4127
        %v4131 = vld [vmem:[%s18] sm:$0x1]
        %v4133 = vlaneseq
        %v4134 = vshrl.u32 %v4133, 7
        %v4135 = vsub.s32 0, %v4134
        %v4136 = vrot.slane %v4131, %v4135
        %v4138 = vadd.f32 %v4130, %v4136
        %4139 = vst.msk [vmem:[%s768] sm:$0xff] %vm773, %v4138
        %s4140 = sand.u32 %s470, 1
        %s4141 = scalar_lea.sflag [#allocation4], %s4140
        %s4142 = sand.u32 %s470, 1
        %s4143 = smul.addr %s4142, 8
        %s4144 = scalar_lea.vmem [#allocation14], %s4143
        // Predicated region
        $region125: #{tpu_custom_call.1} parent=95 // pred_check
          %p4145 = pneg %p480
        $region126: #{tpu_custom_call.1} parent=95 // pred_check_branch
          %4147 = sbr.rel (%p4145) target = $region128
        $region127: #{tpu_custom_call.1} parent=95 // pred_region
          %s4149 = ssub.s32 128, 128
          %4150 = vsyncadd %s4141, %s4149
          %s4151 = smul.addr %s43, 128
          %s4152 = scalar_lea.hbm %s19, %s4151
          %s4154 = sshll.u32 %s4144, 4
          %s4155 = int_to_ptr.vmem [resolvable:$true] %s4154
          %4157 = dma.vmem_to_hbm [thread:$0]  %s4155, 128, %s4152, %s4141
        $region128: #{tpu_custom_call.1} parent=95 // pred_fallthru
          _
      $region96: #{tpu_custom_call.1} parent=5 // pred_fallthru
        _
      %p4158 = scmp.le.s32.totalorder 2, %s38
      // Predicated region
      $region129: #{tpu_custom_call.1} parent=5 // pred_check
        %p4159 = pneg %p4158
      $region130: #{tpu_custom_call.1} parent=5 // pred_check_branch
        %4161 = sbr.rel (%p4159) target = $region132
      $region131: #{tpu_custom_call.1} parent=5 // pred_region
        %s4162 = ssub.s32 %s38, 2
        // Predicated region
        $region133: #{tpu_custom_call.1} parent=131 // pred_check
          %p4163 = pneg %p486
        $region134: #{tpu_custom_call.1} parent=131 // pred_check_branch
          %4165 = sbr.rel (%p4163) target = $region136
        $region135: #{tpu_custom_call.1} parent=131 // pred_region
          %s4166 = sand.u32 %s471, 1
          %s4167 = scalar_lea.sflag [#allocation4], %s4166
          %s4168 = sand.u32 %s471, 1
          %s4169 = smul.addr %s4168, 8
          %s4170 = scalar_lea.vmem [#allocation14], %s4169
          %4171 = dma.done %s4167, 128
        $region136: #{tpu_custom_call.1} parent=131 // pred_fallthru
          _
      $region132: #{tpu_custom_call.1} parent=5 // pred_fallthru
        _
    $region6: #{tpu_custom_call.1} parent=1 // loop_footer
      %s42 = sadd.s32 1, %s38
    $region7: #{tpu_custom_call.1} parent=1 // loop_footer_branch
      %37 = sbr.rel target = $region3
    $region8: #{tpu_custom_call.1} parent=1 // loop_exit
      _
    %4172 = vsyncpa [#allocation3], 1
    %s4173 = scalar_lea.sflag [#allocation3], 1
    %4174 = vsyncpa %s4173, 1
    %4175 = vsyncpa [#allocation6], 1
    %s4176 = scalar_lea.sflag [#allocation6], 1
    %4177 = vsyncpa %s4176, 1
    %4178 = vsyncpa [#allocation9], 1
    %s4179 = scalar_lea.sflag [#allocation9], 1
    %4180 = vsyncpa %s4179, 1
    %4181 = vsyncpa [#allocation12], 1
    %4182 = vsyncpa [#allocation4], 1
    %s4183 = scalar_lea.sflag [#allocation4], 1
    %4184 = vsyncpa %s4183, 1

</llo_original>
